<compile_context>
chip_gen: v7x
topology: tpu7x:2x2x1
jax: 0.10.0
libtpu: 0.0.40
codegen_flags: <defaults>
</compile_context>

<pallas_src>
import jax
import jax.numpy as jnp
from jax import lax
from jax.experimental import pallas as pl
from jax.experimental.pallas import tpu as pltpu


# ----------------------------- small helpers --------------------------------

def _round_up(x, m):
    return (x + m - 1) // m * m


def _fold_bn(mean, var, gamma, beta, eps=1e-5):
    scale = gamma / jnp.sqrt(var + eps)
    shift = beta - mean * scale
    return scale, shift


def _pick_vmem_limit():
    # Use most of VMEM on 128-MiB parts (v5e/v6e), stay conservative on the
    # 64-MiB-per-TC v7x.  Falls back safely if the query is unavailable.
    try:
        cap = pltpu.get_tpu_info().vmem_capacity_bytes
    except Exception:
        cap = 64 * 1024 * 1024
    return int(min(96 * 1024 * 1024, cap * 3 // 4))


_VMEM_LIMIT = _pick_vmem_limit()


# ----------------------------- Pallas kernels -------------------------------

def _stats_kernel(x_ref, sum_ref, ssq_ref):
    # per-channel partial sum and sum-of-squares (f32) of a bf16 row tile
    xv = x_ref[...].astype(jnp.float32)
    sum_ref[0] = jnp.sum(xv, axis=0, keepdims=True)
    ssq_ref[0] = jnp.sum(xv * xv, axis=0, keepdims=True)


def _bn_relu_kernel(x_ref, scale_ref, shift_ref, o_ref):
    # y = relu(x * scale + shift); f32 math, bf16 in/out
    y = jnp.maximum(x_ref[...].astype(jnp.float32) * scale_ref[...]
                    + shift_ref[...], 0.0)
    o_ref[...] = y.astype(o_ref.dtype)


def _mm_kernel(a_ref, w_ref, o_ref, acc_ref):
    # tiled GEMM: bf16 MXU inputs, f32 VMEM accumulator, write at last K step
    k = pl.program_id(2)

    @pl.when(k == 0)
    def _init():
        acc_ref[...] = jnp.zeros_like(acc_ref)

    acc_ref[...] += jnp.dot(a_ref[...], w_ref[...],
                            preferred_element_type=jnp.float32)

    @pl.when(k == pl.num_programs(2) - 1)
    def _fin():
        o_ref[...] = acc_ref[...].astype(o_ref.dtype)


def _mm_stats_kernel(a_ref, w_ref, o_ref, sum_ref, ssq_ref, acc_ref):
    # same as _mm_kernel, plus per-(M-tile) partial column sums / sums-of-
    # squares of the f32 result (fused batch statistics for the next BN).
    k = pl.program_id(2)

    @pl.when(k == 0)
    def _init():
        acc_ref[...] = jnp.zeros_like(acc_ref)

    acc_ref[...] += jnp.dot(a_ref[...], w_ref[...],
                            preferred_element_type=jnp.float32)

    @pl.when(k == pl.num_programs(2) - 1)
    def _fin():
        acc = acc_ref[...]
        o_ref[...] = acc.astype(o_ref.dtype)
        tn = acc.shape[1]
        sum_ref[...] = jnp.sum(acc, axis=0, keepdims=True).reshape(1, 1, tn)
        ssq_ref[...] = jnp.sum(acc * acc, axis=0, keepdims=True).reshape(1, 1, tn)


def _make_fused_conv_kernel(H, W, Wa, Cin, Cout, has_residual, want_stats,
                            shortcut_mode, sc_cout):
    """3x3 stride-1 implicit-GEMM conv of relu(x*scale+shift), zero padding.

    Fuses: BN+ReLU (f32), a single bf16 cast, in-VMEM halo padding, 9 tap
    matmuls into an f32 accumulator, residual add, 1x1 shortcut branch, and
    the next BatchNorm's partial batch statistics.
    """
    Hp = H + 2

    def kernel(*args):
        args = list(args)
        qpad_ref = args.pop()                 # scratch (Hp, Wa, Cin) bf16
        x_ref = args.pop(0)                   # (1, H, W, Cin) bf16 (unpadded)
        scale_ref = args.pop(0)                # (1, Cin) f32
        shift_ref = args.pop(0)                # (1, Cin) f32
        w_ref = args.pop(0)                    # (9, Cin, Cout) bf16
        wsc_ref = args.pop(0) if shortcut_mode == "project" else None
        r_ref = args.pop(0) if has_residual else None
        o_ref = args.pop(0)                    # (1, H, W, Cout)
        sc_ref = args.pop(0) if shortcut_mode is not None else None
        sum_ref = args.pop(0) if want_stats else None
        ssq_ref = args.pop(0) if want_stats else None

        # fused BN+ReLU in f32; single bf16 cast hoisted out of the tap loop.
        xv = x_ref[0].astype(jnp.float32)                      # (H, W, Cin)
        scale = scale_ref[...].reshape(1, 1, Cin)
        shift = shift_ref[...].reshape(1, 1, Cin)
        q = jnp.maximum(xv * scale + shift, 0.0).astype(jnp.bfloat16)

        # Zero-padded halo assembled entirely in VMEM (no XLA pad / no mask /
        # no HBM round-trip).  Zeroed every grid step so the batch axis can
        # be safely core-sharded ("parallel") -- scratch is per-core.
        qpad_ref[...] = jnp.zeros((Hp, Wa, Cin), jnp.bfloat16)
        qpad_ref[1:H + 1, 1:W + 1, :] = q

        acc = jnp.zeros((H * W, Cout), jnp.float32)
        a_center = None
        for t in range(9):                     # implicit GEMM: 9 bf16 taps
            ky, kx = divmod(t, 3)
            a = qpad_ref[ky:ky + H, kx:kx + W, :].reshape(H * W, Cin)
            if t == 4:
                a_center = a                   # reused by the 1x1 shortcut
            acc = acc + jnp.dot(a, w_ref[t],
                                preferred_element_type=jnp.float32)
        # TODO(synk): merge kx taps into one K=3*Cin contraction per ky (or
        # pltpu.roll-based shifts) to fill the MXU K depth on v6e/v7x.

        if want_stats:
            # partial batch statistics of the conv output (for the next BN)
            sum_ref[0] = jnp.sum(acc, axis=0, keepdims=True)
            ssq_ref[0] = jnp.sum(acc * acc, axis=0, keepdims=True)

        out = acc.reshape(H, W, Cout)
        if has_residual:
            out = out + r_ref[0].astype(jnp.float32)           # fused add
        o_ref[0] = out.astype(o_ref.dtype)

        if shortcut_mode == "identity":
            sc_ref[0] = q                                       # already bf16
        elif shortcut_mode == "project":
            sc = jnp.dot(a_center, wsc_ref[...],
                         preferred_element_type=jnp.float32)
            sc_ref[0] = sc.reshape(H, W, sc_cout).astype(sc_ref.dtype)

    return kernel


# ------------------------------ wrappers -------------------------------------

def channel_stats(x2d, row_tile=1024):
    """Single-pass per-channel mean / biased variance of a (M, C) bf16 slab."""
    M, C = x2d.shape
    tm = min(row_tile, _round_up(M, 8))
    Mp = _round_up(M, tm)
    xp = x2d if Mp == M else jnp.pad(x2d, ((0, Mp - M), (0, 0)))
    gm = Mp // tm
    s, ss = pl.pallas_call(
        _stats_kernel,
        out_shape=(jax.ShapeDtypeStruct((gm, 1, C), jnp.float32),
                   jax.ShapeDtypeStruct((gm, 1, C), jnp.float32)),
        grid_spec=pltpu.PrefetchScalarGridSpec(
            num_scalar_prefetch=0,
            grid=(gm,),
            in_specs=[pl.BlockSpec((tm, C), lambda i: (i, 0))],
            out_specs=[pl.BlockSpec((1, 1, C), lambda i: (i, 0, 0))] * 2),
        compiler_params=pltpu.CompilerParams(
            dimension_semantics=("parallel",),
            vmem_limit_bytes=_VMEM_LIMIT),
    )(xp)
    n = jnp.float32(M)
    mean = jnp.sum(s, axis=(0, 1)) / n
    # TODO(synk): mean-shifted / Welford combine for very large M (E[x^2] -
    # E[x]^2 cancels catastrophically at scale); clamped at 0 for safety.
    var = jnp.maximum(jnp.sum(ss, axis=(0, 1)) / n - mean * mean, 0.0)
    return mean, var


def bn_relu(x2d, scale, shift, out_dtype=jnp.bfloat16, row_tile=512):
    """Row-tiled fused BatchNorm(affine-folded)+ReLU over a (M, C) slab."""
    M, C = x2d.shape
    tm = min(row_tile, _round_up(M, 8))
    Mp = _round_up(M, tm)
    xp = x2d if Mp == M else jnp.pad(x2d, ((0, Mp - M), (0, 0)))
    out = pl.pallas_call(
        _bn_relu_kernel,
        out_shape=jax.ShapeDtypeStruct((Mp, C), out_dtype),
        grid_spec=pltpu.PrefetchScalarGridSpec(
            num_scalar_prefetch=0,
            grid=(Mp // tm,),
            in_specs=[pl.BlockSpec((tm, C), lambda i: (i, 0)),
                      pl.BlockSpec((1, C), lambda i: (0, 0)),
                      pl.BlockSpec((1, C), lambda i: (0, 0))],
            out_specs=pl.BlockSpec((tm, C), lambda i: (i, 0))),
        compiler_params=pltpu.CompilerParams(
            dimension_semantics=("parallel",),
            vmem_limit_bytes=_VMEM_LIMIT),
    )(xp, scale.reshape(1, C).astype(jnp.float32),
      shift.reshape(1, C).astype(jnp.float32))
    return out[:M]


def tiled_matmul(a, w, want_stats=False, out_dtype=jnp.float32):
    """C = A @ W on a (M//tm, N//tn, K//tk) grid, bf16 MXU inputs, f32 VMEM
    accumulator.  Output lanes are always padded to a multiple of 128 (no
    masked stores).  Optionally also returns per-M-tile partial column sums /
    sums-of-squares of C (fused batch statistics for a following BatchNorm)."""
    M, K = a.shape
    Kw, Nc = w.shape
    assert K == Kw

    # bigger tiles + lane-dense output (review): tm<=512, tn in {128,256},
    # tk up to 1024 (full K below that).
    tm = 512 if M >= 512 else _round_up(M, 8)
    Mp = _round_up(M, tm)
    tn = 256 if Nc >= 256 else 128
    Np = _round_up(Nc, tn)
    if K > 1024:
        tk = 1024
        Kp = _round_up(K, tk)
    else:
        tk, Kp = K, K
    gm, gn, gk = Mp // tm, Np // tn, Kp // tk

    a_p = a if (Mp == M and Kp == K) else jnp.pad(a, ((0, Mp - M), (0, Kp - K)))
    w_p = w if (Kp == K and Np == Nc) else jnp.pad(w, ((0, Kp - K), (0, Np - Nc)))
    a_p = a_p.astype(jnp.bfloat16)     # MXU-native dtype, halves HBM traffic
    w_p = w_p.astype(jnp.bfloat16)

    out_shape = [jax.ShapeDtypeStruct((Mp, Np), out_dtype)]
    out_specs = [pl.BlockSpec((tm, tn), lambda i, j, k: (i, j))]
    if want_stats:
        out_shape += [jax.ShapeDtypeStruct((gm, 1, Np), jnp.float32)] * 2
        out_specs += [pl.BlockSpec((1, 1, tn), lambda i, j, k: (i, 0, j))] * 2

    res = pl.pallas_call(
        _mm_stats_kernel if want_stats else _mm_kernel,
        out_shape=tuple(out_shape),
        grid_spec=pltpu.PrefetchScalarGridSpec(
            num_scalar_prefetch=0,
            grid=(gm, gn, gk),
            in_specs=[pl.BlockSpec((tm, tk), lambda i, j, k: (i, k)),
                      pl.BlockSpec((tk, tn), lambda i, j, k: (k, j))],
            out_specs=out_specs,
            scratch_shapes=[pltpu.VMEM((tm, tn), jnp.float32)]),
        compiler_params=pltpu.CompilerParams(
            dimension_semantics=("parallel", "parallel", "arbitrary"),
            vmem_limit_bytes=_VMEM_LIMIT),
    )(a_p, w_p)

    out = res[0][:M, :Nc]
    if want_stats:
        return out, res[1][..., :Nc], res[2][..., :Nc]
    return out


def fused_conv3x3_s1(x, scale, shift, w_hwio, *, residual=None,
                     shortcut_mode=None, shortcut_w=None, want_stats=False,
                     out_dtype=jnp.bfloat16):
    """Implicit-GEMM 3x3 stride-1 conv of relu(x*scale+shift) with zero
    padding done in VMEM; optionally fuses the residual add, the shortcut
    branch, and the next BatchNorm's partial batch statistics.

    Grid over batch images.
    TODO(synk): row-band spatial tiling for large feature maps (v7x VMEM)."""
    N, H, W, Cin = x.shape
    Cout = w_hwio.shape[-1]
    Wa = _round_up(W + 2, 8)           # scratch width, 8-sublane aligned
    w9 = w_hwio.reshape(9, Cin, Cout).astype(jnp.bfloat16)

    inputs = [x.astype(jnp.bfloat16),
              scale.reshape(1, Cin).astype(jnp.float32),
              shift.reshape(1, Cin).astype(jnp.float32),
              w9]
    in_specs = [
        pl.BlockSpec((1, H, W, Cin), lambda n: (n, 0, 0, 0)),
        pl.BlockSpec((1, Cin), lambda n: (0, 0)),
        pl.BlockSpec((1, Cin), lambda n: (0, 0)),
        pl.BlockSpec((9, Cin, Cout), lambda n: (0, 0, 0)),
    ]
    sc_cout = None
    if shortcut_mode == "project":
        sc_cout = shortcut_w.shape[-1]
        inputs.append(shortcut_w.astype(jnp.bfloat16))
        in_specs.append(pl.BlockSpec((Cin, sc_cout), lambda n: (0, 0)))
    elif shortcut_mode == "identity":
        sc_cout = Cin
    if residual is not None:
        inputs.append(residual.astype(jnp.bfloat16))
        in_specs.append(pl.BlockSpec((1, H, W, Cout), lambda n: (n, 0, 0, 0)))

    out_shape = [jax.ShapeDtypeStruct((N, H, W, Cout), out_dtype)]
    out_specs = [pl.BlockSpec((1, H, W, Cout), lambda n: (n, 0, 0, 0))]
    if shortcut_mode is not None:
        out_shape.append(jax.ShapeDtypeStruct((N, H, W, sc_cout), jnp.bfloat16))
        out_specs.append(pl.BlockSpec((1, H, W, sc_cout), lambda n: (n, 0, 0, 0)))
    if want_stats:
        out_shape += [jax.ShapeDtypeStruct((N, 1, Cout), jnp.float32)] * 2
        out_specs += [pl.BlockSpec((1, 1, Cout), lambda n: (n, 0, 0))] * 2

    kernel = _make_fused_conv_kernel(H, W, Wa, Cin, Cout,
                                     has_residual=residual is not None,
                                     want_stats=want_stats,
                                     shortcut_mode=shortcut_mode,
                                     sc_cout=sc_cout)
    return pl.pallas_call(
        kernel,
        out_shape=tuple(out_shape),
        grid_spec=pltpu.PrefetchScalarGridSpec(
            num_scalar_prefetch=0,
            grid=(N,),
            in_specs=in_specs,
            out_specs=out_specs,
            scratch_shapes=[pltpu.VMEM((H + 2, Wa, Cin), jnp.bfloat16)]),
        compiler_params=pltpu.CompilerParams(
            dimension_semantics=("parallel",),
            vmem_limit_bytes=_VMEM_LIMIT),
    )(*inputs)


# ------------------------------ JAX glue -------------------------------------

def _im2col3x3(x_nhwc, stride):
    # pad=1, k=3 patches -> (N*Ho*Wo, 9*C), column order (ky, kx, cin)
    N, H, W, C = x_nhwc.shape
    xp = jnp.pad(x_nhwc, ((0, 0), (1, 1), (1, 1), (0, 0)))
    Ho = (H + 2 - 3) // stride + 1
    Wo = (W + 2 - 3) // stride + 1
    cols = []
    for ky in range(3):
        for kx in range(3):
            cols.append(xp[:, ky:ky + stride * (Ho - 1) + 1:stride,
                           kx:kx + stride * (Wo - 1) + 1:stride, :])
    cols = jnp.concatenate(cols, axis=-1)
    return cols.reshape(N * Ho * Wo, 9 * C), Ho, Wo


def preact_block_forward(x_nchw, params, stride):
    # NCHW -> NHWC and a single bf16 cast in one fused XLA pass; all
    # downstream activation traffic is bf16 (f32 math stays in-kernel).
    x = jnp.transpose(x_nchw, (0, 2, 3, 1)).astype(jnp.bfloat16)
    N, H, W, Cin = x.shape
    planes = params["conv1_w"].shape[-1]
    has_proj = (stride != 1) or (Cin != planes)

    # bn1 batch statistics (training mode, biased variance): ONE fused Pallas
    # sum/sum-of-squares pass, folded to per-channel scale/shift.
    mean1, var1 = channel_stats(x.reshape(-1, Cin))
    s1, b1 = _fold_bn(mean1, var1, params["bn1_gamma"], params["bn1_beta"])

    if stride == 1:
        # fully fused implicit-GEMM path: bn1+relu, conv1, the shortcut branch
        # and bn2 partial statistics in a single Pallas kernel per image.
        sc_mode = "project" if has_proj else "identity"
        out1, shortcut, ssum, ssq = fused_conv3x3_s1(
            x, s1, b1, params["conv1_w"],
            shortcut_mode=sc_mode, shortcut_w=params.get("shortcut_w"),
            want_stats=True, out_dtype=jnp.bfloat16)
        Ho, Wo = H, W
    else:
        # strided conv1: row-tiled bn+relu kernel, XLA im2col, one tiled
        # Pallas GEMM that produces conv1 AND the strided 1x1 projection
        # shortcut (the shortcut input is exactly the centre-tap column block
        # of the im2col matrix, so the weight matrix is augmented instead of
        # materializing pre1[:, ::s, ::s, :] and running a second GEMM).
        pre1 = bn_relu(x.reshape(-1, Cin), s1, b1,
                       out_dtype=jnp.bfloat16).reshape(N, H, W, Cin)
        cols1, Ho, Wo = _im2col3x3(pre1, stride)
        w1 = params["conv1_w"].reshape(9 * Cin, planes)
        w_aug = jnp.zeros((9 * Cin, 2 * planes), jnp.float32)
        w_aug = w_aug.at[:, :planes].set(w1)
        w_aug = w_aug.at[4 * Cin:5 * Cin, planes:].set(params["shortcut_w"])
        out_aug, ssum, ssq = tiled_matmul(cols1, w_aug, want_stats=True,
                                          out_dtype=jnp.bfloat16)
        out1 = out_aug[:, :planes].reshape(N, Ho, Wo, planes)
        shortcut = out_aug[:, planes:].reshape(N, Ho, Wo, planes)
        ssum, ssq = ssum[..., :planes], ssq[..., :planes]

    # bn2 statistics from the fused partial sums (single pass over conv1 out)
    m1 = N * Ho * Wo
    mean2 = jnp.sum(ssum, axis=(0, 1)) / m1
    # TODO(synk): mean-shifted / Welford combine at scale (E[x^2]-E[x]^2
    # cancellation); clamped at 0 for safety.
    var2 = jnp.maximum(jnp.sum(ssq, axis=(0, 1)) / m1 - mean2 * mean2, 0.0)
    s2, b2 = _fold_bn(mean2, var2, params["bn2_gamma"], params["bn2_beta"])

    # conv2 (3x3, stride 1): bn2+relu and the residual add fused in-kernel
    (out,) = fused_conv3x3_s1(out1, s2, b2, params["conv2_w"],
                              residual=shortcut, out_dtype=jnp.float32)
    return jnp.transpose(out, (0, 3, 1, 2))                           # NCHW


# --------------------------- pure-JAX reference ------------------------------

def reference_forward(x_nchw, params, stride):
    x = x_nchw.astype(jnp.float32)

    def bn(t, gamma, beta, eps=1e-5):
        mean = jnp.mean(t, axis=(0, 2, 3), keepdims=True)
        var = jnp.mean((t - mean) ** 2, axis=(0, 2, 3), keepdims=True)
        return ((t - mean) / jnp.sqrt(var + eps)) * gamma.reshape(1, -1, 1, 1) \
            + beta.reshape(1, -1, 1, 1)

    def conv(t, w_hwio, s, pad):
        return lax.conv_general_dilated(
            t, w_hwio, window_strides=(s, s), padding=pad,
            dimension_numbers=("NCHW", "HWIO", "NCHW"))

    planes = params["conv1_w"].shape[-1]
    pre1 = jax.nn.relu(bn(x, params["bn1_gamma"], params["bn1_beta"]))
    if stride != 1 or x.shape[1] != planes:
        w1x1 = params["shortcut_w"].reshape(1, 1, *params["shortcut_w"].shape)
        shortcut = conv(pre1, w1x1, stride, "VALID")
    else:
        shortcut = pre1
    out = conv(pre1, params["conv1_w"], stride, [(1, 1), (1, 1)])
    out = conv(jax.nn.relu(bn(out, params["bn2_gamma"], params["bn2_beta"])),
               params["conv2_w"], 1, [(1, 1), (1, 1)])
    return out + shortcut


# --------------------------------- main ---------------------------------------

if __name__ == "__main__":
    key = jax.random.PRNGKey(0)

    def make_params(k, in_planes, planes, need_proj):
        ks = jax.random.split(k, 7)
        p = {
            "bn1_gamma": jax.random.normal(ks[0], (in_planes,), jnp.float32) * 0.1 + 1.0,
            "bn1_beta": jax.random.normal(ks[1], (in_planes,), jnp.float32) * 0.1,
            "conv1_w": jax.random.normal(ks[2], (3, 3, in_planes, planes), jnp.float32) * 0.1,
            "bn2_gamma": jax.random.normal(ks[3], (planes,), jnp.float32) * 0.1 + 1.0,
            "bn2_beta": jax.random.normal(ks[4], (planes,), jnp.float32) * 0.1,
            "conv2_w": jax.random.normal(ks[5], (3, 3, planes, planes), jnp.float32) * 0.1,
        }
        if need_proj:
            p["shortcut_w"] = jax.random.normal(ks[6], (in_planes, planes),
                                                jnp.float32) * 0.1
        return p

    fwd = jax.jit(preact_block_forward, static_argnums=(2,))

    configs = [
        (4, 8, 2),   # downsampling block: projection shortcut, strided conv1
        (8, 8, 1),   # identity block: fully fused stride-1 path
        (4, 8, 1),   # stride-1 block with a channel-projection shortcut
    ]
    N, H, W = 2, 16, 16
    for idx, (cin, planes, stride) in enumerate(configs):
        kp, kx, key = jax.random.split(key, 3)
        need_proj = (stride != 1) or (cin != planes)
        params = make_params(kp, cin, planes, need_proj)
        x = jax.random.normal(kx, (N, cin, H, W), jnp.float32)

        out = jax.block_until_ready(fwd(x, params, stride))
        ref = jax.block_until_ready(reference_forward(x, params, stride))
        assert out.shape == ref.shape, (out.shape, ref.shape)
        # bf16 activations end-to-end (MXU inputs, intermediates, shortcut)
        # with f32 accumulation / f32 BN statistics: compare against the
        # pure-f32 reference at bf16-level tolerance.
        assert jnp.allclose(out, ref, atol=4e-2, rtol=4e-2), (
            idx, float(jnp.max(jnp.abs(out - ref))))

    print("KERNEL_OK")
</pallas_src>

<mosaic_0001>
module attributes {stable_mosaic.version = 11 : i64} {
  func.func @_stats_kernel(%arg0: i32, %arg1: memref<512x4xbf16, #tpu.memory_space<vmem>>, %arg2: memref<1x1x4xf32, #tpu.memory_space<vmem>>, %arg3: memref<1x1x4xf32, #tpu.memory_space<vmem>>) attributes {dimension_semantics = [#tpu.dimension_semantics<parallel>], iteration_bounds = array<i64: 1>, scalar_prefetch = 0 : i64, scratch_operands = 0 : i64, tpu.core_type = #tpu.core_type<tc>, window_params = [{transform_indices = @transform_0, window_bounds = array<i64: 512, 4>}, {transform_indices = @transform_1, window_bounds = array<i64: 1, 1, 4>}, {transform_indices = @transform_2, window_bounds = array<i64: 1, 1, 4>}]} {
    %c0 = arith.constant 0 : index
    %c0_0 = arith.constant 0 : index
    %0 = vector.load %arg1[%c0, %c0_0] : memref<512x4xbf16, #tpu.memory_space<vmem>>, vector<512x4xbf16>
    %1 = arith.extf %0 : vector<512x4xbf16> to vector<512x4xf32>
    %cst = arith.constant dense<0.000000e+00> : vector<4xf32>
    %2 = vector.multi_reduction <add>, %1, %cst [0] : vector<512x4xf32> to vector<4xf32>
    %3 = vector.shape_cast %2 : vector<4xf32> to vector<1x4xf32>
    %c0_1 = arith.constant 0 : index
    %c0_2 = arith.constant 0 : index
    %c0_3 = arith.constant 0 : index
    %4 = vector.load %arg2[%c0_1, %c0_2, %c0_3] : memref<1x1x4xf32, #tpu.memory_space<vmem>>, vector<1x1x4xf32>
    %5 = vector.shape_cast %4 : vector<1x1x4xf32> to vector<1x4xf32>
    %6 = vector.shape_cast %3 : vector<1x4xf32> to vector<1x1x4xf32>
    tpu.vector_store %arg2[%c0_1, %c0_2, %c0_3], %6 {strides = array<i32>} : memref<1x1x4xf32, #tpu.memory_space<vmem>>, vector<1x1x4xf32>,
    %7 = arith.mulf %1, %1 : vector<512x4xf32>
    %cst_4 = arith.constant dense<0.000000e+00> : vector<4xf32>
    %8 = vector.multi_reduction <add>, %7, %cst_4 [0] : vector<512x4xf32> to vector<4xf32>
    %9 = vector.shape_cast %8 : vector<4xf32> to vector<1x4xf32>
    %c0_5 = arith.constant 0 : index
    %c0_6 = arith.constant 0 : index
    %c0_7 = arith.constant 0 : index
    %10 = vector.load %arg3[%c0_5, %c0_6, %c0_7] : memref<1x1x4xf32, #tpu.memory_space<vmem>>, vector<1x1x4xf32>
    %11 = vector.shape_cast %10 : vector<1x1x4xf32> to vector<1x4xf32>
    %12 = vector.shape_cast %9 : vector<1x4xf32> to vector<1x1x4xf32>
    tpu.vector_store %arg3[%c0_5, %c0_6, %c0_7], %12 {strides = array<i32>} : memref<1x1x4xf32, #tpu.memory_space<vmem>>, vector<1x1x4xf32>,
    return
  }
  func.func @transform_0(%arg0: i32) -> (i32, i32) {
    %c0_i32 = arith.constant 0 : i32
    %c0_i32_0 = arith.constant 0 : i32
    return %arg0, %c0_i32 : i32, i32
  }
  func.func @transform_1(%arg0: i32) -> (i32, i32, i32) {
    %c0_i32 = arith.constant 0 : i32
    %c0_i32_0 = arith.constant 0 : i32
    %c0_i32_1 = arith.constant 0 : i32
    return %arg0, %c0_i32, %c0_i32_0 : i32, i32, i32
  }
  func.func @transform_2(%arg0: i32) -> (i32, i32, i32) {
    %c0_i32 = arith.constant 0 : i32
    %c0_i32_0 = arith.constant 0 : i32
    %c0_i32_1 = arith.constant 0 : i32
    return %arg0, %c0_i32, %c0_i32_0 : i32, i32, i32
  }
}

module attributes {stable_mosaic.version = 11 : i64} {
  func.func @_bn_relu_kernel(%arg0: i32, %arg1: memref<512x4xbf16, #tpu.memory_space<vmem>>, %arg2: memref<1x4xf32, #tpu.memory_space<vmem>>, %arg3: memref<1x4xf32, #tpu.memory_space<vmem>>, %arg4: memref<512x4xbf16, #tpu.memory_space<vmem>>) attributes {dimension_semantics = [#tpu.dimension_semantics<parallel>], iteration_bounds = array<i64: 1>, scalar_prefetch = 0 : i64, scratch_operands = 0 : i64, tpu.core_type = #tpu.core_type<tc>, window_params = [{transform_indices = @transform_0, window_bounds = array<i64: 512, 4>}, {pipeline_mode = #tpu.pipeline_mode<synchronous>, transform_indices = @transform_1, window_bounds = array<i64: 1, 4>}, {pipeline_mode = #tpu.pipeline_mode<synchronous>, transform_indices = @transform_2, window_bounds = array<i64: 1, 4>}, {transform_indices = @transform_3, window_bounds = array<i64: 512, 4>}]} {
    %c0 = arith.constant 0 : index
    %c0_0 = arith.constant 0 : index
    %0 = vector.load %arg1[%c0, %c0_0] : memref<512x4xbf16, #tpu.memory_space<vmem>>, vector<512x4xbf16>
    %1 = arith.extf %0 : vector<512x4xbf16> to vector<512x4xf32>
    %c0_1 = arith.constant 0 : index
    %c0_2 = arith.constant 0 : index
    %2 = vector.load %arg2[%c0_1, %c0_2] : memref<1x4xf32, #tpu.memory_space<vmem>>, vector<1x4xf32>
    %3 = vector.broadcast %2 : vector<1x4xf32> to vector<512x4xf32>
    %4 = arith.mulf %1, %3 : vector<512x4xf32>
    %c0_3 = arith.constant 0 : index
    %c0_4 = arith.constant 0 : index
    %5 = vector.load %arg3[%c0_3, %c0_4] : memref<1x4xf32, #tpu.memory_space<vmem>>, vector<1x4xf32>
    %6 = vector.broadcast %5 : vector<1x4xf32> to vector<512x4xf32>
    %7 = arith.addf %4, %6 : vector<512x4xf32>
    %cst = arith.constant 0.000000e+00 : f32
    %8 = vector.broadcast %cst : f32 to vector<512x4xf32>
    %9 = arith.maximumf %7, %8 : vector<512x4xf32>
    %10 = arith.truncf %9 : vector<512x4xf32> to vector<512x4xbf16>
    %c0_5 = arith.constant 0 : index
    %c0_6 = arith.constant 0 : index
    %11 = vector.load %arg4[%c0_5, %c0_6] : memref<512x4xbf16, #tpu.memory_space<vmem>>, vector<512x4xbf16>
    tpu.vector_store %arg4[%c0_5, %c0_6], %10 {strides = array<i32>} : memref<512x4xbf16, #tpu.memory_space<vmem>>, vector<512x4xbf16>,
    return
  }
  func.func @transform_0(%arg0: i32) -> (i32, i32) {
    %c0_i32 = arith.constant 0 : i32
    %c0_i32_0 = arith.constant 0 : i32
    return %arg0, %c0_i32 : i32, i32
  }
  func.func @transform_1(%arg0: i32) -> (i32, i32) {
    %c0_i32 = arith.constant 0 : i32
    %c0_i32_0 = arith.constant 0 : i32
    %c0_i32_1 = arith.constant 0 : i32
    return %c0_i32, %c0_i32_0 : i32, i32
  }
  func.func @transform_2(%arg0: i32) -> (i32, i32) {
    %c0_i32 = arith.constant 0 : i32
    %c0_i32_0 = arith.constant 0 : i32
    %c0_i32_1 = arith.constant 0 : i32
    return %c0_i32, %c0_i32_0 : i32, i32
  }
  func.func @transform_3(%arg0: i32) -> (i32, i32) {
    %c0_i32 = arith.constant 0 : i32
    %c0_i32_0 = arith.constant 0 : i32
    return %arg0, %c0_i32 : i32, i32
  }
}

module attributes {stable_mosaic.version = 11 : i64} {
  func.func @kernel(%arg0: i32, %arg1: memref<1x8x8x8xbf16, #tpu.memory_space<vmem>>, %arg2: memref<1x8xf32, #tpu.memory_space<vmem>>, %arg3: memref<1x8xf32, #tpu.memory_space<vmem>>, %arg4: memref<9x8x8xbf16, #tpu.memory_space<vmem>>, %arg5: memref<1x8x8x8xbf16, #tpu.memory_space<vmem>>, %arg6: memref<1x8x8x8xf32, #tpu.memory_space<vmem>>, %arg7: memref<10x16x8xbf16, #tpu.memory_space<vmem>>) attributes {dimension_semantics = [#tpu.dimension_semantics<parallel>], iteration_bounds = array<i64: 2>, scalar_prefetch = 0 : i64, scratch_operands = 1 : i64, tpu.core_type = #tpu.core_type<tc>, window_params = [{transform_indices = @transform_0, window_bounds = array<i64: 1, 8, 8, 8>}, {pipeline_mode = #tpu.pipeline_mode<synchronous>, transform_indices = @transform_1, window_bounds = array<i64: 1, 8>}, {pipeline_mode = #tpu.pipeline_mode<synchronous>, transform_indices = @transform_2, window_bounds = array<i64: 1, 8>}, {pipeline_mode = #tpu.pipeline_mode<synchronous>, transform_indices = @transform_3, window_bounds = array<i64: 9, 8, 8>}, {transform_indices = @transform_4, window_bounds = array<i64: 1, 8, 8, 8>}, {transform_indices = @transform_5, window_bounds = array<i64: 1, 8, 8, 8>}]} {
    %c0 = arith.constant 0 : index
    %c0_0 = arith.constant 0 : index
    %c0_1 = arith.constant 0 : index
    %c0_2 = arith.constant 0 : index
    %0 = vector.load %arg1[%c0, %c0_0, %c0_1, %c0_2] : memref<1x8x8x8xbf16, #tpu.memory_space<vmem>>, vector<1x8x8x8xbf16>
    %1 = vector.shape_cast %0 : vector<1x8x8x8xbf16> to vector<8x8x8xbf16>
    %2 = arith.extf %1 : vector<8x8x8xbf16> to vector<8x8x8xf32>
    %c0_3 = arith.constant 0 : index
    %c0_4 = arith.constant 0 : index
    %3 = vector.load %arg2[%c0_3, %c0_4] : memref<1x8xf32, #tpu.memory_space<vmem>>, vector<1x8xf32>
    %4 = vector.shape_cast %3 : vector<1x8xf32> to vector<1x1x8xf32>
    %c0_5 = arith.constant 0 : index
    %c0_6 = arith.constant 0 : index
    %5 = vector.load %arg3[%c0_5, %c0_6] : memref<1x8xf32, #tpu.memory_space<vmem>>, vector<1x8xf32>
    %6 = vector.shape_cast %5 : vector<1x8xf32> to vector<1x1x8xf32>
    %7 = vector.broadcast %4 : vector<1x1x8xf32> to vector<8x8x8xf32>
    %8 = arith.mulf %2, %7 : vector<8x8x8xf32>
    %9 = vector.broadcast %6 : vector<1x1x8xf32> to vector<8x8x8xf32>
    %10 = arith.addf %8, %9 : vector<8x8x8xf32>
    %cst = arith.constant 0.000000e+00 : f32
    %11 = vector.broadcast %cst : f32 to vector<8x8x8xf32>
    %12 = arith.maximumf %10, %11 : vector<8x8x8xf32>
    %13 = arith.truncf %12 : vector<8x8x8xf32> to vector<8x8x8xbf16>
    %cst_7 = arith.constant 0.000000e+00 : bf16
    %14 = vector.broadcast %cst_7 : bf16 to vector<10x16x8xbf16>
    %c0_8 = arith.constant 0 : index
    %c0_9 = arith.constant 0 : index
    %c0_10 = arith.constant 0 : index
    %15 = vector.load %arg7[%c0_8, %c0_9, %c0_10] : memref<10x16x8xbf16, #tpu.memory_space<vmem>>, vector<10x16x8xbf16>
    tpu.vector_store %arg7[%c0_8, %c0_9, %c0_10], %14 {strides = array<i32>} : memref<10x16x8xbf16, #tpu.memory_space<vmem>>, vector<10x16x8xbf16>,
    %c1 = arith.constant 1 : index
    %c1_11 = arith.constant 1 : index
    %c0_12 = arith.constant 0 : index
    %16 = vector.load %arg7[%c1, %c1_11, %c0_12] : memref<10x16x8xbf16, #tpu.memory_space<vmem>>, vector<8x8x8xbf16>
    tpu.vector_store %arg7[%c1, %c1_11, %c0_12], %13 {strides = array<i32>} : memref<10x16x8xbf16, #tpu.memory_space<vmem>>, vector<8x8x8xbf16>,
    %cst_13 = arith.constant 0.000000e+00 : f32
    %17 = vector.broadcast %cst_13 : f32 to vector<64x8xf32>
    %c0_14 = arith.constant 0 : index
    %c0_15 = arith.constant 0 : index
    %c0_16 = arith.constant 0 : index
    %18 = vector.load %arg7[%c0_14, %c0_15, %c0_16] : memref<10x16x8xbf16, #tpu.memory_space<vmem>>, vector<8x8x8xbf16>
    %19 = vector.shape_cast %18 : vector<8x8x8xbf16> to vector<64x8xbf16>
    %c0_17 = arith.constant 0 : index
    %c0_18 = arith.constant 0 : index
    %c0_19 = arith.constant 0 : index
    %20 = vector.load %arg4[%c0_17, %c0_18, %c0_19] : memref<9x8x8xbf16, #tpu.memory_space<vmem>>, vector<1x8x8xbf16>
    %21 = vector.shape_cast %20 : vector<1x8x8xbf16> to vector<8x8xbf16>
    %cst_20 = arith.constant dense<0.000000e+00> : vector<64x8xf32>
    %22 = tpu.matmul %19, %21, %cst_20 {dimension_numbers = #tpu.dot_dimension_numbers<[1], [0], [0], [1], [0, 0, 1, 1], [], []>} : vector<64x8xbf16>, vector<8x8xbf16>, vector<64x8xf32> -> vector<64x8xf32>
    %23 = arith.addf %17, %22 : vector<64x8xf32>
    %c0_21 = arith.constant 0 : index
    %c1_22 = arith.constant 1 : index
    %c0_23 = arith.constant 0 : index
    %24 = vector.load %arg7[%c0_21, %c1_22, %c0_23] : memref<10x16x8xbf16, #tpu.memory_space<vmem>>, vector<8x8x8xbf16>
    %25 = vector.shape_cast %24 : vector<8x8x8xbf16> to vector<64x8xbf16>
    %c1_24 = arith.constant 1 : index
    %c0_25 = arith.constant 0 : index
    %c0_26 = arith.constant 0 : index
    %26 = vector.load %arg4[%c1_24, %c0_25, %c0_26] : memref<9x8x8xbf16, #tpu.memory_space<vmem>>, vector<1x8x8xbf16>
    %27 = vector.shape_cast %26 : vector<1x8x8xbf16> to vector<8x8xbf16>
    %cst_27 = arith.constant dense<0.000000e+00> : vector<64x8xf32>
    %28 = tpu.matmul %25, %27, %cst_27 {dimension_numbers = #tpu.dot_dimension_numbers<[1], [0], [0], [1], [0, 0, 1, 1], [], []>} : vector<64x8xbf16>, vector<8x8xbf16>, vector<64x8xf32> -> vector<64x8xf32>
    %29 = arith.addf %23, %28 : vector<64x8xf32>
    %c0_28 = arith.constant 0 : index
    %c2 = arith.constant 2 : index
    %c0_29 = arith.constant 0 : index
    %30 = vector.load %arg7[%c0_28, %c2, %c0_29] : memref<10x16x8xbf16, #tpu.memory_space<vmem>>, vector<8x8x8xbf16>
    %31 = vector.shape_cast %30 : vector<8x8x8xbf16> to vector<64x8xbf16>
    %c2_30 = arith.constant 2 : index
    %c0_31 = arith.constant 0 : index
    %c0_32 = arith.constant 0 : index
    %32 = vector.load %arg4[%c2_30, %c0_31, %c0_32] : memref<9x8x8xbf16, #tpu.memory_space<vmem>>, vector<1x8x8xbf16>
    %33 = vector.shape_cast %32 : vector<1x8x8xbf16> to vector<8x8xbf16>
    %cst_33 = arith.constant dense<0.000000e+00> : vector<64x8xf32>
    %34 = tpu.matmul %31, %33, %cst_33 {dimension_numbers = #tpu.dot_dimension_numbers<[1], [0], [0], [1], [0, 0, 1, 1], [], []>} : vector<64x8xbf16>, vector<8x8xbf16>, vector<64x8xf32> -> vector<64x8xf32>
    %35 = arith.addf %29, %34 : vector<64x8xf32>
    %c1_34 = arith.constant 1 : index
    %c0_35 = arith.constant 0 : index
    %c0_36 = arith.constant 0 : index
    %36 = vector.load %arg7[%c1_34, %c0_35, %c0_36] : memref<10x16x8xbf16, #tpu.memory_space<vmem>>, vector<8x8x8xbf16>
    %37 = vector.shape_cast %36 : vector<8x8x8xbf16> to vector<64x8xbf16>
    %c3 = arith.constant 3 : index
    %c0_37 = arith.constant 0 : index
    %c0_38 = arith.constant 0 : index
    %38 = vector.load %arg4[%c3, %c0_37, %c0_38] : memref<9x8x8xbf16, #tpu.memory_space<vmem>>, vector<1x8x8xbf16>
    %39 = vector.shape_cast %38 : vector<1x8x8xbf16> to vector<8x8xbf16>
    %cst_39 = arith.constant dense<0.000000e+00> : vector<64x8xf32>
    %40 = tpu.matmul %37, %39, %cst_39 {dimension_numbers = #tpu.dot_dimension_numbers<[1], [0], [0], [1], [0, 0, 1, 1], [], []>} : vector<64x8xbf16>, vector<8x8xbf16>, vector<64x8xf32> -> vector<64x8xf32>
    %41 = arith.addf %35, %40 : vector<64x8xf32>
    %c1_40 = arith.constant 1 : index
    %c1_41 = arith.constant 1 : index
    %c0_42 = arith.constant 0 : index
    %42 = vector.load %arg7[%c1_40, %c1_41, %c0_42] : memref<10x16x8xbf16, #tpu.memory_space<vmem>>, vector<8x8x8xbf16>
    %43 = vector.shape_cast %42 : vector<8x8x8xbf16> to vector<64x8xbf16>
    %c4 = arith.constant 4 : index
    %c0_43 = arith.constant 0 : index
    %c0_44 = arith.constant 0 : index
    %44 = vector.load %arg4[%c4, %c0_43, %c0_44] : memref<9x8x8xbf16, #tpu.memory_space<vmem>>, vector<1x8x8xbf16>
    %45 = vector.shape_cast %44 : vector<1x8x8xbf16> to vector<8x8xbf16>
    %cst_45 = arith.constant dense<0.000000e+00> : vector<64x8xf32>
    %46 = tpu.matmul %43, %45, %cst_45 {dimension_numbers = #tpu.dot_dimension_numbers<[1], [0], [0], [1], [0, 0, 1, 1], [], []>} : vector<64x8xbf16>, vector<8x8xbf16>, vector<64x8xf32> -> vector<64x8xf32>
    %47 = arith.addf %41, %46 : vector<64x8xf32>
    %c1_46 = arith.constant 1 : index
    %c2_47 = arith.constant 2 : index
    %c0_48 = arith.constant 0 : index
    %48 = vector.load %arg7[%c1_46, %c2_47, %c0_48] : memref<10x16x8xbf16, #tpu.memory_space<vmem>>, vector<8x8x8xbf16>
    %49 = vector.shape_cast %48 : vector<8x8x8xbf16> to vector<64x8xbf16>
    %c5 = arith.constant 5 : index
    %c0_49 = arith.constant 0 : index
    %c0_50 = arith.constant 0 : index
    %50 = vector.load %arg4[%c5, %c0_49, %c0_50] : memref<9x8x8xbf16, #tpu.memory_space<vmem>>, vector<1x8x8xbf16>
    %51 = vector.shape_cast %50 : vector<1x8x8xbf16> to vector<8x8xbf16>
    %cst_51 = arith.constant dense<0.000000e+00> : vector<64x8xf32>
    %52 = tpu.matmul %49, %51, %cst_51 {dimension_numbers = #tpu.dot_dimension_numbers<[1], [0], [0], [1], [0, 0, 1, 1], [], []>} : vector<64x8xbf16>, vector<8x8xbf16>, vector<64x8xf32> -> vector<64x8xf32>
    %53 = arith.addf %47, %52 : vector<64x8xf32>
    %c2_52 = arith.constant 2 : index
    %c0_53 = arith.constant 0 : index
    %c0_54 = arith.constant 0 : index
    %54 = vector.load %arg7[%c2_52, %c0_53, %c0_54] : memref<10x16x8xbf16, #tpu.memory_space<vmem>>, vector<8x8x8xbf16>
    %55 = vector.shape_cast %54 : vector<8x8x8xbf16> to vector<64x8xbf16>
    %c6 = arith.constant 6 : index
    %c0_55 = arith.constant 0 : index
    %c0_56 = arith.constant 0 : index
    %56 = vector.load %arg4[%c6, %c0_55, %c0_56] : memref<9x8x8xbf16, #tpu.memory_space<vmem>>, vector<1x8x8xbf16>
    %57 = vector.shape_cast %56 : vector<1x8x8xbf16> to vector<8x8xbf16>
    %cst_57 = arith.constant dense<0.000000e+00> : vector<64x8xf32>
    %58 = tpu.matmul %55, %57, %cst_57 {dimension_numbers = #tpu.dot_dimension_numbers<[1], [0], [0], [1], [0, 0, 1, 1], [], []>} : vector<64x8xbf16>, vector<8x8xbf16>, vector<64x8xf32> -> vector<64x8xf32>
    %59 = arith.addf %53, %58 : vector<64x8xf32>
    %c2_58 = arith.constant 2 : index
    %c1_59 = arith.constant 1 : index
    %c0_60 = arith.constant 0 : index
    %60 = vector.load %arg7[%c2_58, %c1_59, %c0_60] : memref<10x16x8xbf16, #tpu.memory_space<vmem>>, vector<8x8x8xbf16>
    %61 = vector.shape_cast %60 : vector<8x8x8xbf16> to vector<64x8xbf16>
    %c7 = arith.constant 7 : index
    %c0_61 = arith.constant 0 : index
    %c0_62 = arith.constant 0 : index
    %62 = vector.load %arg4[%c7, %c0_61, %c0_62] : memref<9x8x8xbf16, #tpu.memory_space<vmem>>, vector<1x8x8xbf16>
    %63 = vector.shape_cast %62 : vector<1x8x8xbf16> to vector<8x8xbf16>
    %cst_63 = arith.constant dense<0.000000e+00> : vector<64x8xf32>
    %64 = tpu.matmul %61, %63, %cst_63 {dimension_numbers = #tpu.dot_dimension_numbers<[1], [0], [0], [1], [0, 0, 1, 1], [], []>} : vector<64x8xbf16>, vector<8x8xbf16>, vector<64x8xf32> -> vector<64x8xf32>
    %65 = arith.addf %59, %64 : vector<64x8xf32>
    %c2_64 = arith.constant 2 : index
    %c2_65 = arith.constant 2 : index
    %c0_66 = arith.constant 0 : index
    %66 = vector.load %arg7[%c2_64, %c2_65, %c0_66] : memref<10x16x8xbf16, #tpu.memory_space<vmem>>, vector<8x8x8xbf16>
    %67 = vector.shape_cast %66 : vector<8x8x8xbf16> to vector<64x8xbf16>
    %c8 = arith.constant 8 : index
    %c0_67 = arith.constant 0 : index
    %c0_68 = arith.constant 0 : index
    %68 = vector.load %arg4[%c8, %c0_67, %c0_68] : memref<9x8x8xbf16, #tpu.memory_space<vmem>>, vector<1x8x8xbf16>
    %69 = vector.shape_cast %68 : vector<1x8x8xbf16> to vector<8x8xbf16>
    %cst_69 = arith.constant dense<0.000000e+00> : vector<64x8xf32>
    %70 = tpu.matmul %67, %69, %cst_69 {dimension_numbers = #tpu.dot_dimension_numbers<[1], [0], [0], [1], [0, 0, 1, 1], [], []>} : vector<64x8xbf16>, vector<8x8xbf16>, vector<64x8xf32> -> vector<64x8xf32>
    %71 = arith.addf %65, %70 : vector<64x8xf32>
    %72 = vector.shape_cast %71 : vector<64x8xf32> to vector<8x8x8xf32>
    %c0_70 = arith.constant 0 : index
    %c0_71 = arith.constant 0 : index
    %c0_72 = arith.constant 0 : index
    %c0_73 = arith.constant 0 : index
    %73 = vector.load %arg5[%c0_70, %c0_71, %c0_72, %c0_73] : memref<1x8x8x8xbf16, #tpu.memory_space<vmem>>, vector<1x8x8x8xbf16>
    %74 = vector.shape_cast %73 : vector<1x8x8x8xbf16> to vector<8x8x8xbf16>
    %75 = arith.extf %74 : vector<8x8x8xbf16> to vector<8x8x8xf32>
    %76 = arith.addf %72, %75 : vector<8x8x8xf32>
    %c0_74 = arith.constant 0 : index
    %c0_75 = arith.constant 0 : index
    %c0_76 = arith.constant 0 : index
    %c0_77 = arith.constant 0 : index
    %77 = vector.load %arg6[%c0_74, %c0_75, %c0_76, %c0_77] : memref<1x8x8x8xf32, #tpu.memory_space<vmem>>, vector<1x8x8x8xf32>
    %78 = vector.shape_cast %77 : vector<1x8x8x8xf32> to vector<8x8x8xf32>
    %79 = vector.shape_cast %76 : vector<8x8x8xf32> to vector<1x8x8x8xf32>
    tpu.vector_store %arg6[%c0_74, %c0_75, %c0_76, %c0_77], %79 {strides = array<i32>} : memref<1x8x8x8xf32, #tpu.memory_space<vmem>>, vector<1x8x8x8xf32>,
    return
  }
  func.func @transform_0(%arg0: i32) -> (i32, i32, i32, i32) {
    %c0_i32 = arith.constant 0 : i32
    %c0_i32_0 = arith.constant 0 : i32
    %c0_i32_1 = arith.constant 0 : i32
    %c0_i32_2 = arith.constant 0 : i32
    return %arg0, %c0_i32, %c0_i32_0, %c0_i32_1 : i32, i32, i32, i32
  }
  func.func @transform_1(%arg0: i32) -> (i32, i32) {
    %c0_i32 = arith.constant 0 : i32
    %c0_i32_0 = arith.constant 0 : i32
    %c0_i32_1 = arith.constant 0 : i32
    return %c0_i32, %c0_i32_0 : i32, i32
  }
  func.func @transform_2(%arg0: i32) -> (i32, i32) {
    %c0_i32 = arith.constant 0 : i32
    %c0_i32_0 = arith.constant 0 : i32
    %c0_i32_1 = arith.constant 0 : i32
    return %c0_i32, %c0_i32_0 : i32, i32
  }
  func.func @transform_3(%arg0: i32) -> (i32, i32, i32) {
    %c0_i32 = arith.constant 0 : i32
    %c0_i32_0 = arith.constant 0 : i32
    %c0_i32_1 = arith.constant 0 : i32
    %c0_i32_2 = arith.constant 0 : i32
    return %c0_i32, %c0_i32_0, %c0_i32_1 : i32, i32, i32
  }
  func.func @transform_4(%arg0: i32) -> (i32, i32, i32, i32) {
    %c0_i32 = arith.constant 0 : i32
    %c0_i32_0 = arith.constant 0 : i32
    %c0_i32_1 = arith.constant 0 : i32
    %c0_i32_2 = arith.constant 0 : i32
    return %arg0, %c0_i32, %c0_i32_0, %c0_i32_1 : i32, i32, i32, i32
  }
  func.func @transform_5(%arg0: i32) -> (i32, i32, i32, i32) {
    %c0_i32 = arith.constant 0 : i32
    %c0_i32_0 = arith.constant 0 : i32
    %c0_i32_1 = arith.constant 0 : i32
    %c0_i32_2 = arith.constant 0 : i32
    return %arg0, %c0_i32, %c0_i32_0, %c0_i32_1 : i32, i32, i32, i32
  }
}

module attributes {stable_mosaic.version = 11 : i64} {
  func.func @_mm_stats_kernel(%arg0: i32, %arg1: i32, %arg2: i32, %arg3: memref<128x36xbf16, #tpu.memory_space<vmem>>, %arg4: memref<36x128xbf16, #tpu.memory_space<vmem>>, %arg5: memref<128x128xbf16, #tpu.memory_space<vmem>>, %arg6: memref<1x1x128xf32, #tpu.memory_space<vmem>>, %arg7: memref<1x1x128xf32, #tpu.memory_space<vmem>>, %arg8: memref<128x128xf32, #tpu.memory_space<vmem>>) attributes {dimension_semantics = [#tpu.dimension_semantics<parallel>, #tpu.dimension_semantics<parallel>, #tpu.dimension_semantics<arbitrary>], iteration_bounds = array<i64: 1, 1, 1>, scalar_prefetch = 0 : i64, scratch_operands = 1 : i64, tpu.core_type = #tpu.core_type<tc>, window_params = [{transform_indices = @transform_0, window_bounds = array<i64: 128, 36>}, {transform_indices = @transform_1, window_bounds = array<i64: 36, 128>}, {transform_indices = @transform_2, window_bounds = array<i64: 128, 128>}, {transform_indices = @transform_3, window_bounds = array<i64: 1, 1, 128>}, {transform_indices = @transform_4, window_bounds = array<i64: 1, 1, 128>}]} {
    %c0_i32 = arith.constant 0 : i32
    %0 = arith.cmpi eq, %arg2, %c0_i32 : i32
    %1 = arith.extui %0 : i1 to i32
    %c0_i32_0 = arith.constant 0 : i32
    %2 = arith.cmpi ne, %1, %c0_i32_0 : i32
    scf.if %2 {
      %cst_10 = arith.constant 0.000000e+00 : f32
      %12 = vector.broadcast %cst_10 : f32 to vector<128x128xf32>
      %c0_11 = arith.constant 0 : index
      %c0_12 = arith.constant 0 : index
      %13 = vector.load %arg8[%c0_11, %c0_12] : memref<128x128xf32, #tpu.memory_space<vmem>>, vector<128x128xf32>
      tpu.vector_store %arg8[%c0_11, %c0_12], %12 {strides = array<i32>} : memref<128x128xf32, #tpu.memory_space<vmem>>, vector<128x128xf32>,
    } else {
    }
    %c0 = arith.constant 0 : index
    %c0_1 = arith.constant 0 : index
    %3 = vector.load %arg8[%c0, %c0_1] : memref<128x128xf32, #tpu.memory_space<vmem>>, vector<128x128xf32>
    %c0_2 = arith.constant 0 : index
    %c0_3 = arith.constant 0 : index
    %4 = vector.load %arg3[%c0_2, %c0_3] : memref<128x36xbf16, #tpu.memory_space<vmem>>, vector<128x36xbf16>
    %c0_4 = arith.constant 0 : index
    %c0_5 = arith.constant 0 : index
    %5 = vector.load %arg4[%c0_4, %c0_5] : memref<36x128xbf16, #tpu.memory_space<vmem>>, vector<36x128xbf16>
    %cst = arith.constant dense<0.000000e+00> : vector<128x128xf32>
    %6 = tpu.matmul %4, %5, %cst {dimension_numbers = #tpu.dot_dimension_numbers<[1], [0], [0], [1], [0, 0, 1, 1], [], []>} : vector<128x36xbf16>, vector<36x128xbf16>, vector<128x128xf32> -> vector<128x128xf32>
    %7 = arith.addf %3, %6 : vector<128x128xf32>
    %c0_6 = arith.constant 0 : index
    %c0_7 = arith.constant 0 : index
    %8 = vector.load %arg8[%c0_6, %c0_7] : memref<128x128xf32, #tpu.memory_space<vmem>>, vector<128x128xf32>
    tpu.vector_store %arg8[%c0_6, %c0_7], %7 {strides = array<i32>} : memref<128x128xf32, #tpu.memory_space<vmem>>, vector<128x128xf32>,
    %c0_i32_8 = arith.constant 0 : i32
    %9 = arith.cmpi eq, %arg2, %c0_i32_8 : i32
    %10 = arith.extui %9 : i1 to i32
    %c0_i32_9 = arith.constant 0 : i32
    %11 = arith.cmpi ne, %10, %c0_i32_9 : i32
    scf.if %11 {
      %c0_10 = arith.constant 0 : index
      %c0_11 = arith.constant 0 : index
      %12 = vector.load %arg8[%c0_10, %c0_11] : memref<128x128xf32, #tpu.memory_space<vmem>>, vector<128x128xf32>
      %13 = arith.truncf %12 : vector<128x128xf32> to vector<128x128xbf16>
      %c0_12 = arith.constant 0 : index
      %c0_13 = arith.constant 0 : index
      %14 = vector.load %arg5[%c0_12, %c0_13] : memref<128x128xbf16, #tpu.memory_space<vmem>>, vector<128x128xbf16>
      tpu.vector_store %arg5[%c0_12, %c0_13], %13 {strides = array<i32>} : memref<128x128xbf16, #tpu.memory_space<vmem>>, vector<128x128xbf16>,
      %cst_14 = arith.constant dense<0.000000e+00> : vector<128xf32>
      %15 = vector.multi_reduction <add>, %12, %cst_14 [0] : vector<128x128xf32> to vector<128xf32>
      %16 = vector.shape_cast %15 : vector<128xf32> to vector<1x128xf32>
      %17 = vector.shape_cast %16 : vector<1x128xf32> to vector<1x1x128xf32>
      %c0_15 = arith.constant 0 : index
      %c0_16 = arith.constant 0 : index
      %c0_17 = arith.constant 0 : index
      %18 = vector.load %arg6[%c0_15, %c0_16, %c0_17] : memref<1x1x128xf32, #tpu.memory_space<vmem>>, vector<1x1x128xf32>
      tpu.vector_store %arg6[%c0_15, %c0_16, %c0_17], %17 {strides = array<i32>} : memref<1x1x128xf32, #tpu.memory_space<vmem>>, vector<1x1x128xf32>,
      %19 = arith.mulf %12, %12 : vector<128x128xf32>
      %cst_18 = arith.constant dense<0.000000e+00> : vector<128xf32>
      %20 = vector.multi_reduction <add>, %19, %cst_18 [0] : vector<128x128xf32> to vector<128xf32>
      %21 = vector.shape_cast %20 : vector<128xf32> to vector<1x128xf32>
      %22 = vector.shape_cast %21 : vector<1x128xf32> to vector<1x1x128xf32>
      %c0_19 = arith.constant 0 : index
      %c0_20 = arith.constant 0 : index
      %c0_21 = arith.constant 0 : index
      %23 = vector.load %arg7[%c0_19, %c0_20, %c0_21] : memref<1x1x128xf32, #tpu.memory_space<vmem>>, vector<1x1x128xf32>
      tpu.vector_store %arg7[%c0_19, %c0_20, %c0_21], %22 {strides = array<i32>} : memref<1x1x128xf32, #tpu.memory_space<vmem>>, vector<1x1x128xf32>,
    } else {
    }
    return
  }
  func.func @transform_0(%arg0: i32, %arg1: i32, %arg2: i32) -> (i32, i32) {
    %c0_i32 = arith.constant 0 : i32
    return %arg0, %arg2 : i32, i32
  }
  func.func @transform_1(%arg0: i32, %arg1: i32, %arg2: i32) -> (i32, i32) {
    %c0_i32 = arith.constant 0 : i32
    return %arg2, %arg1 : i32, i32
  }
  func.func @transform_2(%arg0: i32, %arg1: i32, %arg2: i32) -> (i32, i32) {
    %c0_i32 = arith.constant 0 : i32
    return %arg0, %arg1 : i32, i32
  }
  func.func @transform_3(%arg0: i32, %arg1: i32, %arg2: i32) -> (i32, i32, i32) {
    %c0_i32 = arith.constant 0 : i32
    %c0_i32_0 = arith.constant 0 : i32
    return %arg0, %c0_i32, %arg1 : i32, i32, i32
  }
  func.func @transform_4(%arg0: i32, %arg1: i32, %arg2: i32) -> (i32, i32, i32) {
    %c0_i32 = arith.constant 0 : i32
    %c0_i32_0 = arith.constant 0 : i32
    return %arg0, %c0_i32, %arg1 : i32, i32, i32
  }
}

</mosaic_0001>

<llo_original>
// kernel: preact_block_forward.4
$region0: #{preact_block_forward.4}
  #allocation0 [shape = 'u32[]', space=smem, size = 0x4, offset = 0x4, fixed_abs, tag = 'smem constant byte address 0x4 - core index']
  #allocation1 [shape = 'u32[144,128]{1,0:T(1,128)}', space=vmem, size = 0x12000, scoped, tag = 'internal scratch']
  %s0 = inlined_call_operand.vmem [shape: bf16[512,4], index: 0, kind: input, shape index: {}]
  %s1 = inlined_call_operand.vmem [shape: f32[1,1,4], index: 1, kind: output, shape index: {0}]
  %s2 = inlined_call_operand.vmem [shape: f32[1,1,4], index: 2, kind: output, shape index: {1}]
  %3 = xla_tuple %s1, %s2
  %s4 = sld [smem:[#allocation0]]
  $region22: #{preact_block_forward.4} parent=0
    _
  %s6 = ssub.s32 1, %s4
  %s7 = scalar_select 0, %s6, %s4
  // Predicated region
  $region2: #{preact_block_forward.4} parent=0 // pred_check
    _
  $region3: #{preact_block_forward.4} parent=0 // pred_check_branch
    %9 = sbr.rel (0) target = $region5
  $region4: #{preact_block_forward.4} parent=0 // pred_region
    _
  $region5: #{preact_block_forward.4} parent=0 // pred_fallthru
    _
  %v10 = vld [vmem:[%s0] sm:$0xf]
  %v11 = vld [vmem:[%s0 + $0x4] sm:$0xf]
  %v12 = vld [vmem:[%s0 + $0x8] sm:$0xf]
  %v13 = vld [vmem:[%s0 + $0xc] sm:$0xf]
  %v14 = vld [vmem:[%s0 + $0x10] sm:$0xf]
  %v15 = vld [vmem:[%s0 + $0x14] sm:$0xf]
  %v16 = vld [vmem:[%s0 + $0x18] sm:$0xf]
  %v17 = vld [vmem:[%s0 + $0x1c] sm:$0xf]
  %v18 = vld [vmem:[%s0 + $0x20] sm:$0xf]
  %v19 = vld [vmem:[%s0 + $0x24] sm:$0xf]
  %v20 = vld [vmem:[%s0 + $0x28] sm:$0xf]
  %v21 = vld [vmem:[%s0 + $0x2c] sm:$0xf]
  %v22 = vld [vmem:[%s0 + $0x30] sm:$0xf]
  %v23 = vld [vmem:[%s0 + $0x34] sm:$0xf]
  %v24 = vld [vmem:[%s0 + $0x38] sm:$0xf]
  %v25 = vld [vmem:[%s0 + $0x3c] sm:$0xf]
  %v26 = vld [vmem:[%s0 + $0x40] sm:$0xf]
  %v27 = vld [vmem:[%s0 + $0x44] sm:$0xf]
  %v28 = vld [vmem:[%s0 + $0x48] sm:$0xf]
  %v29 = vld [vmem:[%s0 + $0x4c] sm:$0xf]
  %v30 = vld [vmem:[%s0 + $0x50] sm:$0xf]
  %v31 = vld [vmem:[%s0 + $0x54] sm:$0xf]
  %v32 = vld [vmem:[%s0 + $0x58] sm:$0xf]
  %v33 = vld [vmem:[%s0 + $0x5c] sm:$0xf]
  %v34 = vld [vmem:[%s0 + $0x60] sm:$0xf]
  %v35 = vld [vmem:[%s0 + $0x64] sm:$0xf]
  %v36 = vld [vmem:[%s0 + $0x68] sm:$0xf]
  %v37 = vld [vmem:[%s0 + $0x6c] sm:$0xf]
  %v38 = vld [vmem:[%s0 + $0x70] sm:$0xf]
  %v39 = vld [vmem:[%s0 + $0x74] sm:$0xf]
  %v40 = vld [vmem:[%s0 + $0x78] sm:$0xf]
  %v41 = vld [vmem:[%s0 + $0x7c] sm:$0xf]
  %v42 = vld [vmem:[%s0 + $0x80] sm:$0xf]
  %v43 = vld [vmem:[%s0 + $0x84] sm:$0xf]
  %v44 = vld [vmem:[%s0 + $0x88] sm:$0xf]
  %v45 = vld [vmem:[%s0 + $0x8c] sm:$0xf]
  %v46 = vld [vmem:[%s0 + $0x90] sm:$0xf]
  %v47 = vld [vmem:[%s0 + $0x94] sm:$0xf]
  %v48 = vld [vmem:[%s0 + $0x98] sm:$0xf]
  %v49 = vld [vmem:[%s0 + $0x9c] sm:$0xf]
  %v50 = vld [vmem:[%s0 + $0xa0] sm:$0xf]
  %v51 = vld [vmem:[%s0 + $0xa4] sm:$0xf]
  %v52 = vld [vmem:[%s0 + $0xa8] sm:$0xf]
  %v53 = vld [vmem:[%s0 + $0xac] sm:$0xf]
  %v54 = vld [vmem:[%s0 + $0xb0] sm:$0xf]
  %v55 = vld [vmem:[%s0 + $0xb4] sm:$0xf]
  %v56 = vld [vmem:[%s0 + $0xb8] sm:$0xf]
  %v57 = vld [vmem:[%s0 + $0xbc] sm:$0xf]
  %v58 = vld [vmem:[%s0 + $0xc0] sm:$0xf]
  %v59 = vld [vmem:[%s0 + $0xc4] sm:$0xf]
  %v60 = vld [vmem:[%s0 + $0xc8] sm:$0xf]
  %v61 = vld [vmem:[%s0 + $0xcc] sm:$0xf]
  %v62 = vld [vmem:[%s0 + $0xd0] sm:$0xf]
  %v63 = vld [vmem:[%s0 + $0xd4] sm:$0xf]
  %v64 = vld [vmem:[%s0 + $0xd8] sm:$0xf]
  %v65 = vld [vmem:[%s0 + $0xdc] sm:$0xf]
  %v66 = vld [vmem:[%s0 + $0xe0] sm:$0xf]
  %v67 = vld [vmem:[%s0 + $0xe4] sm:$0xf]
  %v68 = vld [vmem:[%s0 + $0xe8] sm:$0xf]
  %v69 = vld [vmem:[%s0 + $0xec] sm:$0xf]
  %v70 = vld [vmem:[%s0 + $0xf0] sm:$0xf]
  %v71 = vld [vmem:[%s0 + $0xf4] sm:$0xf]
  %v72 = vld [vmem:[%s0 + $0xf8] sm:$0xf]
  %v73 = vld [vmem:[%s0 + $0xfc] sm:$0xf]
  %v74 = vunpack.c.l.bf16 %v10
  %v75 = vunpack.c.l.bf16 %v11
  %v76 = vunpack.c.l.bf16 %v12
  %v77 = vunpack.c.l.bf16 %v13
  %v78 = vunpack.c.l.bf16 %v14
  %v79 = vunpack.c.l.bf16 %v15
  %v80 = vunpack.c.l.bf16 %v16
  %v81 = vunpack.c.l.bf16 %v17
  %v82 = vunpack.c.l.bf16 %v18
  %v83 = vunpack.c.l.bf16 %v19
  %v84 = vunpack.c.l.bf16 %v20
  %v85 = vunpack.c.l.bf16 %v21
  %v86 = vunpack.c.l.bf16 %v22
  %v87 = vunpack.c.l.bf16 %v23
  %v88 = vunpack.c.l.bf16 %v24
  %v89 = vunpack.c.l.bf16 %v25
  %v90 = vunpack.c.l.bf16 %v26
  %v91 = vunpack.c.l.bf16 %v27
  %v92 = vunpack.c.l.bf16 %v28
  %v93 = vunpack.c.l.bf16 %v29
  %v94 = vunpack.c.l.bf16 %v30
  %v95 = vunpack.c.l.bf16 %v31
  %v96 = vunpack.c.l.bf16 %v32
  %v97 = vunpack.c.l.bf16 %v33
  %v98 = vunpack.c.l.bf16 %v34
  %v99 = vunpack.c.l.bf16 %v35
  %v100 = vunpack.c.l.bf16 %v36
  %v101 = vunpack.c.l.bf16 %v37
  %v102 = vunpack.c.l.bf16 %v38
  %v103 = vunpack.c.l.bf16 %v39
  %v104 = vunpack.c.l.bf16 %v40
  %v105 = vunpack.c.l.bf16 %v41
  %v106 = vunpack.c.l.bf16 %v42
  %v107 = vunpack.c.l.bf16 %v43
  %v108 = vunpack.c.l.bf16 %v44
  %v109 = vunpack.c.l.bf16 %v45
  %v110 = vunpack.c.l.bf16 %v46
  %v111 = vunpack.c.l.bf16 %v47
  %v112 = vunpack.c.l.bf16 %v48
  %v113 = vunpack.c.l.bf16 %v49
  %v114 = vunpack.c.l.bf16 %v50
  %v115 = vunpack.c.l.bf16 %v51
  %v116 = vunpack.c.l.bf16 %v52
  %v117 = vunpack.c.l.bf16 %v53
  %v118 = vunpack.c.l.bf16 %v54
  %v119 = vunpack.c.l.bf16 %v55
  %v120 = vunpack.c.l.bf16 %v56
  %v121 = vunpack.c.l.bf16 %v57
  %v122 = vunpack.c.l.bf16 %v58
  %v123 = vunpack.c.l.bf16 %v59
  %v124 = vunpack.c.l.bf16 %v60
  %v125 = vunpack.c.l.bf16 %v61
  %v126 = vunpack.c.l.bf16 %v62
  %v127 = vunpack.c.l.bf16 %v63
  %v128 = vunpack.c.l.bf16 %v64
  %v129 = vunpack.c.l.bf16 %v65
  %v130 = vunpack.c.l.bf16 %v66
  %v131 = vunpack.c.l.bf16 %v67
  %v132 = vunpack.c.l.bf16 %v68
  %v133 = vunpack.c.l.bf16 %v69
  %v134 = vunpack.c.l.bf16 %v70
  %v135 = vunpack.c.l.bf16 %v71
  %v136 = vunpack.c.l.bf16 %v72
  %v137 = vunpack.c.l.bf16 %v73
  %vm138 = vcmask 31744
  %v139 = vsel %vm138, %v74, 0.0
  %v140 = vsel %vm138, %v75, 0.0
  %v141 = vadd.f32 %v139, %v140
  %v142 = vsel %vm138, %v76, 0.0
  %v143 = vadd.f32 %v141, %v142
  %v144 = vsel %vm138, %v77, 0.0
  %v145 = vadd.f32 %v143, %v144
  %v146 = vsel %vm138, %v78, 0.0
  %v147 = vadd.f32 %v145, %v146
  %v148 = vsel %vm138, %v79, 0.0
  %v149 = vadd.f32 %v147, %v148
  %v150 = vsel %vm138, %v80, 0.0
  %v151 = vadd.f32 %v149, %v150
  %v152 = vsel %vm138, %v81, 0.0
  %v153 = vadd.f32 %v151, %v152
  %v154 = vsel %vm138, %v82, 0.0
  %v155 = vadd.f32 %v153, %v154
  %v156 = vsel %vm138, %v83, 0.0
  %v157 = vadd.f32 %v155, %v156
  %v158 = vsel %vm138, %v84, 0.0
  %v159 = vadd.f32 %v157, %v158
  %v160 = vsel %vm138, %v85, 0.0
  %v161 = vadd.f32 %v159, %v160
  %v162 = vsel %vm138, %v86, 0.0
  %v163 = vadd.f32 %v161, %v162
  %v164 = vsel %vm138, %v87, 0.0
  %v165 = vadd.f32 %v163, %v164
  %v166 = vsel %vm138, %v88, 0.0
  %v167 = vadd.f32 %v165, %v166
  %v168 = vsel %vm138, %v89, 0.0
  %v169 = vadd.f32 %v167, %v168
  %v170 = vsel %vm138, %v90, 0.0
  %v171 = vadd.f32 %v169, %v170
  %v172 = vsel %vm138, %v91, 0.0
  %v173 = vadd.f32 %v171, %v172
  %v174 = vsel %vm138, %v92, 0.0
  %v175 = vadd.f32 %v173, %v174
  %v176 = vsel %vm138, %v93, 0.0
  %v177 = vadd.f32 %v175, %v176
  %v178 = vsel %vm138, %v94, 0.0
  %v179 = vadd.f32 %v177, %v178
  %v180 = vsel %vm138, %v95, 0.0
  %v181 = vadd.f32 %v179, %v180
  %v182 = vsel %vm138, %v96, 0.0
  %v183 = vadd.f32 %v181, %v182
  %v184 = vsel %vm138, %v97, 0.0
  %v185 = vadd.f32 %v183, %v184
  %v186 = vsel %vm138, %v98, 0.0
  %v187 = vadd.f32 %v185, %v186
  %v188 = vsel %vm138, %v99, 0.0
  %v189 = vadd.f32 %v187, %v188
  %v190 = vsel %vm138, %v100, 0.0
  %v191 = vadd.f32 %v189, %v190
  %v192 = vsel %vm138, %v101, 0.0
  %v193 = vadd.f32 %v191, %v192
  %v194 = vsel %vm138, %v102, 0.0
  %v195 = vadd.f32 %v193, %v194
  %v196 = vsel %vm138, %v103, 0.0
  %v197 = vadd.f32 %v195, %v196
  %v198 = vsel %vm138, %v104, 0.0
  %v199 = vadd.f32 %v197, %v198
  %v200 = vsel %vm138, %v105, 0.0
  %v201 = vadd.f32 %v199, %v200
  %v202 = vsel %vm138, %v106, 0.0
  %v203 = vadd.f32 %v201, %v202
  %v204 = vsel %vm138, %v107, 0.0
  %v205 = vadd.f32 %v203, %v204
  %v206 = vsel %vm138, %v108, 0.0
  %v207 = vadd.f32 %v205, %v206
  %v208 = vsel %vm138, %v109, 0.0
  %v209 = vadd.f32 %v207, %v208
  %v210 = vsel %vm138, %v110, 0.0
  %v211 = vadd.f32 %v209, %v210
  %v212 = vsel %vm138, %v111, 0.0
  %v213 = vadd.f32 %v211, %v212
  %v214 = vsel %vm138, %v112, 0.0
  %v215 = vadd.f32 %v213, %v214
  %v216 = vsel %vm138, %v113, 0.0
  %v217 = vadd.f32 %v215, %v216
  %v218 = vsel %vm138, %v114, 0.0
  %v219 = vadd.f32 %v217, %v218
  %v220 = vsel %vm138, %v115, 0.0
  %v221 = vadd.f32 %v219, %v220
  %v222 = vsel %vm138, %v116, 0.0
  %v223 = vadd.f32 %v221, %v222
  %v224 = vsel %vm138, %v117, 0.0
  %v225 = vadd.f32 %v223, %v224
  %v226 = vsel %vm138, %v118, 0.0
  %v227 = vadd.f32 %v225, %v226
  %v228 = vsel %vm138, %v119, 0.0
  %v229 = vadd.f32 %v227, %v228
  %v230 = vsel %vm138, %v120, 0.0
  %v231 = vadd.f32 %v229, %v230
  %v232 = vsel %vm138, %v121, 0.0
  %v233 = vadd.f32 %v231, %v232
  %v234 = vsel %vm138, %v122, 0.0
  %v235 = vadd.f32 %v233, %v234
  %v236 = vsel %vm138, %v123, 0.0
  %v237 = vadd.f32 %v235, %v236
  %v238 = vsel %vm138, %v124, 0.0
  %v239 = vadd.f32 %v237, %v238
  %v240 = vsel %vm138, %v125, 0.0
  %v241 = vadd.f32 %v239, %v240
  %v242 = vsel %vm138, %v126, 0.0
  %v243 = vadd.f32 %v241, %v242
  %v244 = vsel %vm138, %v127, 0.0
  %v245 = vadd.f32 %v243, %v244
  %v246 = vsel %vm138, %v128, 0.0
  %v247 = vadd.f32 %v245, %v246
  %v248 = vsel %vm138, %v129, 0.0
  %v249 = vadd.f32 %v247, %v248
  %v250 = vsel %vm138, %v130, 0.0
  %v251 = vadd.f32 %v249, %v250
  %v252 = vsel %vm138, %v131, 0.0
  %v253 = vadd.f32 %v251, %v252
  %v254 = vsel %vm138, %v132, 0.0
  %v255 = vadd.f32 %v253, %v254
  %v256 = vsel %vm138, %v133, 0.0
  %v257 = vadd.f32 %v255, %v256
  %v258 = vsel %vm138, %v134, 0.0
  %v259 = vadd.f32 %v257, %v258
  %v260 = vsel %vm138, %v135, 0.0
  %v261 = vadd.f32 %v259, %v260
  %v262 = vsel %vm138, %v136, 0.0
  %v263 = vadd.f32 %v261, %v262
  %v264 = vsel %vm138, %v137, 0.0
  %v265 = vadd.f32 %v263, %v264
  %v266 = vrot.slane %v265, 4
  %v267 = vadd.f32 %v265, %v266
  %v268 = vrot.slane %v267, 2
  %v269 = vadd.f32 %v267, %v268
  %v270 = vrot.slane %v269, 1
  %v271 = vadd.f32 %v269, %v270
  %vm272 = vcmask 24576
  %273 = vst.msk [vmem:[%s1] sm:$0x1] %vm272, %v271
  %v274 = vmul.f32 %v74, %v74
  %v275 = vmul.f32 %v75, %v75
  %v276 = vmul.f32 %v76, %v76
  %v277 = vmul.f32 %v77, %v77
  %v278 = vmul.f32 %v78, %v78
  %v279 = vmul.f32 %v79, %v79
  %v280 = vmul.f32 %v80, %v80
  %v281 = vmul.f32 %v81, %v81
  %v282 = vmul.f32 %v82, %v82
  %v283 = vmul.f32 %v83, %v83
  %v284 = vmul.f32 %v84, %v84
  %v285 = vmul.f32 %v85, %v85
  %v286 = vmul.f32 %v86, %v86
  %v287 = vmul.f32 %v87, %v87
  %v288 = vmul.f32 %v88, %v88
  %v289 = vmul.f32 %v89, %v89
  %v290 = vmul.f32 %v90, %v90
  %v291 = vmul.f32 %v91, %v91
  %v292 = vmul.f32 %v92, %v92
  %v293 = vmul.f32 %v93, %v93
  %v294 = vmul.f32 %v94, %v94
  %v295 = vmul.f32 %v95, %v95
  %v296 = vmul.f32 %v96, %v96
  %v297 = vmul.f32 %v97, %v97
  %v298 = vmul.f32 %v98, %v98
  %v299 = vmul.f32 %v99, %v99
  %v300 = vmul.f32 %v100, %v100
  %v301 = vmul.f32 %v101, %v101
  %v302 = vmul.f32 %v102, %v102
  %v303 = vmul.f32 %v103, %v103
  %v304 = vmul.f32 %v104, %v104
  %v305 = vmul.f32 %v105, %v105
  %v306 = vmul.f32 %v106, %v106
  %v307 = vmul.f32 %v107, %v107
  %v308 = vmul.f32 %v108, %v108
  %v309 = vmul.f32 %v109, %v109
  %v310 = vmul.f32 %v110, %v110
  %v311 = vmul.f32 %v111, %v111
  %v312 = vmul.f32 %v112, %v112
  %v313 = vmul.f32 %v113, %v113
  %v314 = vmul.f32 %v114, %v114
  %v315 = vmul.f32 %v115, %v115
  %v316 = vmul.f32 %v116, %v116
  %v317 = vmul.f32 %v117, %v117
  %v318 = vmul.f32 %v118, %v118
  %v319 = vmul.f32 %v119, %v119
  %v320 = vmul.f32 %v120, %v120
  %v321 = vmul.f32 %v121, %v121
  %v322 = vmul.f32 %v122, %v122
  %v323 = vmul.f32 %v123, %v123
  %v324 = vmul.f32 %v124, %v124
  %v325 = vmul.f32 %v125, %v125
  %v326 = vmul.f32 %v126, %v126
  %v327 = vmul.f32 %v127, %v127
  %v328 = vmul.f32 %v128, %v128
  %v329 = vmul.f32 %v129, %v129
  %v330 = vmul.f32 %v130, %v130
  %v331 = vmul.f32 %v131, %v131
  %v332 = vmul.f32 %v132, %v132
  %v333 = vmul.f32 %v133, %v133
  %v334 = vmul.f32 %v134, %v134
  %v335 = vmul.f32 %v135, %v135
  %v336 = vmul.f32 %v136, %v136
  %v337 = vmul.f32 %v137, %v137
  %v338 = vsel %vm138, %v274, 0.0
  %v339 = vsel %vm138, %v275, 0.0
  %v340 = vadd.f32 %v338, %v339
  %v341 = vsel %vm138, %v276, 0.0
  %v342 = vadd.f32 %v340, %v341
  %v343 = vsel %vm138, %v277, 0.0
  %v344 = vadd.f32 %v342, %v343
  %v345 = vsel %vm138, %v278, 0.0
  %v346 = vadd.f32 %v344, %v345
  %v347 = vsel %vm138, %v279, 0.0
  %v348 = vadd.f32 %v346, %v347
  %v349 = vsel %vm138, %v280, 0.0
  %v350 = vadd.f32 %v348, %v349
  %v351 = vsel %vm138, %v281, 0.0
  %v352 = vadd.f32 %v350, %v351
  %v353 = vsel %vm138, %v282, 0.0
  %v354 = vadd.f32 %v352, %v353
  %v355 = vsel %vm138, %v283, 0.0
  %v356 = vadd.f32 %v354, %v355
  %v357 = vsel %vm138, %v284, 0.0
  %v358 = vadd.f32 %v356, %v357
  %v359 = vsel %vm138, %v285, 0.0
  %v360 = vadd.f32 %v358, %v359
  %v361 = vsel %vm138, %v286, 0.0
  %v362 = vadd.f32 %v360, %v361
  %v363 = vsel %vm138, %v287, 0.0
  %v364 = vadd.f32 %v362, %v363
  %v365 = vsel %vm138, %v288, 0.0
  %v366 = vadd.f32 %v364, %v365
  %v367 = vsel %vm138, %v289, 0.0
  %v368 = vadd.f32 %v366, %v367
  %v369 = vsel %vm138, %v290, 0.0
  %v370 = vadd.f32 %v368, %v369
  %v371 = vsel %vm138, %v291, 0.0
  %v372 = vadd.f32 %v370, %v371
  %v373 = vsel %vm138, %v292, 0.0
  %v374 = vadd.f32 %v372, %v373
  %v375 = vsel %vm138, %v293, 0.0
  %v376 = vadd.f32 %v374, %v375
  %v377 = vsel %vm138, %v294, 0.0
  %v378 = vadd.f32 %v376, %v377
  %v379 = vsel %vm138, %v295, 0.0
  %v380 = vadd.f32 %v378, %v379
  %v381 = vsel %vm138, %v296, 0.0
  %v382 = vadd.f32 %v380, %v381
  %v383 = vsel %vm138, %v297, 0.0
  %v384 = vadd.f32 %v382, %v383
  %v385 = vsel %vm138, %v298, 0.0
  %v386 = vadd.f32 %v384, %v385
  %v387 = vsel %vm138, %v299, 0.0
  %v388 = vadd.f32 %v386, %v387
  %v389 = vsel %vm138, %v300, 0.0
  %v390 = vadd.f32 %v388, %v389
  %v391 = vsel %vm138, %v301, 0.0
  %v392 = vadd.f32 %v390, %v391
  %v393 = vsel %vm138, %v302, 0.0
  %v394 = vadd.f32 %v392, %v393
  %v395 = vsel %vm138, %v303, 0.0
  %v396 = vadd.f32 %v394, %v395
  %v397 = vsel %vm138, %v304, 0.0
  %v398 = vadd.f32 %v396, %v397
  %v399 = vsel %vm138, %v305, 0.0
  %v400 = vadd.f32 %v398, %v399
  %v401 = vsel %vm138, %v306, 0.0
  %v402 = vadd.f32 %v400, %v401
  %v403 = vsel %vm138, %v307, 0.0
  %v404 = vadd.f32 %v402, %v403
  %v405 = vsel %vm138, %v308, 0.0
  %v406 = vadd.f32 %v404, %v405
  %v407 = vsel %vm138, %v309, 0.0
  %v408 = vadd.f32 %v406, %v407
  %v409 = vsel %vm138, %v310, 0.0
  %v410 = vadd.f32 %v408, %v409
  %v411 = vsel %vm138, %v311, 0.0
  %v412 = vadd.f32 %v410, %v411
  %v413 = vsel %vm138, %v312, 0.0
  %v414 = vadd.f32 %v412, %v413
  %v415 = vsel %vm138, %v313, 0.0
  %v416 = vadd.f32 %v414, %v415
  %v417 = vsel %vm138, %v314, 0.0
  %v418 = vadd.f32 %v416, %v417
  %v419 = vsel %vm138, %v315, 0.0
  %v420 = vadd.f32 %v418, %v419
  %v421 = vsel %vm138, %v316, 0.0
  %v422 = vadd.f32 %v420, %v421
  %v423 = vsel %vm138, %v317, 0.0
  %v424 = vadd.f32 %v422, %v423
  %v425 = vsel %vm138, %v318, 0.0
  %v426 = vadd.f32 %v424, %v425
  %v427 = vsel %vm138, %v319, 0.0
  %v428 = vadd.f32 %v426, %v427
  %v429 = vsel %vm138, %v320, 0.0
  %v430 = vadd.f32 %v428, %v429
  %v431 = vsel %vm138, %v321, 0.0
  %v432 = vadd.f32 %v430, %v431
  %v433 = vsel %vm138, %v322, 0.0
  %v434 = vadd.f32 %v432, %v433
  %v435 = vsel %vm138, %v323, 0.0
  %v436 = vadd.f32 %v434, %v435
  %v437 = vsel %vm138, %v324, 0.0
  %v438 = vadd.f32 %v436, %v437
  %v439 = vsel %vm138, %v325, 0.0
  %v440 = vadd.f32 %v438, %v439
  %v441 = vsel %vm138, %v326, 0.0
  %v442 = vadd.f32 %v440, %v441
  %v443 = vsel %vm138, %v327, 0.0
  %v444 = vadd.f32 %v442, %v443
  %v445 = vsel %vm138, %v328, 0.0
  %v446 = vadd.f32 %v444, %v445
  %v447 = vsel %vm138, %v329, 0.0
  %v448 = vadd.f32 %v446, %v447
  %v449 = vsel %vm138, %v330, 0.0
  %v450 = vadd.f32 %v448, %v449
  %v451 = vsel %vm138, %v331, 0.0
  %v452 = vadd.f32 %v450, %v451
  %v453 = vsel %vm138, %v332, 0.0
  %v454 = vadd.f32 %v452, %v453
  %v455 = vsel %vm138, %v333, 0.0
  %v456 = vadd.f32 %v454, %v455
  %v457 = vsel %vm138, %v334, 0.0
  %v458 = vadd.f32 %v456, %v457
  %v459 = vsel %vm138, %v335, 0.0
  %v460 = vadd.f32 %v458, %v459
  %v461 = vsel %vm138, %v336, 0.0
  %v462 = vadd.f32 %v460, %v461
  %v463 = vsel %vm138, %v337, 0.0
  %v464 = vadd.f32 %v462, %v463
  %v465 = vrot.slane %v464, 4
  %v466 = vadd.f32 %v464, %v465
  %v467 = vrot.slane %v466, 2
  %v468 = vadd.f32 %v466, %v467
  %v469 = vrot.slane %v468, 1
  %v470 = vadd.f32 %v468, %v469
  %471 = vst.msk [vmem:[%s2] sm:$0x1] %vm272, %v470
  // Predicated region
  $region6: #{preact_block_forward.4} parent=0 // pred_check
    _
  $region7: #{preact_block_forward.4} parent=0 // pred_check_branch
    %473 = sbr.rel (0) target = $region9
  $region8: #{preact_block_forward.4} parent=0 // pred_region
    _
  $region9: #{preact_block_forward.4} parent=0 // pred_fallthru
    _
  // Predicated region
  $region10: #{preact_block_forward.4} parent=0 // pred_check
    _
  $region11: #{preact_block_forward.4} parent=0 // pred_check_branch
    %475 = sbr.rel (0) target = $region13
  $region12: #{preact_block_forward.4} parent=0 // pred_region
    _
  $region13: #{preact_block_forward.4} parent=0 // pred_fallthru
    _
  // Predicated region
  $region14: #{preact_block_forward.4} parent=0 // pred_check
    _
  $region15: #{preact_block_forward.4} parent=0 // pred_check_branch
    %477 = sbr.rel (0) target = $region17
  $region16: #{preact_block_forward.4} parent=0 // pred_region
    _
  $region17: #{preact_block_forward.4} parent=0 // pred_fallthru
    _
  // Predicated region
  $region18: #{preact_block_forward.4} parent=0 // pred_check
    _
  $region19: #{preact_block_forward.4} parent=0 // pred_check_branch
    %479 = sbr.rel (0) target = $region21
  $region20: #{preact_block_forward.4} parent=0 // pred_region
    _
  $region21: #{preact_block_forward.4} parent=0 // pred_fallthru
    _

// kernel: preact_block_forward.5
$region0: #{preact_block_forward.5}
  #allocation0 [shape = 'u32[]', space=smem, size = 0x4, offset = 0x4, fixed_abs, tag = 'smem constant byte address 0x4 - core index']
  #allocation1 [shape = 'u32[144,128]{1,0:T(1,128)}', space=vmem, size = 0x12000, scoped, tag = 'internal scratch']
  %s0 = inlined_call_operand.vmem [shape: bf16[512,4], index: 0, kind: input, shape index: {}]
  %s1 = inlined_call_operand.vmem [shape: f32[1,4], index: 1, kind: input, shape index: {}]
  %s2 = inlined_call_operand.vmem [shape: f32[1,4], index: 2, kind: input, shape index: {}]
  %s3 = inlined_call_operand.vmem [shape: bf16[512,4], index: 3, kind: output, shape index: {}]
  %s4 = sld [smem:[#allocation0]]
  $region22: #{preact_block_forward.5} parent=0
    _
  %s6 = ssub.s32 1, %s4
  %s7 = scalar_select 0, %s6, %s4
  // Predicated region
  $region2: #{preact_block_forward.5} parent=0 // pred_check
    _
  $region3: #{preact_block_forward.5} parent=0 // pred_check_branch
    %9 = sbr.rel (0) target = $region5
  $region4: #{preact_block_forward.5} parent=0 // pred_region
    _
  $region5: #{preact_block_forward.5} parent=0 // pred_fallthru
    _
  // Predicated region
  $region6: #{preact_block_forward.5} parent=0 // pred_check
    _
  $region7: #{preact_block_forward.5} parent=0 // pred_check_branch
    %11 = sbr.rel (0) target = $region9
  $region8: #{preact_block_forward.5} parent=0 // pred_region
    _
  $region9: #{preact_block_forward.5} parent=0 // pred_fallthru
    _
  // Predicated region
  $region10: #{preact_block_forward.5} parent=0 // pred_check
    _
  $region11: #{preact_block_forward.5} parent=0 // pred_check_branch
    %13 = sbr.rel (0) target = $region13
  $region12: #{preact_block_forward.5} parent=0 // pred_region
    _
  $region13: #{preact_block_forward.5} parent=0 // pred_fallthru
    _
  %v14 = vld [vmem:[%s0] sm:$0xf]
  %v15 = vld [vmem:[%s0 + $0x4] sm:$0xf]
  %v16 = vld [vmem:[%s0 + $0x8] sm:$0xf]
  %v17 = vld [vmem:[%s0 + $0xc] sm:$0xf]
  %v18 = vld [vmem:[%s0 + $0x10] sm:$0xf]
  %v19 = vld [vmem:[%s0 + $0x14] sm:$0xf]
  %v20 = vld [vmem:[%s0 + $0x18] sm:$0xf]
  %v21 = vld [vmem:[%s0 + $0x1c] sm:$0xf]
  %v22 = vld [vmem:[%s0 + $0x20] sm:$0xf]
  %v23 = vld [vmem:[%s0 + $0x24] sm:$0xf]
  %v24 = vld [vmem:[%s0 + $0x28] sm:$0xf]
  %v25 = vld [vmem:[%s0 + $0x2c] sm:$0xf]
  %v26 = vld [vmem:[%s0 + $0x30] sm:$0xf]
  %v27 = vld [vmem:[%s0 + $0x34] sm:$0xf]
  %v28 = vld [vmem:[%s0 + $0x38] sm:$0xf]
  %v29 = vld [vmem:[%s0 + $0x3c] sm:$0xf]
  %v30 = vld [vmem:[%s0 + $0x40] sm:$0xf]
  %v31 = vld [vmem:[%s0 + $0x44] sm:$0xf]
  %v32 = vld [vmem:[%s0 + $0x48] sm:$0xf]
  %v33 = vld [vmem:[%s0 + $0x4c] sm:$0xf]
  %v34 = vld [vmem:[%s0 + $0x50] sm:$0xf]
  %v35 = vld [vmem:[%s0 + $0x54] sm:$0xf]
  %v36 = vld [vmem:[%s0 + $0x58] sm:$0xf]
  %v37 = vld [vmem:[%s0 + $0x5c] sm:$0xf]
  %v38 = vld [vmem:[%s0 + $0x60] sm:$0xf]
  %v39 = vld [vmem:[%s0 + $0x64] sm:$0xf]
  %v40 = vld [vmem:[%s0 + $0x68] sm:$0xf]
  %v41 = vld [vmem:[%s0 + $0x6c] sm:$0xf]
  %v42 = vld [vmem:[%s0 + $0x70] sm:$0xf]
  %v43 = vld [vmem:[%s0 + $0x74] sm:$0xf]
  %v44 = vld [vmem:[%s0 + $0x78] sm:$0xf]
  %v45 = vld [vmem:[%s0 + $0x7c] sm:$0xf]
  %v46 = vld [vmem:[%s0 + $0x80] sm:$0xf]
  %v47 = vld [vmem:[%s0 + $0x84] sm:$0xf]
  %v48 = vld [vmem:[%s0 + $0x88] sm:$0xf]
  %v49 = vld [vmem:[%s0 + $0x8c] sm:$0xf]
  %v50 = vld [vmem:[%s0 + $0x90] sm:$0xf]
  %v51 = vld [vmem:[%s0 + $0x94] sm:$0xf]
  %v52 = vld [vmem:[%s0 + $0x98] sm:$0xf]
  %v53 = vld [vmem:[%s0 + $0x9c] sm:$0xf]
  %v54 = vld [vmem:[%s0 + $0xa0] sm:$0xf]
  %v55 = vld [vmem:[%s0 + $0xa4] sm:$0xf]
  %v56 = vld [vmem:[%s0 + $0xa8] sm:$0xf]
  %v57 = vld [vmem:[%s0 + $0xac] sm:$0xf]
  %v58 = vld [vmem:[%s0 + $0xb0] sm:$0xf]
  %v59 = vld [vmem:[%s0 + $0xb4] sm:$0xf]
  %v60 = vld [vmem:[%s0 + $0xb8] sm:$0xf]
  %v61 = vld [vmem:[%s0 + $0xbc] sm:$0xf]
  %v62 = vld [vmem:[%s0 + $0xc0] sm:$0xf]
  %v63 = vld [vmem:[%s0 + $0xc4] sm:$0xf]
  %v64 = vld [vmem:[%s0 + $0xc8] sm:$0xf]
  %v65 = vld [vmem:[%s0 + $0xcc] sm:$0xf]
  %v66 = vld [vmem:[%s0 + $0xd0] sm:$0xf]
  %v67 = vld [vmem:[%s0 + $0xd4] sm:$0xf]
  %v68 = vld [vmem:[%s0 + $0xd8] sm:$0xf]
  %v69 = vld [vmem:[%s0 + $0xdc] sm:$0xf]
  %v70 = vld [vmem:[%s0 + $0xe0] sm:$0xf]
  %v71 = vld [vmem:[%s0 + $0xe4] sm:$0xf]
  %v72 = vld [vmem:[%s0 + $0xe8] sm:$0xf]
  %v73 = vld [vmem:[%s0 + $0xec] sm:$0xf]
  %v74 = vld [vmem:[%s0 + $0xf0] sm:$0xf]
  %v75 = vld [vmem:[%s0 + $0xf4] sm:$0xf]
  %v76 = vld [vmem:[%s0 + $0xf8] sm:$0xf]
  %v77 = vld [vmem:[%s0 + $0xfc] sm:$0xf]
  %v78 = vunpack.c.l.bf16 %v14
  %v79 = vunpack.c.l.bf16 %v15
  %v80 = vunpack.c.l.bf16 %v16
  %v81 = vunpack.c.l.bf16 %v17
  %v82 = vunpack.c.l.bf16 %v18
  %v83 = vunpack.c.l.bf16 %v19
  %v84 = vunpack.c.l.bf16 %v20
  %v85 = vunpack.c.l.bf16 %v21
  %v86 = vunpack.c.l.bf16 %v22
  %v87 = vunpack.c.l.bf16 %v23
  %v88 = vunpack.c.l.bf16 %v24
  %v89 = vunpack.c.l.bf16 %v25
  %v90 = vunpack.c.l.bf16 %v26
  %v91 = vunpack.c.l.bf16 %v27
  %v92 = vunpack.c.l.bf16 %v28
  %v93 = vunpack.c.l.bf16 %v29
  %v94 = vunpack.c.l.bf16 %v30
  %v95 = vunpack.c.l.bf16 %v31
  %v96 = vunpack.c.l.bf16 %v32
  %v97 = vunpack.c.l.bf16 %v33
  %v98 = vunpack.c.l.bf16 %v34
  %v99 = vunpack.c.l.bf16 %v35
  %v100 = vunpack.c.l.bf16 %v36
  %v101 = vunpack.c.l.bf16 %v37
  %v102 = vunpack.c.l.bf16 %v38
  %v103 = vunpack.c.l.bf16 %v39
  %v104 = vunpack.c.l.bf16 %v40
  %v105 = vunpack.c.l.bf16 %v41
  %v106 = vunpack.c.l.bf16 %v42
  %v107 = vunpack.c.l.bf16 %v43
  %v108 = vunpack.c.l.bf16 %v44
  %v109 = vunpack.c.l.bf16 %v45
  %v110 = vunpack.c.l.bf16 %v46
  %v111 = vunpack.c.l.bf16 %v47
  %v112 = vunpack.c.l.bf16 %v48
  %v113 = vunpack.c.l.bf16 %v49
  %v114 = vunpack.c.l.bf16 %v50
  %v115 = vunpack.c.l.bf16 %v51
  %v116 = vunpack.c.l.bf16 %v52
  %v117 = vunpack.c.l.bf16 %v53
  %v118 = vunpack.c.l.bf16 %v54
  %v119 = vunpack.c.l.bf16 %v55
  %v120 = vunpack.c.l.bf16 %v56
  %v121 = vunpack.c.l.bf16 %v57
  %v122 = vunpack.c.l.bf16 %v58
  %v123 = vunpack.c.l.bf16 %v59
  %v124 = vunpack.c.l.bf16 %v60
  %v125 = vunpack.c.l.bf16 %v61
  %v126 = vunpack.c.l.bf16 %v62
  %v127 = vunpack.c.l.bf16 %v63
  %v128 = vunpack.c.l.bf16 %v64
  %v129 = vunpack.c.l.bf16 %v65
  %v130 = vunpack.c.l.bf16 %v66
  %v131 = vunpack.c.l.bf16 %v67
  %v132 = vunpack.c.l.bf16 %v68
  %v133 = vunpack.c.l.bf16 %v69
  %v134 = vunpack.c.l.bf16 %v70
  %v135 = vunpack.c.l.bf16 %v71
  %v136 = vunpack.c.l.bf16 %v72
  %v137 = vunpack.c.l.bf16 %v73
  %v138 = vunpack.c.l.bf16 %v74
  %v139 = vunpack.c.l.bf16 %v75
  %v140 = vunpack.c.l.bf16 %v76
  %v141 = vunpack.c.l.bf16 %v77
  %v142 = vld [vmem:[%s1] sm:$0x1]
  %v144 = vlaneseq
  %v145 = vshrl.u32 %v144, 7
  %v146 = vsub.s32 0, %v145
  %v147 = vrot.slane %v142, %v146
  %v149 = vmul.f32 %v78, %v147
  %v150 = vmul.f32 %v79, %v147
  %v151 = vmul.f32 %v80, %v147
  %v152 = vmul.f32 %v81, %v147
  %v153 = vmul.f32 %v82, %v147
  %v154 = vmul.f32 %v83, %v147
  %v155 = vmul.f32 %v84, %v147
  %v156 = vmul.f32 %v85, %v147
  %v157 = vmul.f32 %v86, %v147
  %v158 = vmul.f32 %v87, %v147
  %v159 = vmul.f32 %v88, %v147
  %v160 = vmul.f32 %v89, %v147
  %v161 = vmul.f32 %v90, %v147
  %v162 = vmul.f32 %v91, %v147
  %v163 = vmul.f32 %v92, %v147
  %v164 = vmul.f32 %v93, %v147
  %v165 = vmul.f32 %v94, %v147
  %v166 = vmul.f32 %v95, %v147
  %v167 = vmul.f32 %v96, %v147
  %v168 = vmul.f32 %v97, %v147
  %v169 = vmul.f32 %v98, %v147
  %v170 = vmul.f32 %v99, %v147
  %v171 = vmul.f32 %v100, %v147
  %v172 = vmul.f32 %v101, %v147
  %v173 = vmul.f32 %v102, %v147
  %v174 = vmul.f32 %v103, %v147
  %v175 = vmul.f32 %v104, %v147
  %v176 = vmul.f32 %v105, %v147
  %v177 = vmul.f32 %v106, %v147
  %v178 = vmul.f32 %v107, %v147
  %v179 = vmul.f32 %v108, %v147
  %v180 = vmul.f32 %v109, %v147
  %v181 = vmul.f32 %v110, %v147
  %v182 = vmul.f32 %v111, %v147
  %v183 = vmul.f32 %v112, %v147
  %v184 = vmul.f32 %v113, %v147
  %v185 = vmul.f32 %v114, %v147
  %v186 = vmul.f32 %v115, %v147
  %v187 = vmul.f32 %v116, %v147
  %v188 = vmul.f32 %v117, %v147
  %v189 = vmul.f32 %v118, %v147
  %v190 = vmul.f32 %v119, %v147
  %v191 = vmul.f32 %v120, %v147
  %v192 = vmul.f32 %v121, %v147
  %v193 = vmul.f32 %v122, %v147
  %v194 = vmul.f32 %v123, %v147
  %v195 = vmul.f32 %v124, %v147
  %v196 = vmul.f32 %v125, %v147
  %v197 = vmul.f32 %v126, %v147
  %v198 = vmul.f32 %v127, %v147
  %v199 = vmul.f32 %v128, %v147
  %v200 = vmul.f32 %v129, %v147
  %v201 = vmul.f32 %v130, %v147
  %v202 = vmul.f32 %v131, %v147
  %v203 = vmul.f32 %v132, %v147
  %v204 = vmul.f32 %v133, %v147
  %v205 = vmul.f32 %v134, %v147
  %v206 = vmul.f32 %v135, %v147
  %v207 = vmul.f32 %v136, %v147
  %v208 = vmul.f32 %v137, %v147
  %v209 = vmul.f32 %v138, %v147
  %v210 = vmul.f32 %v139, %v147
  %v211 = vmul.f32 %v140, %v147
  %v212 = vmul.f32 %v141, %v147
  %v213 = vld [vmem:[%s2] sm:$0x1]
  %v215 = vlaneseq
  %v216 = vshrl.u32 %v215, 7
  %v217 = vsub.s32 0, %v216
  %v218 = vrot.slane %v213, %v217
  %v220 = vadd.f32 %v149, %v218
  %v221 = vadd.f32 %v150, %v218
  %v222 = vadd.f32 %v151, %v218
  %v223 = vadd.f32 %v152, %v218
  %v224 = vadd.f32 %v153, %v218
  %v225 = vadd.f32 %v154, %v218
  %v226 = vadd.f32 %v155, %v218
  %v227 = vadd.f32 %v156, %v218
  %v228 = vadd.f32 %v157, %v218
  %v229 = vadd.f32 %v158, %v218
  %v230 = vadd.f32 %v159, %v218
  %v231 = vadd.f32 %v160, %v218
  %v232 = vadd.f32 %v161, %v218
  %v233 = vadd.f32 %v162, %v218
  %v234 = vadd.f32 %v163, %v218
  %v235 = vadd.f32 %v164, %v218
  %v236 = vadd.f32 %v165, %v218
  %v237 = vadd.f32 %v166, %v218
  %v238 = vadd.f32 %v167, %v218
  %v239 = vadd.f32 %v168, %v218
  %v240 = vadd.f32 %v169, %v218
  %v241 = vadd.f32 %v170, %v218
  %v242 = vadd.f32 %v171, %v218
  %v243 = vadd.f32 %v172, %v218
  %v244 = vadd.f32 %v173, %v218
  %v245 = vadd.f32 %v174, %v218
  %v246 = vadd.f32 %v175, %v218
  %v247 = vadd.f32 %v176, %v218
  %v248 = vadd.f32 %v177, %v218
  %v249 = vadd.f32 %v178, %v218
  %v250 = vadd.f32 %v179, %v218
  %v251 = vadd.f32 %v180, %v218
  %v252 = vadd.f32 %v181, %v218
  %v253 = vadd.f32 %v182, %v218
  %v254 = vadd.f32 %v183, %v218
  %v255 = vadd.f32 %v184, %v218
  %v256 = vadd.f32 %v185, %v218
  %v257 = vadd.f32 %v186, %v218
  %v258 = vadd.f32 %v187, %v218
  %v259 = vadd.f32 %v188, %v218
  %v260 = vadd.f32 %v189, %v218
  %v261 = vadd.f32 %v190, %v218
  %v262 = vadd.f32 %v191, %v218
  %v263 = vadd.f32 %v192, %v218
  %v264 = vadd.f32 %v193, %v218
  %v265 = vadd.f32 %v194, %v218
  %v266 = vadd.f32 %v195, %v218
  %v267 = vadd.f32 %v196, %v218
  %v268 = vadd.f32 %v197, %v218
  %v269 = vadd.f32 %v198, %v218
  %v270 = vadd.f32 %v199, %v218
  %v271 = vadd.f32 %v200, %v218
  %v272 = vadd.f32 %v201, %v218
  %v273 = vadd.f32 %v202, %v218
  %v274 = vadd.f32 %v203, %v218
  %v275 = vadd.f32 %v204, %v218
  %v276 = vadd.f32 %v205, %v218
  %v277 = vadd.f32 %v206, %v218
  %v278 = vadd.f32 %v207, %v218
  %v279 = vadd.f32 %v208, %v218
  %v280 = vadd.f32 %v209, %v218
  %v281 = vadd.f32 %v210, %v218
  %v282 = vadd.f32 %v211, %v218
  %v283 = vadd.f32 %v212, %v218
  %v284 = vmax.f32 %v220, 0.0
  %v285 = vmax.f32 %v221, 0.0
  %v286 = vmax.f32 %v222, 0.0
  %v287 = vmax.f32 %v223, 0.0
  %v288 = vmax.f32 %v224, 0.0
  %v289 = vmax.f32 %v225, 0.0
  %v290 = vmax.f32 %v226, 0.0
  %v291 = vmax.f32 %v227, 0.0
  %v292 = vmax.f32 %v228, 0.0
  %v293 = vmax.f32 %v229, 0.0
  %v294 = vmax.f32 %v230, 0.0
  %v295 = vmax.f32 %v231, 0.0
  %v296 = vmax.f32 %v232, 0.0
  %v297 = vmax.f32 %v233, 0.0
  %v298 = vmax.f32 %v234, 0.0
  %v299 = vmax.f32 %v235, 0.0
  %v300 = vmax.f32 %v236, 0.0
  %v301 = vmax.f32 %v237, 0.0
  %v302 = vmax.f32 %v238, 0.0
  %v303 = vmax.f32 %v239, 0.0
  %v304 = vmax.f32 %v240, 0.0
  %v305 = vmax.f32 %v241, 0.0
  %v306 = vmax.f32 %v242, 0.0
  %v307 = vmax.f32 %v243, 0.0
  %v308 = vmax.f32 %v244, 0.0
  %v309 = vmax.f32 %v245, 0.0
  %v310 = vmax.f32 %v246, 0.0
  %v311 = vmax.f32 %v247, 0.0
  %v312 = vmax.f32 %v248, 0.0
  %v313 = vmax.f32 %v249, 0.0
  %v314 = vmax.f32 %v250, 0.0
  %v315 = vmax.f32 %v251, 0.0
  %v316 = vmax.f32 %v252, 0.0
  %v317 = vmax.f32 %v253, 0.0
  %v318 = vmax.f32 %v254, 0.0
  %v319 = vmax.f32 %v255, 0.0
  %v320 = vmax.f32 %v256, 0.0
  %v321 = vmax.f32 %v257, 0.0
  %v322 = vmax.f32 %v258, 0.0
  %v323 = vmax.f32 %v259, 0.0
  %v324 = vmax.f32 %v260, 0.0
  %v325 = vmax.f32 %v261, 0.0
  %v326 = vmax.f32 %v262, 0.0
  %v327 = vmax.f32 %v263, 0.0
  %v328 = vmax.f32 %v264, 0.0
  %v329 = vmax.f32 %v265, 0.0
  %v330 = vmax.f32 %v266, 0.0
  %v331 = vmax.f32 %v267, 0.0
  %v332 = vmax.f32 %v268, 0.0
  %v333 = vmax.f32 %v269, 0.0
  %v334 = vmax.f32 %v270, 0.0
  %v335 = vmax.f32 %v271, 0.0
  %v336 = vmax.f32 %v272, 0.0
  %v337 = vmax.f32 %v273, 0.0
  %v338 = vmax.f32 %v274, 0.0
  %v339 = vmax.f32 %v275, 0.0
  %v340 = vmax.f32 %v276, 0.0
  %v341 = vmax.f32 %v277, 0.0
  %v342 = vmax.f32 %v278, 0.0
  %v343 = vmax.f32 %v279, 0.0
  %v344 = vmax.f32 %v280, 0.0
  %v345 = vmax.f32 %v281, 0.0
  %v346 = vmax.f32 %v282, 0.0
  %v347 = vmax.f32 %v283, 0.0
  %v348 = vpack.c.bf16 %v285, %v284
  %v349 = vpack.c.bf16 %v287, %v286
  %v350 = vpack.c.bf16 %v289, %v288
  %v351 = vpack.c.bf16 %v291, %v290
  %v352 = vpack.c.bf16 %v293, %v292
  %v353 = vpack.c.bf16 %v295, %v294
  %v354 = vpack.c.bf16 %v297, %v296
  %v355 = vpack.c.bf16 %v299, %v298
  %v356 = vpack.c.bf16 %v301, %v300
  %v357 = vpack.c.bf16 %v303, %v302
  %v358 = vpack.c.bf16 %v305, %v304
  %v359 = vpack.c.bf16 %v307, %v306
  %v360 = vpack.c.bf16 %v309, %v308
  %v361 = vpack.c.bf16 %v311, %v310
  %v362 = vpack.c.bf16 %v313, %v312
  %v363 = vpack.c.bf16 %v315, %v314
  %v364 = vpack.c.bf16 %v317, %v316
  %v365 = vpack.c.bf16 %v319, %v318
  %v366 = vpack.c.bf16 %v321, %v320
  %v367 = vpack.c.bf16 %v323, %v322
  %v368 = vpack.c.bf16 %v325, %v324
  %v369 = vpack.c.bf16 %v327, %v326
  %v370 = vpack.c.bf16 %v329, %v328
  %v371 = vpack.c.bf16 %v331, %v330
  %v372 = vpack.c.bf16 %v333, %v332
  %v373 = vpack.c.bf16 %v335, %v334
  %v374 = vpack.c.bf16 %v337, %v336
  %v375 = vpack.c.bf16 %v339, %v338
  %v376 = vpack.c.bf16 %v341, %v340
  %v377 = vpack.c.bf16 %v343, %v342
  %v378 = vpack.c.bf16 %v345, %v344
  %v379 = vpack.c.bf16 %v347, %v346
  %v412 = vunpack.c.l.b16 %v348
  %v413 = vunpack.c.h.b16 %v348
  %v414 = vunpack.c.l.b16 %v349
  %v415 = vunpack.c.h.b16 %v349
  %v416 = vunpack.c.l.b16 %v350
  %v417 = vunpack.c.h.b16 %v350
  %v418 = vunpack.c.l.b16 %v351
  %v419 = vunpack.c.h.b16 %v351
  %v420 = vunpack.c.l.b16 %v352
  %v421 = vunpack.c.h.b16 %v352
  %v422 = vunpack.c.l.b16 %v353
  %v423 = vunpack.c.h.b16 %v353
  %v424 = vunpack.c.l.b16 %v354
  %v425 = vunpack.c.h.b16 %v354
  %v426 = vunpack.c.l.b16 %v355
  %v427 = vunpack.c.h.b16 %v355
  %v428 = vunpack.c.l.b16 %v356
  %v429 = vunpack.c.h.b16 %v356
  %v430 = vunpack.c.l.b16 %v357
  %v431 = vunpack.c.h.b16 %v357
  %v432 = vunpack.c.l.b16 %v358
  %v433 = vunpack.c.h.b16 %v358
  %v434 = vunpack.c.l.b16 %v359
  %v435 = vunpack.c.h.b16 %v359
  %v436 = vunpack.c.l.b16 %v360
  %v437 = vunpack.c.h.b16 %v360
  %v438 = vunpack.c.l.b16 %v361
  %v439 = vunpack.c.h.b16 %v361
  %v440 = vunpack.c.l.b16 %v362
  %v441 = vunpack.c.h.b16 %v362
  %v442 = vunpack.c.l.b16 %v363
  %v443 = vunpack.c.h.b16 %v363
  %v444 = vunpack.c.l.b16 %v364
  %v445 = vunpack.c.h.b16 %v364
  %v446 = vunpack.c.l.b16 %v365
  %v447 = vunpack.c.h.b16 %v365
  %v448 = vunpack.c.l.b16 %v366
  %v449 = vunpack.c.h.b16 %v366
  %v450 = vunpack.c.l.b16 %v367
  %v451 = vunpack.c.h.b16 %v367
  %v452 = vunpack.c.l.b16 %v368
  %v453 = vunpack.c.h.b16 %v368
  %v454 = vunpack.c.l.b16 %v369
  %v455 = vunpack.c.h.b16 %v369
  %v456 = vunpack.c.l.b16 %v370
  %v457 = vunpack.c.h.b16 %v370
  %v458 = vunpack.c.l.b16 %v371
  %v459 = vunpack.c.h.b16 %v371
  %v460 = vunpack.c.l.b16 %v372
  %v461 = vunpack.c.h.b16 %v372
  %v462 = vunpack.c.l.b16 %v373
  %v463 = vunpack.c.h.b16 %v373
  %v464 = vunpack.c.l.b16 %v374
  %v465 = vunpack.c.h.b16 %v374
  %v466 = vunpack.c.l.b16 %v375
  %v467 = vunpack.c.h.b16 %v375
  %v468 = vunpack.c.l.b16 %v376
  %v469 = vunpack.c.h.b16 %v376
  %v470 = vunpack.c.l.b16 %v377
  %v471 = vunpack.c.h.b16 %v377
  %v472 = vunpack.c.l.b16 %v378
  %v473 = vunpack.c.h.b16 %v378
  %v474 = vunpack.c.l.b16 %v379
  %v475 = vunpack.c.h.b16 %v379
  %v476 = vpack.c.b16 %v412, %v412
  %v477 = vpack.c.b16 %v413, %v413
  %v478 = vpack.c.b16 %v414, %v414
  %v479 = vpack.c.b16 %v415, %v415
  %v480 = vpack.c.b16 %v416, %v416
  %v481 = vpack.c.b16 %v417, %v417
  %v482 = vpack.c.b16 %v418, %v418
  %v483 = vpack.c.b16 %v419, %v419
  %v484 = vpack.c.b16 %v420, %v420
  %v485 = vpack.c.b16 %v421, %v421
  %v486 = vpack.c.b16 %v422, %v422
  %v487 = vpack.c.b16 %v423, %v423
  %v488 = vpack.c.b16 %v424, %v424
  %v489 = vpack.c.b16 %v425, %v425
  %v490 = vpack.c.b16 %v426, %v426
  %v491 = vpack.c.b16 %v427, %v427
  %v492 = vpack.c.b16 %v428, %v428
  %v493 = vpack.c.b16 %v429, %v429
  %v494 = vpack.c.b16 %v430, %v430
  %v495 = vpack.c.b16 %v431, %v431
  %v496 = vpack.c.b16 %v432, %v432
  %v497 = vpack.c.b16 %v433, %v433
  %v498 = vpack.c.b16 %v434, %v434
  %v499 = vpack.c.b16 %v435, %v435
  %v500 = vpack.c.b16 %v436, %v436
  %v501 = vpack.c.b16 %v437, %v437
  %v502 = vpack.c.b16 %v438, %v438
  %v503 = vpack.c.b16 %v439, %v439
  %v504 = vpack.c.b16 %v440, %v440
  %v505 = vpack.c.b16 %v441, %v441
  %v506 = vpack.c.b16 %v442, %v442
  %v507 = vpack.c.b16 %v443, %v443
  %v508 = vpack.c.b16 %v444, %v444
  %v509 = vpack.c.b16 %v445, %v445
  %v510 = vpack.c.b16 %v446, %v446
  %v511 = vpack.c.b16 %v447, %v447
  %v512 = vpack.c.b16 %v448, %v448
  %v513 = vpack.c.b16 %v449, %v449
  %v514 = vpack.c.b16 %v450, %v450
  %v515 = vpack.c.b16 %v451, %v451
  %v516 = vpack.c.b16 %v452, %v452
  %v517 = vpack.c.b16 %v453, %v453
  %v518 = vpack.c.b16 %v454, %v454
  %v519 = vpack.c.b16 %v455, %v455
  %v520 = vpack.c.b16 %v456, %v456
  %v521 = vpack.c.b16 %v457, %v457
  %v522 = vpack.c.b16 %v458, %v458
  %v523 = vpack.c.b16 %v459, %v459
  %v524 = vpack.c.b16 %v460, %v460
  %v525 = vpack.c.b16 %v461, %v461
  %v526 = vpack.c.b16 %v462, %v462
  %v527 = vpack.c.b16 %v463, %v463
  %v528 = vpack.c.b16 %v464, %v464
  %v529 = vpack.c.b16 %v465, %v465
  %v530 = vpack.c.b16 %v466, %v466
  %v531 = vpack.c.b16 %v467, %v467
  %v532 = vpack.c.b16 %v468, %v468
  %v533 = vpack.c.b16 %v469, %v469
  %v534 = vpack.c.b16 %v470, %v470
  %v535 = vpack.c.b16 %v471, %v471
  %v536 = vpack.c.b16 %v472, %v472
  %v537 = vpack.c.b16 %v473, %v473
  %v538 = vpack.c.b16 %v474, %v474
  %v539 = vpack.c.b16 %v475, %v475
  %vm604 = vcmask 27648
  %605 = vst.msk [vmem:[%s3] sm:$0xf] %vm604, %v476
  %606 = vst.msk [vmem:[%s3 + $0x4] sm:$0xf] %vm604, %v477
  %607 = vst.msk [vmem:[%s3 + $0x8] sm:$0xf] %vm604, %v478
  %608 = vst.msk [vmem:[%s3 + $0xc] sm:$0xf] %vm604, %v479
  %609 = vst.msk [vmem:[%s3 + $0x10] sm:$0xf] %vm604, %v480
  %610 = vst.msk [vmem:[%s3 + $0x14] sm:$0xf] %vm604, %v481
  %611 = vst.msk [vmem:[%s3 + $0x18] sm:$0xf] %vm604, %v482
  %612 = vst.msk [vmem:[%s3 + $0x1c] sm:$0xf] %vm604, %v483
  %613 = vst.msk [vmem:[%s3 + $0x20] sm:$0xf] %vm604, %v484
  %614 = vst.msk [vmem:[%s3 + $0x24] sm:$0xf] %vm604, %v485
  %615 = vst.msk [vmem:[%s3 + $0x28] sm:$0xf] %vm604, %v486
  %616 = vst.msk [vmem:[%s3 + $0x2c] sm:$0xf] %vm604, %v487
  %617 = vst.msk [vmem:[%s3 + $0x30] sm:$0xf] %vm604, %v488
  %618 = vst.msk [vmem:[%s3 + $0x34] sm:$0xf] %vm604, %v489
  %619 = vst.msk [vmem:[%s3 + $0x38] sm:$0xf] %vm604, %v490
  %620 = vst.msk [vmem:[%s3 + $0x3c] sm:$0xf] %vm604, %v491
  %621 = vst.msk [vmem:[%s3 + $0x40] sm:$0xf] %vm604, %v492
  %622 = vst.msk [vmem:[%s3 + $0x44] sm:$0xf] %vm604, %v493
  %623 = vst.msk [vmem:[%s3 + $0x48] sm:$0xf] %vm604, %v494
  %624 = vst.msk [vmem:[%s3 + $0x4c] sm:$0xf] %vm604, %v495
  %625 = vst.msk [vmem:[%s3 + $0x50] sm:$0xf] %vm604, %v496
  %626 = vst.msk [vmem:[%s3 + $0x54] sm:$0xf] %vm604, %v497
  %627 = vst.msk [vmem:[%s3 + $0x58] sm:$0xf] %vm604, %v498
  %628 = vst.msk [vmem:[%s3 + $0x5c] sm:$0xf] %vm604, %v499
  %629 = vst.msk [vmem:[%s3 + $0x60] sm:$0xf] %vm604, %v500
  %630 = vst.msk [vmem:[%s3 + $0x64] sm:$0xf] %vm604, %v501
  %631 = vst.msk [vmem:[%s3 + $0x68] sm:$0xf] %vm604, %v502
  %632 = vst.msk [vmem:[%s3 + $0x6c] sm:$0xf] %vm604, %v503
  %633 = vst.msk [vmem:[%s3 + $0x70] sm:$0xf] %vm604, %v504
  %634 = vst.msk [vmem:[%s3 + $0x74] sm:$0xf] %vm604, %v505
  %635 = vst.msk [vmem:[%s3 + $0x78] sm:$0xf] %vm604, %v506
  %636 = vst.msk [vmem:[%s3 + $0x7c] sm:$0xf] %vm604, %v507
  %637 = vst.msk [vmem:[%s3 + $0x80] sm:$0xf] %vm604, %v508
  %638 = vst.msk [vmem:[%s3 + $0x84] sm:$0xf] %vm604, %v509
  %639 = vst.msk [vmem:[%s3 + $0x88] sm:$0xf] %vm604, %v510
  %640 = vst.msk [vmem:[%s3 + $0x8c] sm:$0xf] %vm604, %v511
  %641 = vst.msk [vmem:[%s3 + $0x90] sm:$0xf] %vm604, %v512
  %642 = vst.msk [vmem:[%s3 + $0x94] sm:$0xf] %vm604, %v513
  %643 = vst.msk [vmem:[%s3 + $0x98] sm:$0xf] %vm604, %v514
  %644 = vst.msk [vmem:[%s3 + $0x9c] sm:$0xf] %vm604, %v515
  %645 = vst.msk [vmem:[%s3 + $0xa0] sm:$0xf] %vm604, %v516
  %646 = vst.msk [vmem:[%s3 + $0xa4] sm:$0xf] %vm604, %v517
  %647 = vst.msk [vmem:[%s3 + $0xa8] sm:$0xf] %vm604, %v518
  %648 = vst.msk [vmem:[%s3 + $0xac] sm:$0xf] %vm604, %v519
  %649 = vst.msk [vmem:[%s3 + $0xb0] sm:$0xf] %vm604, %v520
  %650 = vst.msk [vmem:[%s3 + $0xb4] sm:$0xf] %vm604, %v521
  %651 = vst.msk [vmem:[%s3 + $0xb8] sm:$0xf] %vm604, %v522
  %652 = vst.msk [vmem:[%s3 + $0xbc] sm:$0xf] %vm604, %v523
  %653 = vst.msk [vmem:[%s3 + $0xc0] sm:$0xf] %vm604, %v524
  %654 = vst.msk [vmem:[%s3 + $0xc4] sm:$0xf] %vm604, %v525
  %655 = vst.msk [vmem:[%s3 + $0xc8] sm:$0xf] %vm604, %v526
  %656 = vst.msk [vmem:[%s3 + $0xcc] sm:$0xf] %vm604, %v527
  %657 = vst.msk [vmem:[%s3 + $0xd0] sm:$0xf] %vm604, %v528
  %658 = vst.msk [vmem:[%s3 + $0xd4] sm:$0xf] %vm604, %v529
  %659 = vst.msk [vmem:[%s3 + $0xd8] sm:$0xf] %vm604, %v530
  %660 = vst.msk [vmem:[%s3 + $0xdc] sm:$0xf] %vm604, %v531
  %661 = vst.msk [vmem:[%s3 + $0xe0] sm:$0xf] %vm604, %v532
  %662 = vst.msk [vmem:[%s3 + $0xe4] sm:$0xf] %vm604, %v533
  %663 = vst.msk [vmem:[%s3 + $0xe8] sm:$0xf] %vm604, %v534
  %664 = vst.msk [vmem:[%s3 + $0xec] sm:$0xf] %vm604, %v535
  %665 = vst.msk [vmem:[%s3 + $0xf0] sm:$0xf] %vm604, %v536
  %666 = vst.msk [vmem:[%s3 + $0xf4] sm:$0xf] %vm604, %v537
  %667 = vst.msk [vmem:[%s3 + $0xf8] sm:$0xf] %vm604, %v538
  %668 = vst.msk [vmem:[%s3 + $0xfc] sm:$0xf] %vm604, %v539
  // Predicated region
  $region14: #{preact_block_forward.5} parent=0 // pred_check
    _
  $region15: #{preact_block_forward.5} parent=0 // pred_check_branch
    %670 = sbr.rel (0) target = $region17
  $region16: #{preact_block_forward.5} parent=0 // pred_region
    _
  $region17: #{preact_block_forward.5} parent=0 // pred_fallthru
    _
  // Predicated region
  $region18: #{preact_block_forward.5} parent=0 // pred_check
    _
  $region19: #{preact_block_forward.5} parent=0 // pred_check_branch
    %672 = sbr.rel (0) target = $region21
  $region20: #{preact_block_forward.5} parent=0 // pred_region
    _
  $region21: #{preact_block_forward.5} parent=0 // pred_fallthru
    _

// kernel: preact_block_forward.6
$region0: #{preact_block_forward.6}
  #allocation0 [shape = 'u32[]', space=smem, size = 0x4, offset = 0x4, fixed_abs, tag = 'smem constant byte address 0x4 - core index']
  #allocation1 [shape = 'u32[144,128]{1,0:T(1,128)}', space=vmem, size = 0x12000, scoped, tag = 'internal scratch']
  #allocation2 [shape = 'f32[128,128]{1,0:T(8,128)}', space=vmem, size = 0x10000, scoped, tag = 'scratch operand']
  %s0 = inlined_call_operand.vmem [shape: bf16[128,36], index: 0, kind: input, shape index: {}]
  %s1 = inlined_call_operand.vmem [shape: bf16[36,128], index: 1, kind: input, shape index: {}]
  %s2 = inlined_call_operand.vmem [shape: bf16[128,128], index: 2, kind: output, shape index: {0}]
  %s3 = inlined_call_operand.vmem [shape: f32[1,1,128], index: 3, kind: output, shape index: {1}]
  %s4 = inlined_call_operand.vmem [shape: f32[1,1,128], index: 4, kind: output, shape index: {2}]
  %5 = xla_tuple %s2, %s3, %s4
  %s6 = sld [smem:[#allocation0]]
  $region42: #{preact_block_forward.6} parent=0
    _
  %s8 = ssub.s32 1, %s6
  %s9 = scalar_select 0, %s8, %s6
  // Predicated region
  $region2: #{preact_block_forward.6} parent=0 // pred_check
    _
  $region3: #{preact_block_forward.6} parent=0 // pred_check_branch
    %11 = sbr.rel (0) target = $region5
  $region4: #{preact_block_forward.6} parent=0 // pred_region
    _
  $region5: #{preact_block_forward.6} parent=0 // pred_fallthru
    _
  // Predicated region
  $region6: #{preact_block_forward.6} parent=0 // pred_check
    _
  $region7: #{preact_block_forward.6} parent=0 // pred_check_branch
    %13 = sbr.rel (0) target = $region9
  $region8: #{preact_block_forward.6} parent=0 // pred_region
    _
  $region9: #{preact_block_forward.6} parent=0 // pred_fallthru
    _
  %p15 = scmp.eq.s32.totalorder 0, 0
  // Predicated region
  $region10: #{preact_block_forward.6} parent=0 // pred_check
    %p16 = pneg %p15
  $region11: #{preact_block_forward.6} parent=0 // pred_check_branch
    %18 = sbr.rel (%p16) target = $region13
  $region12: #{preact_block_forward.6} parent=0 // pred_region
    %19 = vst [vmem:[#allocation2] sm:$0xff] 0.0
    %20 = vst [vmem:[#allocation2 + $0x8] sm:$0xff] 0.0
    %21 = vst [vmem:[#allocation2 + $0x10] sm:$0xff] 0.0
    %22 = vst [vmem:[#allocation2 + $0x18] sm:$0xff] 0.0
    %23 = vst [vmem:[#allocation2 + $0x20] sm:$0xff] 0.0
    %24 = vst [vmem:[#allocation2 + $0x28] sm:$0xff] 0.0
    %25 = vst [vmem:[#allocation2 + $0x30] sm:$0xff] 0.0
    %26 = vst [vmem:[#allocation2 + $0x38] sm:$0xff] 0.0
    %27 = vst [vmem:[#allocation2 + $0x40] sm:$0xff] 0.0
    %28 = vst [vmem:[#allocation2 + $0x48] sm:$0xff] 0.0
    %29 = vst [vmem:[#allocation2 + $0x50] sm:$0xff] 0.0
    %30 = vst [vmem:[#allocation2 + $0x58] sm:$0xff] 0.0
    %31 = vst [vmem:[#allocation2 + $0x60] sm:$0xff] 0.0
    %32 = vst [vmem:[#allocation2 + $0x68] sm:$0xff] 0.0
    %33 = vst [vmem:[#allocation2 + $0x70] sm:$0xff] 0.0
    %34 = vst [vmem:[#allocation2 + $0x78] sm:$0xff] 0.0
  $region13: #{preact_block_forward.6} parent=0 // pred_fallthru
    _
  %v35 = vld [vmem:[#allocation2] sm:$0xff]
  %v36 = vld [vmem:[#allocation2 + $0x8] sm:$0xff]
  %v37 = vld [vmem:[#allocation2 + $0x10] sm:$0xff]
  %v38 = vld [vmem:[#allocation2 + $0x18] sm:$0xff]
  %v39 = vld [vmem:[#allocation2 + $0x20] sm:$0xff]
  %v40 = vld [vmem:[#allocation2 + $0x28] sm:$0xff]
  %v41 = vld [vmem:[#allocation2 + $0x30] sm:$0xff]
  %v42 = vld [vmem:[#allocation2 + $0x38] sm:$0xff]
  %v43 = vld [vmem:[#allocation2 + $0x40] sm:$0xff]
  %v44 = vld [vmem:[#allocation2 + $0x48] sm:$0xff]
  %v45 = vld [vmem:[#allocation2 + $0x50] sm:$0xff]
  %v46 = vld [vmem:[#allocation2 + $0x58] sm:$0xff]
  %v47 = vld [vmem:[#allocation2 + $0x60] sm:$0xff]
  %v48 = vld [vmem:[#allocation2 + $0x68] sm:$0xff]
  %v49 = vld [vmem:[#allocation2 + $0x70] sm:$0xff]
  %v50 = vld [vmem:[#allocation2 + $0x78] sm:$0xff]
  %v51 = vld [vmem:[%s0] sm:$0xf]
  %v52 = vld [vmem:[%s0 + $0x4] sm:$0xf]
  %v53 = vld [vmem:[%s0 + $0x8] sm:$0xf]
  %v54 = vld [vmem:[%s0 + $0xc] sm:$0xf]
  %v55 = vld [vmem:[%s0 + $0x10] sm:$0xf]
  %v56 = vld [vmem:[%s0 + $0x14] sm:$0xf]
  %v57 = vld [vmem:[%s0 + $0x18] sm:$0xf]
  %v58 = vld [vmem:[%s0 + $0x1c] sm:$0xf]
  %v59 = vld [vmem:[%s0 + $0x20] sm:$0xf]
  %v60 = vld [vmem:[%s0 + $0x24] sm:$0xf]
  %v61 = vld [vmem:[%s0 + $0x28] sm:$0xf]
  %v62 = vld [vmem:[%s0 + $0x2c] sm:$0xf]
  %v63 = vld [vmem:[%s0 + $0x30] sm:$0xf]
  %v64 = vld [vmem:[%s0 + $0x34] sm:$0xf]
  %v65 = vld [vmem:[%s0 + $0x38] sm:$0xf]
  %v66 = vld [vmem:[%s0 + $0x3c] sm:$0xf]
  %v67 = vld [vmem:[%s1] sm:$0xf]
  %v68 = vld [vmem:[%s1 + $0x4] sm:$0xf]
  %v69 = vld [vmem:[%s1 + $0x8] sm:$0xf]
  %v70 = vld [vmem:[%s1 + $0xc] sm:$0xf]
  %v71 = vld [vmem:[%s1 + $0x10] sm:$0x3]
  %v88 = vunpack.c.l.b16 %v51
  %v89 = vunpack.c.l.b16 %v52
  %v90 = vunpack.c.l.b16 %v53
  %v91 = vunpack.c.l.b16 %v54
  %v92 = vunpack.c.l.b16 %v55
  %v93 = vunpack.c.l.b16 %v56
  %v94 = vunpack.c.l.b16 %v57
  %v95 = vunpack.c.l.b16 %v58
  %v96 = vunpack.c.l.b16 %v59
  %v97 = vunpack.c.l.b16 %v60
  %v98 = vunpack.c.l.b16 %v61
  %v99 = vunpack.c.l.b16 %v62
  %v100 = vunpack.c.l.b16 %v63
  %v101 = vunpack.c.l.b16 %v64
  %v102 = vunpack.c.l.b16 %v65
  %v103 = vunpack.c.l.b16 %v66
  %v104 = vpack.c.b16 %v89, %v88
  %v105 = vpack.c.b16 %v91, %v90
  %v106 = vpack.c.b16 %v93, %v92
  %v107 = vpack.c.b16 %v95, %v94
  %v108 = vpack.c.b16 %v97, %v96
  %v109 = vpack.c.b16 %v99, %v98
  %v110 = vpack.c.b16 %v101, %v100
  %v111 = vpack.c.b16 %v103, %v102
  %v117 = vunpack.c.l.b16 %v67
  %v118 = vunpack.c.l.b16 %v68
  %v119 = vunpack.c.l.b16 %v69
  %v120 = vunpack.c.l.b16 %v70
  %v121 = vunpack.c.l.b16 %v71
  %v122 = vpack.c.b16 %v118, %v117
  %v123 = vpack.c.b16 %v120, %v119
  %v124 = vpack.c.b16 %v121, %v121
  %vm127 = vcmask 293888
  %v129 = vsel %vm127, %v104, 0
  %v132 = vsel %vm127, %v105, 0
  %v135 = vsel %vm127, %v106, 0
  %v138 = vsel %vm127, %v107, 0
  %v141 = vsel %vm127, %v108, 0
  %v144 = vsel %vm127, %v109, 0
  %v147 = vsel %vm127, %v110, 0
  %v150 = vsel %vm127, %v111, 0
  %vm152 = vcmask 1041408
  %v154 = vsel %vm152, %v124, 0
  %156 = vmatprep.subr.bf16.mxu0 0
  %157 = vmatpush1.bf16.msra.mxu0 %v122
  %158 = vmatprep.subr.bf16.mxu0 0
  %159 = vmatpush1.bf16.msra.mxu0 %v123
  %160 = vmatprep.subr.bf16.mxu0 0
  %161 = vmatpush1.bf16.msra.mxu0 %v154
  %162 = vmatprep.subr.bf16.mxu0 0
  %163 = vmatpush1.bf16.msra.mxu0 0
  %164 = vmatprep.subr.bf16.mxu0 0
  %165 = vmatpush1.bf16.msra.mxu0 0
  %166 = vmatprep.subr.bf16.mxu0 0
  %167 = vmatpush1.bf16.msra.mxu0 0
  %168 = vmatprep.subr.bf16.mxu0 0
  %169 = vmatpush1.bf16.msra.mxu0 0
  %170 = vmatprep.subr.bf16.mxu0 0
  %171 = vmatpush1.bf16.msra.mxu0 0
  %172 = vmatprep.subr.bf16.mxu0 0
  %173 = vmatpush1.bf16.msra.mxu0 0
  %174 = vmatprep.subr.bf16.mxu0 0
  %175 = vmatpush1.bf16.msra.mxu0 0
  %176 = vmatprep.subr.bf16.mxu0 0
  %177 = vmatpush1.bf16.msra.mxu0 0
  %178 = vmatprep.subr.bf16.mxu0 0
  %179 = vmatpush1.bf16.msra.mxu0 0
  %180 = vmatprep.subr.bf16.mxu0 0
  %181 = vmatpush1.bf16.msra.mxu0 0
  %182 = vmatprep.subr.bf16.mxu0 0
  %183 = vmatpush1.bf16.msra.mxu0 0
  %184 = vmatprep.subr.bf16.mxu0 0
  %185 = vmatpush1.bf16.msra.mxu0 0
  %186 = vmatprep.subr.bf16.mxu0 0
  %187 = vmatpush1.bf16.msra.mxu0 0
  %188 = vmatprep.mubr.bf16.mxu0 0
  %189 = vmatmul.mubr.bf16.gmra.mrb[0].mxu0 %v129
  %v190 = vpop.f32.mrb[0].mxu0
  %v191 = vadd.f32 0.0, %v190
  %v192 = vpop.f32.mrb[0].mxu0
  %v193 = vpop.f32.mrb[0].mxu0
  %v194 = vadd.f32 0.0, %v193
  %v195 = vpop.f32.mrb[0].mxu0
  %196 = vmatprep.mubr.bf16.mxu0 0
  %197 = vmatmul.mubr.bf16.gmra.mrb[0].mxu0 %v132
  %v198 = vpop.f32.mrb[0].mxu0
  %v199 = vadd.f32 0.0, %v198
  %v200 = vpop.f32.mrb[0].mxu0
  %v201 = vpop.f32.mrb[0].mxu0
  %v202 = vadd.f32 0.0, %v201
  %v203 = vpop.f32.mrb[0].mxu0
  %204 = vmatprep.mubr.bf16.mxu0 0
  %205 = vmatmul.mubr.bf16.gmra.mrb[0].mxu0 %v135
  %v206 = vpop.f32.mrb[0].mxu0
  %v207 = vadd.f32 0.0, %v206
  %v208 = vpop.f32.mrb[0].mxu0
  %v209 = vpop.f32.mrb[0].mxu0
  %v210 = vadd.f32 0.0, %v209
  %v211 = vpop.f32.mrb[0].mxu0
  %212 = vmatprep.mubr.bf16.mxu0 0
  %213 = vmatmul.mubr.bf16.gmra.mrb[0].mxu0 %v138
  %v214 = vpop.f32.mrb[0].mxu0
  %v215 = vadd.f32 0.0, %v214
  %v216 = vpop.f32.mrb[0].mxu0
  %v217 = vpop.f32.mrb[0].mxu0
  %v218 = vadd.f32 0.0, %v217
  %v219 = vpop.f32.mrb[0].mxu0
  %220 = vmatprep.mubr.bf16.mxu0 0
  %221 = vmatmul.mubr.bf16.gmra.mrb[0].mxu0 %v141
  %v222 = vpop.f32.mrb[0].mxu0
  %v223 = vadd.f32 0.0, %v222
  %v224 = vpop.f32.mrb[0].mxu0
  %v225 = vpop.f32.mrb[0].mxu0
  %v226 = vadd.f32 0.0, %v225
  %v227 = vpop.f32.mrb[0].mxu0
  %228 = vmatprep.mubr.bf16.mxu0 0
  %229 = vmatmul.mubr.bf16.gmra.mrb[0].mxu0 %v144
  %v230 = vpop.f32.mrb[0].mxu0
  %v231 = vadd.f32 0.0, %v230
  %v232 = vpop.f32.mrb[0].mxu0
  %v233 = vpop.f32.mrb[0].mxu0
  %v234 = vadd.f32 0.0, %v233
  %v235 = vpop.f32.mrb[0].mxu0
  %236 = vmatprep.mubr.bf16.mxu0 0
  %237 = vmatmul.mubr.bf16.gmra.mrb[0].mxu0 %v147
  %v238 = vpop.f32.mrb[0].mxu0
  %v239 = vadd.f32 0.0, %v238
  %v240 = vpop.f32.mrb[0].mxu0
  %v241 = vpop.f32.mrb[0].mxu0
  %v242 = vadd.f32 0.0, %v241
  %v243 = vpop.f32.mrb[0].mxu0
  %244 = vmatprep.mubr.bf16.mxu0 0
  %245 = vmatmul.mubr.bf16.gmra.mrb[0].mxu0 %v150
  %v246 = vpop.f32.mrb[0].mxu0
  %v247 = vadd.f32 0.0, %v246
  %v248 = vpop.f32.mrb[0].mxu0
  %v249 = vpop.f32.mrb[0].mxu0
  %v250 = vadd.f32 0.0, %v249
  %v251 = vpop.f32.mrb[0].mxu0
  %252 = vdwg.mxu0
  %v253 = vadd.f32 %v35, %v191
  %v254 = vadd.f32 %v36, %v194
  %v255 = vadd.f32 %v37, %v199
  %v256 = vadd.f32 %v38, %v202
  %v257 = vadd.f32 %v39, %v207
  %v258 = vadd.f32 %v40, %v210
  %v259 = vadd.f32 %v41, %v215
  %v260 = vadd.f32 %v42, %v218
  %v261 = vadd.f32 %v43, %v223
  %v262 = vadd.f32 %v44, %v226
  %v263 = vadd.f32 %v45, %v231
  %v264 = vadd.f32 %v46, %v234
  %v265 = vadd.f32 %v47, %v239
  %v266 = vadd.f32 %v48, %v242
  %v267 = vadd.f32 %v49, %v247
  %v268 = vadd.f32 %v50, %v250
  %269 = vst [vmem:[#allocation2] sm:$0xff] %v253
  %270 = vst [vmem:[#allocation2 + $0x8] sm:$0xff] %v254
  %271 = vst [vmem:[#allocation2 + $0x10] sm:$0xff] %v255
  %272 = vst [vmem:[#allocation2 + $0x18] sm:$0xff] %v256
  %273 = vst [vmem:[#allocation2 + $0x20] sm:$0xff] %v257
  %274 = vst [vmem:[#allocation2 + $0x28] sm:$0xff] %v258
  %275 = vst [vmem:[#allocation2 + $0x30] sm:$0xff] %v259
  %276 = vst [vmem:[#allocation2 + $0x38] sm:$0xff] %v260
  %277 = vst [vmem:[#allocation2 + $0x40] sm:$0xff] %v261
  %278 = vst [vmem:[#allocation2 + $0x48] sm:$0xff] %v262
  %279 = vst [vmem:[#allocation2 + $0x50] sm:$0xff] %v263
  %280 = vst [vmem:[#allocation2 + $0x58] sm:$0xff] %v264
  %281 = vst [vmem:[#allocation2 + $0x60] sm:$0xff] %v265
  %282 = vst [vmem:[#allocation2 + $0x68] sm:$0xff] %v266
  %283 = vst [vmem:[#allocation2 + $0x70] sm:$0xff] %v267
  %284 = vst [vmem:[#allocation2 + $0x78] sm:$0xff] %v268
  // Predicated region
  $region14: #{preact_block_forward.6} parent=0 // pred_check
    %p285 = pneg %p15
  $region15: #{preact_block_forward.6} parent=0 // pred_check_branch
    %287 = sbr.rel (%p285) target = $region17
  $region16: #{preact_block_forward.6} parent=0 // pred_region
    %v288 = vld [vmem:[#allocation2] sm:$0xff]
    %v289 = vld [vmem:[#allocation2 + $0x8] sm:$0xff]
    %v290 = vld [vmem:[#allocation2 + $0x10] sm:$0xff]
    %v291 = vld [vmem:[#allocation2 + $0x18] sm:$0xff]
    %v292 = vld [vmem:[#allocation2 + $0x20] sm:$0xff]
    %v293 = vld [vmem:[#allocation2 + $0x28] sm:$0xff]
    %v294 = vld [vmem:[#allocation2 + $0x30] sm:$0xff]
    %v295 = vld [vmem:[#allocation2 + $0x38] sm:$0xff]
    %v296 = vld [vmem:[#allocation2 + $0x40] sm:$0xff]
    %v297 = vld [vmem:[#allocation2 + $0x48] sm:$0xff]
    %v298 = vld [vmem:[#allocation2 + $0x50] sm:$0xff]
    %v299 = vld [vmem:[#allocation2 + $0x58] sm:$0xff]
    %v300 = vld [vmem:[#allocation2 + $0x60] sm:$0xff]
    %v301 = vld [vmem:[#allocation2 + $0x68] sm:$0xff]
    %v302 = vld [vmem:[#allocation2 + $0x70] sm:$0xff]
    %v303 = vld [vmem:[#allocation2 + $0x78] sm:$0xff]
    %v304 = vpack.c.bf16 %v289, %v288
    %v305 = vpack.c.bf16 %v291, %v290
    %v306 = vpack.c.bf16 %v293, %v292
    %v307 = vpack.c.bf16 %v295, %v294
    %v308 = vpack.c.bf16 %v297, %v296
    %v309 = vpack.c.bf16 %v299, %v298
    %v310 = vpack.c.bf16 %v301, %v300
    %v311 = vpack.c.bf16 %v303, %v302
    %v320 = vunpack.c.l.b16 %v304
    %v321 = vunpack.c.h.b16 %v304
    %v322 = vunpack.c.l.b16 %v305
    %v323 = vunpack.c.h.b16 %v305
    %v324 = vunpack.c.l.b16 %v306
    %v325 = vunpack.c.h.b16 %v306
    %v326 = vunpack.c.l.b16 %v307
    %v327 = vunpack.c.h.b16 %v307
    %v328 = vunpack.c.l.b16 %v308
    %v329 = vunpack.c.h.b16 %v308
    %v330 = vunpack.c.l.b16 %v309
    %v331 = vunpack.c.h.b16 %v309
    %v332 = vunpack.c.l.b16 %v310
    %v333 = vunpack.c.h.b16 %v310
    %v334 = vunpack.c.l.b16 %v311
    %v335 = vunpack.c.h.b16 %v311
    %v336 = vpack.c.b16 %v320, %v320
    %v337 = vpack.c.b16 %v321, %v321
    %v338 = vpack.c.b16 %v322, %v322
    %v339 = vpack.c.b16 %v323, %v323
    %v340 = vpack.c.b16 %v324, %v324
    %v341 = vpack.c.b16 %v325, %v325
    %v342 = vpack.c.b16 %v326, %v326
    %v343 = vpack.c.b16 %v327, %v327
    %v344 = vpack.c.b16 %v328, %v328
    %v345 = vpack.c.b16 %v329, %v329
    %v346 = vpack.c.b16 %v330, %v330
    %v347 = vpack.c.b16 %v331, %v331
    %v348 = vpack.c.b16 %v332, %v332
    %v349 = vpack.c.b16 %v333, %v333
    %v350 = vpack.c.b16 %v334, %v334
    %v351 = vpack.c.b16 %v335, %v335
    %368 = vst [vmem:[%s2] sm:$0xf] %v336
    %369 = vst [vmem:[%s2 + $0x4] sm:$0xf] %v337
    %370 = vst [vmem:[%s2 + $0x8] sm:$0xf] %v338
    %371 = vst [vmem:[%s2 + $0xc] sm:$0xf] %v339
    %372 = vst [vmem:[%s2 + $0x10] sm:$0xf] %v340
    %373 = vst [vmem:[%s2 + $0x14] sm:$0xf] %v341
    %374 = vst [vmem:[%s2 + $0x18] sm:$0xf] %v342
    %375 = vst [vmem:[%s2 + $0x1c] sm:$0xf] %v343
    %376 = vst [vmem:[%s2 + $0x20] sm:$0xf] %v344
    %377 = vst [vmem:[%s2 + $0x24] sm:$0xf] %v345
    %378 = vst [vmem:[%s2 + $0x28] sm:$0xf] %v346
    %379 = vst [vmem:[%s2 + $0x2c] sm:$0xf] %v347
    %380 = vst [vmem:[%s2 + $0x30] sm:$0xf] %v348
    %381 = vst [vmem:[%s2 + $0x34] sm:$0xf] %v349
    %382 = vst [vmem:[%s2 + $0x38] sm:$0xf] %v350
    %383 = vst [vmem:[%s2 + $0x3c] sm:$0xf] %v351
    %v384 = vadd.f32 %v288, %v289
    %v385 = vadd.f32 %v384, %v290
    %v386 = vadd.f32 %v385, %v291
    %v387 = vadd.f32 %v386, %v292
    %v388 = vadd.f32 %v387, %v293
    %v389 = vadd.f32 %v388, %v294
    %v390 = vadd.f32 %v389, %v295
    %v391 = vadd.f32 %v390, %v296
    %v392 = vadd.f32 %v391, %v297
    %v393 = vadd.f32 %v392, %v298
    %v394 = vadd.f32 %v393, %v299
    %v395 = vadd.f32 %v394, %v300
    %v396 = vadd.f32 %v395, %v301
    %v397 = vadd.f32 %v396, %v302
    %v398 = vadd.f32 %v397, %v303
    %v399 = vrot.slane %v398, 4
    %v400 = vadd.f32 %v398, %v399
    %v401 = vrot.slane %v400, 2
    %v402 = vadd.f32 %v400, %v401
    %v403 = vrot.slane %v402, 1
    %v404 = vadd.f32 %v402, %v403
    %405 = vst [vmem:[%s3] sm:$0x1] %v404
    %v406 = vmul.f32 %v288, %v288
    %v407 = vmul.f32 %v289, %v289
    %v408 = vmul.f32 %v290, %v290
    %v409 = vmul.f32 %v291, %v291
    %v410 = vmul.f32 %v292, %v292
    %v411 = vmul.f32 %v293, %v293
    %v412 = vmul.f32 %v294, %v294
    %v413 = vmul.f32 %v295, %v295
    %v414 = vmul.f32 %v296, %v296
    %v415 = vmul.f32 %v297, %v297
    %v416 = vmul.f32 %v298, %v298
    %v417 = vmul.f32 %v299, %v299
    %v418 = vmul.f32 %v300, %v300
    %v419 = vmul.f32 %v301, %v301
    %v420 = vmul.f32 %v302, %v302
    %v421 = vmul.f32 %v303, %v303
    %v422 = vadd.f32 %v406, %v407
    %v423 = vadd.f32 %v422, %v408
    %v424 = vadd.f32 %v423, %v409
    %v425 = vadd.f32 %v424, %v410
    %v426 = vadd.f32 %v425, %v411
    %v427 = vadd.f32 %v426, %v412
    %v428 = vadd.f32 %v427, %v413
    %v429 = vadd.f32 %v428, %v414
    %v430 = vadd.f32 %v429, %v415
    %v431 = vadd.f32 %v430, %v416
    %v432 = vadd.f32 %v431, %v417
    %v433 = vadd.f32 %v432, %v418
    %v434 = vadd.f32 %v433, %v419
    %v435 = vadd.f32 %v434, %v420
    %v436 = vadd.f32 %v435, %v421
    %v437 = vrot.slane %v436, 4
    %v438 = vadd.f32 %v436, %v437
    %v439 = vrot.slane %v438, 2
    %v440 = vadd.f32 %v438, %v439
    %v441 = vrot.slane %v440, 1
    %v442 = vadd.f32 %v440, %v441
    %443 = vst [vmem:[%s4] sm:$0x1] %v442
  $region17: #{preact_block_forward.6} parent=0 // pred_fallthru
    _
  // Predicated region
  $region18: #{preact_block_forward.6} parent=0 // pred_check
    _
  $region19: #{preact_block_forward.6} parent=0 // pred_check_branch
    %445 = sbr.rel (0) target = $region21
  $region20: #{preact_block_forward.6} parent=0 // pred_region
    _
  $region21: #{preact_block_forward.6} parent=0 // pred_fallthru
    _
  // Predicated region
  $region22: #{preact_block_forward.6} parent=0 // pred_check
    _
  $region23: #{preact_block_forward.6} parent=0 // pred_check_branch
    %447 = sbr.rel (0) target = $region25
  $region24: #{preact_block_forward.6} parent=0 // pred_region
    _
  $region25: #{preact_block_forward.6} parent=0 // pred_fallthru
    _
  // Predicated region
  $region26: #{preact_block_forward.6} parent=0 // pred_check
    _
  $region27: #{preact_block_forward.6} parent=0 // pred_check_branch
    %449 = sbr.rel (0) target = $region29
  $region28: #{preact_block_forward.6} parent=0 // pred_region
    _
  $region29: #{preact_block_forward.6} parent=0 // pred_fallthru
    _
  // Predicated region
  $region30: #{preact_block_forward.6} parent=0 // pred_check
    _
  $region31: #{preact_block_forward.6} parent=0 // pred_check_branch
    %451 = sbr.rel (0) target = $region33
  $region32: #{preact_block_forward.6} parent=0 // pred_region
    _
  $region33: #{preact_block_forward.6} parent=0 // pred_fallthru
    _
  // Predicated region
  $region34: #{preact_block_forward.6} parent=0 // pred_check
    _
  $region35: #{preact_block_forward.6} parent=0 // pred_check_branch
    %453 = sbr.rel (0) target = $region37
  $region36: #{preact_block_forward.6} parent=0 // pred_region
    _
  $region37: #{preact_block_forward.6} parent=0 // pred_fallthru
    _
  // Predicated region
  $region38: #{preact_block_forward.6} parent=0 // pred_check
    _
  $region39: #{preact_block_forward.6} parent=0 // pred_check_branch
    %455 = sbr.rel (0) target = $region41
  $region40: #{preact_block_forward.6} parent=0 // pred_region
    _
  $region41: #{preact_block_forward.6} parent=0 // pred_fallthru
    _

// kernel: preact_block_forward.7
$region0: #{preact_block_forward.7}
  #allocation0 [shape = 'u32[]', space=smem, size = 0x4, offset = 0x4, fixed_abs, tag = 'smem constant byte address 0x4 - core index']
  #allocation1 [shape = 'u32[144,128]{1,0:T(1,128)}', space=vmem, size = 0x12000, scoped, tag = 'internal scratch']
  #allocation2 [shape = 'bf16[10,16,8]{2,1,0:T(16,128)(2,1)}', space=vmem, size = 0xa000, scoped, tag = 'scratch operand']
  %s0 = inlined_call_operand.vmem [shape: bf16[2,8,8,8], index: 0, kind: input, shape index: {}]
  %s1 = inlined_call_operand.vmem [shape: f32[1,8], index: 1, kind: input, shape index: {}]
  %s2 = inlined_call_operand.vmem [shape: f32[1,8], index: 2, kind: input, shape index: {}]
  %s3 = inlined_call_operand.vmem [shape: bf16[9,8,8], index: 3, kind: input, shape index: {}]
  %s4 = inlined_call_operand.vmem [shape: bf16[2,8,8,8], index: 4, kind: input, shape index: {}]
  %s5 = inlined_call_operand.vmem [shape: f32[2,8,8,8], index: 5, kind: output, shape index: {}]
  %s6 = sld [smem:[#allocation0]]
  $region53: #{preact_block_forward.7} parent=0
    _
  %s8 = ssub.s32 1, %s6
  %s9 = scalar_select 0, %s8, %s6
  loop: start=0, step=1, limit=4
  $region2: #{preact_block_forward.7} parent=0 // loop_pre_header
    _
  $region3: #{preact_block_forward.7} parent=0 // loop_header
    %s11 = sphi 0, %s15
    %p12 = scmp.ge.s32.totalorder %s11, 4
    %s21 = sphi 0, %s23
    %s24 = sphi 0, %s21
    %s25 = sphi 0, %s24
    %s41 = sphi 0, %s25
    %s45 = sphi 0, %s45
    %s47 = sphi 0, %s45
    %s48 = sphi 0, %s47
    %s62 = sphi 0, %s48
    %s66 = sphi 0, %s66
    %s68 = sphi 0, %s66
    %s69 = sphi 0, %s68
    %s83 = sphi 0, %s69
    %s87 = sphi 0, %s87
    %s89 = sphi 0, %s87
    %s90 = sphi 0, %s89
    %s104 = sphi 0, %s90
    %s110 = sphi 0, %s112
    %s113 = sphi 0, %s110
    %s114 = sphi 0, %s113
    %s130 = sphi 0, %s114
    %s136 = sphi 0, %s138
    %s139 = sphi 0, %s136
    %s140 = sphi 0, %s139
    %s156 = sphi 0, %s140
  $region4: #{preact_block_forward.7} parent=0 // loop_header_branch
    %14 = sbr.rel (%p12) target = $region8
  $region5: #{preact_block_forward.7} parent=0 // loop_body
    %s16 = ssub.s32 %s11, 1
    %s17 = ssub.s32 %s11, 2
    %s18 = sadd.s32 %s11, 1
    %s19 = ssub.s32 %s11, %s18
    %p20 = scmp.eq.s32.totalorder %s19, 0
    %s22 = sadd.s32 %s21, 1
    %s23 = scalar_select %p20, %s21, %s22
    %p26 = pneg %p20
    %p27 = scmp.eq.s32.totalorder %s11, 1
    %p28 = por %p26, %p27
    %p29 = scmp.ne.s32.totalorder %s21, %s24
    %p30 = scmp.eq.s32.totalorder %s11, 0
    %p31 = por %p29, %p30
    %p32 = scmp.ne.s32.totalorder %s21, %s24
    %p33 = scmp.eq.s32.totalorder %s16, 1
    %p34 = por %p32, %p33
    %p35 = scmp.ne.s32.totalorder %s24, %s25
    %p36 = scmp.eq.s32.totalorder %s16, 0
    %p37 = por %p35, %p36
    %p38 = scmp.ne.s32.totalorder %s24, %s25
    %p39 = scmp.eq.s32.totalorder %s17, 1
    %p40 = por %p38, %p39
    %p42 = scmp.ne.s32.totalorder %s25, %s41
    %p43 = scmp.eq.s32.totalorder %s17, 0
    %p44 = por %p42, %p43
    %s46 = sadd.s32 %s45, 1
    %p49 = scmp.eq.s32.totalorder %s11, 1
    %p50 = scmp.ne.s32.totalorder %s45, %s47
    %p51 = scmp.eq.s32.totalorder %s11, 0
    %p52 = por %p50, %p51
    %p53 = scmp.ne.s32.totalorder %s45, %s47
    %p54 = scmp.eq.s32.totalorder %s16, 1
    %p55 = por %p53, %p54
    %p56 = scmp.ne.s32.totalorder %s47, %s48
    %p57 = scmp.eq.s32.totalorder %s16, 0
    %p58 = por %p56, %p57
    %p59 = scmp.ne.s32.totalorder %s47, %s48
    %p60 = scmp.eq.s32.totalorder %s17, 1
    %p61 = por %p59, %p60
    %p63 = scmp.ne.s32.totalorder %s48, %s62
    %p64 = scmp.eq.s32.totalorder %s17, 0
    %p65 = por %p63, %p64
    %s67 = sadd.s32 %s66, 1
    %p70 = scmp.eq.s32.totalorder %s11, 1
    %p71 = scmp.ne.s32.totalorder %s66, %s68
    %p72 = scmp.eq.s32.totalorder %s11, 0
    %p73 = por %p71, %p72
    %p74 = scmp.ne.s32.totalorder %s66, %s68
    %p75 = scmp.eq.s32.totalorder %s16, 1
    %p76 = por %p74, %p75
    %p77 = scmp.ne.s32.totalorder %s68, %s69
    %p78 = scmp.eq.s32.totalorder %s16, 0
    %p79 = por %p77, %p78
    %p80 = scmp.ne.s32.totalorder %s68, %s69
    %p81 = scmp.eq.s32.totalorder %s17, 1
    %p82 = por %p80, %p81
    %p84 = scmp.ne.s32.totalorder %s69, %s83
    %p85 = scmp.eq.s32.totalorder %s17, 0
    %p86 = por %p84, %p85
    %s88 = sadd.s32 %s87, 1
    %p91 = scmp.eq.s32.totalorder %s11, 1
    %p92 = scmp.ne.s32.totalorder %s87, %s89
    %p93 = scmp.eq.s32.totalorder %s11, 0
    %p94 = por %p92, %p93
    %p95 = scmp.ne.s32.totalorder %s87, %s89
    %p96 = scmp.eq.s32.totalorder %s16, 1
    %p97 = por %p95, %p96
    %p98 = scmp.ne.s32.totalorder %s89, %s90
    %p99 = scmp.eq.s32.totalorder %s16, 0
    %p100 = por %p98, %p99
    %p101 = scmp.ne.s32.totalorder %s89, %s90
    %p102 = scmp.eq.s32.totalorder %s17, 1
    %p103 = por %p101, %p102
    %p105 = scmp.ne.s32.totalorder %s90, %s104
    %p106 = scmp.eq.s32.totalorder %s17, 0
    %p107 = por %p105, %p106
    %s108 = ssub.s32 %s11, %s18
    %p109 = scmp.eq.s32.totalorder %s108, 0
    %s111 = sadd.s32 %s110, 1
    %s112 = scalar_select %p109, %s110, %s111
    %p115 = pneg %p109
    %p116 = scmp.eq.s32.totalorder %s11, 1
    %p117 = por %p115, %p116
    %p118 = scmp.ne.s32.totalorder %s110, %s113
    %p119 = scmp.eq.s32.totalorder %s11, 0
    %p120 = por %p118, %p119
    %p121 = scmp.ne.s32.totalorder %s110, %s113
    %p122 = scmp.eq.s32.totalorder %s16, 1
    %p123 = por %p121, %p122
    %p124 = scmp.ne.s32.totalorder %s113, %s114
    %p125 = scmp.eq.s32.totalorder %s16, 0
    %p126 = por %p124, %p125
    %p127 = scmp.ne.s32.totalorder %s113, %s114
    %p128 = scmp.eq.s32.totalorder %s17, 1
    %p129 = por %p127, %p128
    %p131 = scmp.ne.s32.totalorder %s114, %s130
    %p132 = scmp.eq.s32.totalorder %s17, 0
    %p133 = por %p131, %p132
    %s134 = ssub.s32 %s11, %s18
    %p135 = scmp.eq.s32.totalorder %s134, 0
    %s137 = sadd.s32 %s136, 1
    %s138 = scalar_select %p135, %s136, %s137
    %p141 = pneg %p135
    %p142 = scmp.eq.s32.totalorder %s11, 1
    %p143 = por %p141, %p142
    %p144 = scmp.ne.s32.totalorder %s136, %s139
    %p145 = scmp.eq.s32.totalorder %s11, 0
    %p146 = por %p144, %p145
    %p147 = scmp.ne.s32.totalorder %s136, %s139
    %p148 = scmp.eq.s32.totalorder %s16, 1
    %p149 = por %p147, %p148
    %p150 = scmp.ne.s32.totalorder %s139, %s140
    %p151 = scmp.eq.s32.totalorder %s16, 0
    %p152 = por %p150, %p151
    %p153 = scmp.ne.s32.totalorder %s139, %s140
    %p154 = scmp.eq.s32.totalorder %s17, 1
    %p155 = por %p153, %p154
    %p157 = scmp.ne.s32.totalorder %s140, %s156
    %p158 = scmp.eq.s32.totalorder %s17, 0
    %p159 = por %p157, %p158
    %p160 = scmp.le.s32.totalorder 1, %s11
    %p161 = scmp.lt.s32.totalorder %s11, 3
    %p162 = pnand %p160, %p161
    %p163 = pneg %p162
    // Predicated region
    $region9: #{preact_block_forward.7} parent=5 // pred_check
      _
    $region10: #{preact_block_forward.7} parent=5 // pred_check_branch
      %165 = sbr.rel (%p162) target = $region12
    $region11: #{preact_block_forward.7} parent=5 // pred_region
      %s166 = ssub.s32 %s11, 1
      // Predicated region
      $region13: #{preact_block_forward.7} parent=11 // pred_check
        %p167 = pneg %p58
      $region14: #{preact_block_forward.7} parent=11 // pred_check_branch
        %169 = sbr.rel (%p167) target = $region16
      $region15: #{preact_block_forward.7} parent=11 // pred_region
        _
      $region16: #{preact_block_forward.7} parent=11 // pred_fallthru
        _
      // Predicated region
      $region17: #{preact_block_forward.7} parent=11 // pred_check
        %p170 = pneg %p79
      $region18: #{preact_block_forward.7} parent=11 // pred_check_branch
        %172 = sbr.rel (%p170) target = $region20
      $region19: #{preact_block_forward.7} parent=11 // pred_region
        _
      $region20: #{preact_block_forward.7} parent=11 // pred_fallthru
        _
      // Predicated region
      $region21: #{preact_block_forward.7} parent=11 // pred_check
        %p173 = pneg %p100
      $region22: #{preact_block_forward.7} parent=11 // pred_check_branch
        %175 = sbr.rel (%p173) target = $region24
      $region23: #{preact_block_forward.7} parent=11 // pred_region
        _
      $region24: #{preact_block_forward.7} parent=11 // pred_fallthru
        _
    $region12: #{preact_block_forward.7} parent=5 // pred_fallthru
      _
    %p176 = scmp.lt.s32.totalorder %s11, 2
    // Predicated region
    $region25: #{preact_block_forward.7} parent=5 // pred_check
      %p177 = pneg %p176
    $region26: #{preact_block_forward.7} parent=5 // pred_check_branch
      %179 = sbr.rel (%p177) target = $region28
    $region27: #{preact_block_forward.7} parent=5 // pred_region
      // Predicated region
      $region29: #{preact_block_forward.7} parent=27 // pred_check
        %p180 = pneg %p31
      $region30: #{preact_block_forward.7} parent=27 // pred_check_branch
        %182 = sbr.rel (%p180) target = $region32
      $region31: #{preact_block_forward.7} parent=27 // pred_region
        %p183 = scmp.lt.s32.totalorder %s11, 1
        %s184 = scalar_select %p183, %s11, 1
        %s185 = smul.addr %s184, 8
        %s186 = smul.addr %s185, 4
        %s187 = scalar_lea.vmem %s0, %s186
      $region32: #{preact_block_forward.7} parent=27 // pred_fallthru
        _
      // Predicated region
      $region33: #{preact_block_forward.7} parent=27 // pred_check
        %p188 = pneg %p120
      $region34: #{preact_block_forward.7} parent=27 // pred_check_branch
        %190 = sbr.rel (%p188) target = $region36
      $region35: #{preact_block_forward.7} parent=27 // pred_region
        %p191 = scmp.lt.s32.totalorder %s11, 1
        %s192 = scalar_select %p191, %s11, 1
        %s193 = smul.addr %s192, 8
        %s194 = smul.addr %s193, 4
        %s195 = scalar_lea.vmem %s4, %s194
      $region36: #{preact_block_forward.7} parent=27 // pred_fallthru
        _
    $region28: #{preact_block_forward.7} parent=5 // pred_fallthru
      _
    %p196 = scmp.le.s32.totalorder 1, %s11
    %p197 = scmp.lt.s32.totalorder %s11, 3
    %p198 = pnand %p196, %p197
    %p199 = pneg %p198
    // Predicated region
    $region37: #{preact_block_forward.7} parent=5 // pred_check
      _
    $region38: #{preact_block_forward.7} parent=5 // pred_check_branch
      %201 = sbr.rel (%p198) target = $region40
    $region39: #{preact_block_forward.7} parent=5 // pred_region
      %s202 = ssub.s32 %s11, 1
      %p203 = scmp.lt.s32.totalorder %s16, 1
      %s204 = scalar_select %p203, %s16, 1
      %s205 = smul.addr %s204, 8
      %s206 = smul.addr %s205, 4
      %s207 = scalar_lea.vmem %s0, %s206
      %p208 = pneg %p37
      %p209 = pneg %p34
      %p210 = pneg %p58
      %p211 = pneg %p55
      %p212 = pneg %p79
      %p213 = pneg %p76
      %p214 = pneg %p100
      %p215 = pneg %p97
      %p216 = scmp.lt.s32.totalorder %s16, 1
      %s217 = scalar_select %p216, %s16, 1
      %s218 = smul.addr %s217, 8
      %s219 = smul.addr %s218, 4
      %s220 = scalar_lea.vmem %s4, %s219
      %p221 = pneg %p126
      %p222 = pneg %p123
      %p223 = pneg %p152
      %p224 = pneg %p149
      %p225 = scmp.lt.s32.totalorder %s16, 1
      %s226 = scalar_select %p225, %s16, 1
      %s227 = smul.addr %s226, 8
      %s228 = smul.addr %s227, 8
      %s229 = scalar_lea.vmem %s5, %s228
      %p230 = scmp.lt.s32.totalorder %s16, 1
      %s231 = scalar_select %p230, %s16, 1
      %s232 = smul.addr %s231, 8
      %s233 = smul.addr %s232, 4
      %s234 = scalar_lea.vmem %s0, %s233
      %p235 = scmp.lt.s32.totalorder %s16, 1
      %s236 = scalar_select %p235, %s16, 1
      %s237 = smul.addr %s236, 8
      %s238 = smul.addr %s237, 4
      %s239 = scalar_lea.vmem %s4, %s238
      %p240 = scmp.lt.s32.totalorder %s16, 1
      %s241 = scalar_select %p240, %s16, 1
      %s242 = smul.addr %s241, 8
      %s243 = smul.addr %s242, 8
      %s244 = scalar_lea.vmem %s5, %s243
      %v246 = vld [vmem:[%s234] sm:$0xf]
      %v247 = vld [vmem:[%s234 + $0x4] sm:$0xf]
      %v248 = vld [vmem:[%s234 + $0x8] sm:$0xf]
      %v249 = vld [vmem:[%s234 + $0xc] sm:$0xf]
      %v250 = vld [vmem:[%s234 + $0x10] sm:$0xf]
      %v251 = vld [vmem:[%s234 + $0x14] sm:$0xf]
      %v252 = vld [vmem:[%s234 + $0x18] sm:$0xf]
      %v253 = vld [vmem:[%s234 + $0x1c] sm:$0xf]
      %v254 = vunpack.c.l.bf16 %v246
      %v255 = vunpack.c.l.bf16 %v247
      %v256 = vunpack.c.l.bf16 %v248
      %v257 = vunpack.c.l.bf16 %v249
      %v258 = vunpack.c.l.bf16 %v250
      %v259 = vunpack.c.l.bf16 %v251
      %v260 = vunpack.c.l.bf16 %v252
      %v261 = vunpack.c.l.bf16 %v253
      %v262 = vld [vmem:[%s1] sm:$0x1]
      %v263 = vld [vmem:[%s2] sm:$0x1]
      %v265 = vlaneseq
      %v266 = vshrl.u32 %v265, 7
      %v267 = vsub.s32 0, %v266
      %v268 = vrot.slane %v262, %v267
      %v270 = vmul.f32 %v254, %v268
      %v271 = vmul.f32 %v255, %v268
      %v272 = vmul.f32 %v256, %v268
      %v273 = vmul.f32 %v257, %v268
      %v274 = vmul.f32 %v258, %v268
      %v275 = vmul.f32 %v259, %v268
      %v276 = vmul.f32 %v260, %v268
      %v277 = vmul.f32 %v261, %v268
      %v279 = vlaneseq
      %v280 = vshrl.u32 %v279, 7
      %v281 = vsub.s32 0, %v280
      %v282 = vrot.slane %v263, %v281
      %v284 = vadd.f32 %v270, %v282
      %v285 = vadd.f32 %v271, %v282
      %v286 = vadd.f32 %v272, %v282
      %v287 = vadd.f32 %v273, %v282
      %v288 = vadd.f32 %v274, %v282
      %v289 = vadd.f32 %v275, %v282
      %v290 = vadd.f32 %v276, %v282
      %v291 = vadd.f32 %v277, %v282
      %v292 = vmax.f32 %v284, 0.0
      %v293 = vmax.f32 %v285, 0.0
      %v294 = vmax.f32 %v286, 0.0
      %v295 = vmax.f32 %v287, 0.0
      %v296 = vmax.f32 %v288, 0.0
      %v297 = vmax.f32 %v289, 0.0
      %v298 = vmax.f32 %v290, 0.0
      %v299 = vmax.f32 %v291, 0.0
      %v300 = vpack.c.bf16 %v292, %v292
      %v301 = vpack.c.bf16 %v293, %v293
      %v302 = vpack.c.bf16 %v294, %v294
      %v303 = vpack.c.bf16 %v295, %v295
      %v304 = vpack.c.bf16 %v296, %v296
      %v305 = vpack.c.bf16 %v297, %v297
      %v306 = vpack.c.bf16 %v298, %v298
      %v307 = vpack.c.bf16 %v299, %v299
      %vm308 = vcmask 64512
      %309 = vst.msk [vmem:[#allocation2] sm:$0xff] %vm308, 0
      %310 = vst.msk [vmem:[#allocation2 + $0x8] sm:$0xff] %vm308, 0
      %311 = vst.msk [vmem:[#allocation2 + $0x10] sm:$0xff] %vm308, 0
      %312 = vst.msk [vmem:[#allocation2 + $0x18] sm:$0xff] %vm308, 0
      %313 = vst.msk [vmem:[#allocation2 + $0x20] sm:$0xff] %vm308, 0
      %314 = vst.msk [vmem:[#allocation2 + $0x28] sm:$0xff] %vm308, 0
      %315 = vst.msk [vmem:[#allocation2 + $0x30] sm:$0xff] %vm308, 0
      %316 = vst.msk [vmem:[#allocation2 + $0x38] sm:$0xff] %vm308, 0
      %317 = vst.msk [vmem:[#allocation2 + $0x40] sm:$0xff] %vm308, 0
      %318 = vst.msk [vmem:[#allocation2 + $0x48] sm:$0xff] %vm308, 0
      %v320 = vshrl.u32 %v300, 16
      %v322 = vrot.slane %v320, 7
      %v323 = vshll.u32 %v300, 16
      %v325 = vor.u32 %v322, %v323
      %v327 = vshrl.u32 %v301, 16
      %v329 = vrot.slane %v327, 7
      %v330 = vshll.u32 %v301, 16
      %v332 = vor.u32 %v329, %v330
      %v334 = vshrl.u32 %v302, 16
      %v336 = vrot.slane %v334, 7
      %v337 = vshll.u32 %v302, 16
      %v339 = vor.u32 %v336, %v337
      %v341 = vshrl.u32 %v303, 16
      %v343 = vrot.slane %v341, 7
      %v344 = vshll.u32 %v303, 16
      %v346 = vor.u32 %v343, %v344
      %v348 = vshrl.u32 %v304, 16
      %v350 = vrot.slane %v348, 7
      %v351 = vshll.u32 %v304, 16
      %v353 = vor.u32 %v350, %v351
      %v355 = vshrl.u32 %v305, 16
      %v357 = vrot.slane %v355, 7
      %v358 = vshll.u32 %v305, 16
      %v360 = vor.u32 %v357, %v358
      %v362 = vshrl.u32 %v306, 16
      %v364 = vrot.slane %v362, 7
      %v365 = vshll.u32 %v306, 16
      %v367 = vor.u32 %v364, %v365
      %v369 = vshrl.u32 %v307, 16
      %v371 = vrot.slane %v369, 7
      %v372 = vshll.u32 %v307, 16
      %v374 = vor.u32 %v371, %v372
      %s383 = scalar_lea.vmem [#allocation2], 8
      %vm384 = vcmask 61440
      %vm385 = vsmask.f32 4354
      %vm386 = vmand %vm384, %vm385
      %v387 = vld [vmem:[%s383] sm:$0x1f]
      %v388 = vsel %vm386, %v325, %v387
      %389 = vst [vmem:[%s383] sm:$0x1f] %v388
      %v390 = vld [vmem:[%s383 + $0x8] sm:$0x1f]
      %v391 = vsel %vm386, %v332, %v390
      %392 = vst [vmem:[%s383 + $0x8] sm:$0x1f] %v391
      %v393 = vld [vmem:[%s383 + $0x10] sm:$0x1f]
      %v394 = vsel %vm386, %v339, %v393
      %395 = vst [vmem:[%s383 + $0x10] sm:$0x1f] %v394
      %v396 = vld [vmem:[%s383 + $0x18] sm:$0x1f]
      %v397 = vsel %vm386, %v346, %v396
      %398 = vst [vmem:[%s383 + $0x18] sm:$0x1f] %v397
      %v399 = vld [vmem:[%s383 + $0x20] sm:$0x1f]
      %v400 = vsel %vm386, %v353, %v399
      %401 = vst [vmem:[%s383 + $0x20] sm:$0x1f] %v400
      %v402 = vld [vmem:[%s383 + $0x28] sm:$0x1f]
      %v403 = vsel %vm386, %v360, %v402
      %404 = vst [vmem:[%s383 + $0x28] sm:$0x1f] %v403
      %v405 = vld [vmem:[%s383 + $0x30] sm:$0x1f]
      %v406 = vsel %vm386, %v367, %v405
      %407 = vst [vmem:[%s383 + $0x30] sm:$0x1f] %v406
      %v408 = vld [vmem:[%s383 + $0x38] sm:$0x1f]
      %v409 = vsel %vm386, %v374, %v408
      %410 = vst [vmem:[%s383 + $0x38] sm:$0x1f] %v409
      %v411 = vld [vmem:[#allocation2] sm:$0xf]
      %v412 = vld [vmem:[#allocation2 + $0x8] sm:$0xf]
      %v413 = vld [vmem:[#allocation2 + $0x10] sm:$0xf]
      %v414 = vld [vmem:[#allocation2 + $0x18] sm:$0xf]
      %v415 = vld [vmem:[#allocation2 + $0x20] sm:$0xf]
      %v416 = vld [vmem:[#allocation2 + $0x28] sm:$0xf]
      %v417 = vld [vmem:[#allocation2 + $0x30] sm:$0xf]
      %v418 = vld [vmem:[#allocation2 + $0x38] sm:$0xf]
      %v419 = vld [vmem:[%s3] sm:$0xf]
      %v420 = vld [vmem:[#allocation2] sm:$0x1f]
      %v421 = vld [vmem:[#allocation2 + $0x8] sm:$0x1f]
      %v422 = vld [vmem:[#allocation2 + $0x10] sm:$0x1f]
      %v423 = vld [vmem:[#allocation2 + $0x18] sm:$0x1f]
      %v424 = vld [vmem:[#allocation2 + $0x20] sm:$0x1f]
      %v425 = vld [vmem:[#allocation2 + $0x28] sm:$0x1f]
      %v426 = vld [vmem:[#allocation2 + $0x30] sm:$0x1f]
      %v427 = vld [vmem:[#allocation2 + $0x38] sm:$0x1f]
      %v436 = vunpack.c.l.b16 %v420
      %v437 = vunpack.c.h.b16 %v420
      %v438 = vunpack.c.l.b16 %v421
      %v439 = vunpack.c.h.b16 %v421
      %v440 = vunpack.c.l.b16 %v422
      %v441 = vunpack.c.h.b16 %v422
      %v442 = vunpack.c.l.b16 %v423
      %v443 = vunpack.c.h.b16 %v423
      %v444 = vunpack.c.l.b16 %v424
      %v445 = vunpack.c.h.b16 %v424
      %v446 = vunpack.c.l.b16 %v425
      %v447 = vunpack.c.h.b16 %v425
      %v448 = vunpack.c.l.b16 %v426
      %v449 = vunpack.c.h.b16 %v426
      %v450 = vunpack.c.l.b16 %v427
      %v451 = vunpack.c.h.b16 %v427
      %v452 = vpack.c.b16 %v436, %v436
      %v453 = vpack.c.b16 %v437, %v437
      %v454 = vpack.c.b16 %v438, %v438
      %v455 = vpack.c.b16 %v439, %v439
      %v456 = vpack.c.b16 %v440, %v440
      %v457 = vpack.c.b16 %v441, %v441
      %v458 = vpack.c.b16 %v442, %v442
      %v459 = vpack.c.b16 %v443, %v443
      %v460 = vpack.c.b16 %v444, %v444
      %v461 = vpack.c.b16 %v445, %v445
      %v462 = vpack.c.b16 %v446, %v446
      %v463 = vpack.c.b16 %v447, %v447
      %v464 = vpack.c.b16 %v448, %v448
      %v465 = vpack.c.b16 %v449, %v449
      %v466 = vpack.c.b16 %v450, %v450
      %v467 = vpack.c.b16 %v451, %v451
      %vm468 = vsmask.f32 3328
      %vm469 = vsmask.f32 7440
      %vm470 = vmor %vm468, %vm469
      %v472 = vshrl.u32 %v452, 16
      %v474 = vrot.slane %v472, 4
      %v475 = vshll.u32 %v452, 16
      %v477 = vrot.slane %v475, 5
      %v478 = vor.u32 %v474, %v477
      %v479 = vrot.slane %v478, 4
      %v481 = vshll.u32 %v453, 16
      %v483 = vrot.slane %v481, 5
      %v484 = vsel %vm470, %v479, %v483
      %v486 = vshrl.u32 %v454, 16
      %v488 = vrot.slane %v486, 4
      %v489 = vshll.u32 %v454, 16
      %v491 = vrot.slane %v489, 5
      %v492 = vor.u32 %v488, %v491
      %v493 = vrot.slane %v492, 4
      %v495 = vshll.u32 %v455, 16
      %v497 = vrot.slane %v495, 5
      %v498 = vsel %vm470, %v493, %v497
      %v500 = vshrl.u32 %v456, 16
      %v502 = vrot.slane %v500, 4
      %v503 = vshll.u32 %v456, 16
      %v505 = vrot.slane %v503, 5
      %v506 = vor.u32 %v502, %v505
      %v507 = vrot.slane %v506, 4
      %v509 = vshll.u32 %v457, 16
      %v511 = vrot.slane %v509, 5
      %v512 = vsel %vm470, %v507, %v511
      %v514 = vshrl.u32 %v458, 16
      %v516 = vrot.slane %v514, 4
      %v517 = vshll.u32 %v458, 16
      %v519 = vrot.slane %v517, 5
      %v520 = vor.u32 %v516, %v519
      %v521 = vrot.slane %v520, 4
      %v523 = vshll.u32 %v459, 16
      %v525 = vrot.slane %v523, 5
      %v526 = vsel %vm470, %v521, %v525
      %v528 = vshrl.u32 %v460, 16
      %v530 = vrot.slane %v528, 4
      %v531 = vshll.u32 %v460, 16
      %v533 = vrot.slane %v531, 5
      %v534 = vor.u32 %v530, %v533
      %v535 = vrot.slane %v534, 4
      %v537 = vshll.u32 %v461, 16
      %v539 = vrot.slane %v537, 5
      %v540 = vsel %vm470, %v535, %v539
      %v542 = vshrl.u32 %v462, 16
      %v544 = vrot.slane %v542, 4
      %v545 = vshll.u32 %v462, 16
      %v547 = vrot.slane %v545, 5
      %v548 = vor.u32 %v544, %v547
      %v549 = vrot.slane %v548, 4
      %v551 = vshll.u32 %v463, 16
      %v553 = vrot.slane %v551, 5
      %v554 = vsel %vm470, %v549, %v553
      %v556 = vshrl.u32 %v464, 16
      %v558 = vrot.slane %v556, 4
      %v559 = vshll.u32 %v464, 16
      %v561 = vrot.slane %v559, 5
      %v562 = vor.u32 %v558, %v561
      %v563 = vrot.slane %v562, 4
      %v565 = vshll.u32 %v465, 16
      %v567 = vrot.slane %v565, 5
      %v568 = vsel %vm470, %v563, %v567
      %v570 = vshrl.u32 %v466, 16
      %v572 = vrot.slane %v570, 4
      %v573 = vshll.u32 %v466, 16
      %v575 = vrot.slane %v573, 5
      %v576 = vor.u32 %v572, %v575
      %v577 = vrot.slane %v576, 4
      %v579 = vshll.u32 %v467, 16
      %v581 = vrot.slane %v579, 5
      %v582 = vsel %vm470, %v577, %v581
      %s583 = scalar_lea.vmem %s3, 4
      %v584 = vld [vmem:[%s583] sm:$0xf]
      %v585 = vunpack.c.l.b16 %v484
      %v586 = vunpack.c.l.b16 %v498
      %v587 = vunpack.c.l.b16 %v512
      %v588 = vunpack.c.l.b16 %v526
      %v589 = vunpack.c.l.b16 %v540
      %v590 = vunpack.c.l.b16 %v554
      %v591 = vunpack.c.l.b16 %v568
      %v592 = vunpack.c.l.b16 %v582
      %v593 = vpack.c.b16 %v586, %v585
      %v594 = vpack.c.b16 %v588, %v587
      %v595 = vpack.c.b16 %v590, %v589
      %v596 = vpack.c.b16 %v592, %v591
      %v598 = vsel %vm308, %v593, 0
      %v601 = vsel %vm308, %v594, 0
      %v604 = vsel %vm308, %v595, 0
      %v607 = vsel %vm308, %v596, 0
      %vm609 = vcmask 1043456
      %v611 = vsel %vm609, %v584, 0
      %613 = vmatprep.subr.bf16.mxu0 0
      %614 = vmatpush1.bf16.msra.mxu0 %v611
      %615 = vmatprep.subr.bf16.mxu0 0
      %616 = vmatpush1.bf16.msra.mxu0 0
      %617 = vmatprep.subr.bf16.mxu0 0
      %618 = vmatpush1.bf16.msra.mxu0 0
      %619 = vmatprep.subr.bf16.mxu0 0
      %620 = vmatpush1.bf16.msra.mxu0 0
      %621 = vmatprep.subr.bf16.mxu0 0
      %622 = vmatpush1.bf16.msra.mxu0 0
      %623 = vmatprep.subr.bf16.mxu0 0
      %624 = vmatpush1.bf16.msra.mxu0 0
      %625 = vmatprep.subr.bf16.mxu0 0
      %626 = vmatpush1.bf16.msra.mxu0 0
      %627 = vmatprep.subr.bf16.mxu0 0
      %628 = vmatpush1.bf16.msra.mxu0 0
      %629 = vmatprep.subr.bf16.mxu0 0
      %630 = vmatpush1.bf16.msra.mxu0 0
      %631 = vmatprep.subr.bf16.mxu0 0
      %632 = vmatpush1.bf16.msra.mxu0 0
      %633 = vmatprep.subr.bf16.mxu0 0
      %634 = vmatpush1.bf16.msra.mxu0 0
      %635 = vmatprep.subr.bf16.mxu0 0
      %636 = vmatpush1.bf16.msra.mxu0 0
      %637 = vmatprep.subr.bf16.mxu0 0
      %638 = vmatpush1.bf16.msra.mxu0 0
      %639 = vmatprep.subr.bf16.mxu0 0
      %640 = vmatpush1.bf16.msra.mxu0 0
      %641 = vmatprep.subr.bf16.mxu0 0
      %642 = vmatpush1.bf16.msra.mxu0 0
      %643 = vmatprep.subr.bf16.mxu0 0
      %644 = vmatpush1.bf16.msra.mxu0 0
      %645 = vmatprep.mubr.bf16.mxu0 0
      %646 = vmatmul.mubr.bf16.gmra.mrb[0].mxu0 %v598
      %v647 = vpop.f32.mrb[0].mxu0
      %v648 = vadd.f32 0.0, %v647
      %v649 = vpop.f32.mrb[0].mxu0
      %v650 = vpop.f32.mrb[0].mxu0
      %v651 = vadd.f32 0.0, %v650
      %v652 = vpop.f32.mrb[0].mxu0
      %653 = vmatprep.mubr.bf16.mxu0 0
      %654 = vmatmul.mubr.bf16.gmra.mrb[0].mxu0 %v601
      %v655 = vpop.f32.mrb[0].mxu0
      %v656 = vadd.f32 0.0, %v655
      %v657 = vpop.f32.mrb[0].mxu0
      %v658 = vpop.f32.mrb[0].mxu0
      %v659 = vadd.f32 0.0, %v658
      %v660 = vpop.f32.mrb[0].mxu0
      %661 = vmatprep.mubr.bf16.mxu0 0
      %662 = vmatmul.mubr.bf16.gmra.mrb[0].mxu0 %v604
      %v663 = vpop.f32.mrb[0].mxu0
      %v664 = vadd.f32 0.0, %v663
      %v665 = vpop.f32.mrb[0].mxu0
      %v666 = vpop.f32.mrb[0].mxu0
      %v667 = vadd.f32 0.0, %v666
      %v668 = vpop.f32.mrb[0].mxu0
      %669 = vmatprep.mubr.bf16.mxu0 0
      %670 = vmatmul.mubr.bf16.gmra.mrb[0].mxu0 %v607
      %v671 = vpop.f32.mrb[0].mxu0
      %v672 = vadd.f32 0.0, %v671
      %v673 = vpop.f32.mrb[0].mxu0
      %v674 = vpop.f32.mrb[0].mxu0
      %v675 = vadd.f32 0.0, %v674
      %v676 = vpop.f32.mrb[0].mxu0
      %677 = vdwg.mxu0
      %v686 = vunpack.c.l.b16 %v411
      %v687 = vunpack.c.l.b16 %v412
      %v688 = vunpack.c.l.b16 %v413
      %v689 = vunpack.c.l.b16 %v414
      %v690 = vunpack.c.l.b16 %v415
      %v691 = vunpack.c.l.b16 %v416
      %v692 = vunpack.c.l.b16 %v417
      %v693 = vunpack.c.l.b16 %v418
      %v694 = vpack.c.b16 %v687, %v686
      %v695 = vpack.c.b16 %v689, %v688
      %v696 = vpack.c.b16 %v691, %v690
      %v697 = vpack.c.b16 %v693, %v692
      %v699 = vsel %vm308, %v694, 0
      %v702 = vsel %vm308, %v695, 0
      %v705 = vsel %vm308, %v696, 0
      %v708 = vsel %vm308, %v697, 0
      %v711 = vsel %vm609, %v419, 0
      %713 = vmatprep.subr.bf16.mxu0 0
      %714 = vmatpush1.bf16.msra.mxu0 %v711
      %715 = vmatprep.subr.bf16.mxu0 0
      %716 = vmatpush1.bf16.msra.mxu0 0
      %717 = vmatprep.subr.bf16.mxu0 0
      %718 = vmatpush1.bf16.msra.mxu0 0
      %719 = vmatprep.subr.bf16.mxu0 0
      %720 = vmatpush1.bf16.msra.mxu0 0
      %721 = vmatprep.subr.bf16.mxu0 0
      %722 = vmatpush1.bf16.msra.mxu0 0
      %723 = vmatprep.subr.bf16.mxu0 0
      %724 = vmatpush1.bf16.msra.mxu0 0
      %725 = vmatprep.subr.bf16.mxu0 0
      %726 = vmatpush1.bf16.msra.mxu0 0
      %727 = vmatprep.subr.bf16.mxu0 0
      %728 = vmatpush1.bf16.msra.mxu0 0
      %729 = vmatprep.subr.bf16.mxu0 0
      %730 = vmatpush1.bf16.msra.mxu0 0
      %731 = vmatprep.subr.bf16.mxu0 0
      %732 = vmatpush1.bf16.msra.mxu0 0
      %733 = vmatprep.subr.bf16.mxu0 0
      %734 = vmatpush1.bf16.msra.mxu0 0
      %735 = vmatprep.subr.bf16.mxu0 0
      %736 = vmatpush1.bf16.msra.mxu0 0
      %737 = vmatprep.subr.bf16.mxu0 0
      %738 = vmatpush1.bf16.msra.mxu0 0
      %739 = vmatprep.subr.bf16.mxu0 0
      %740 = vmatpush1.bf16.msra.mxu0 0
      %741 = vmatprep.subr.bf16.mxu0 0
      %742 = vmatpush1.bf16.msra.mxu0 0
      %743 = vmatprep.subr.bf16.mxu0 0
      %744 = vmatpush1.bf16.msra.mxu0 0
      %745 = vmatprep.mubr.bf16.mxu0 0
      %746 = vmatmul.mubr.bf16.gmra.mrb[0].mxu0 %v699
      %v747 = vpop.f32.mrb[0].mxu0
      %v748 = vadd.f32 %v648, %v747
      %v749 = vpop.f32.mrb[0].mxu0
      %v750 = vpop.f32.mrb[0].mxu0
      %v751 = vadd.f32 %v651, %v750
      %v752 = vpop.f32.mrb[0].mxu0
      %753 = vmatprep.mubr.bf16.mxu0 0
      %754 = vmatmul.mubr.bf16.gmra.mrb[0].mxu0 %v702
      %v755 = vpop.f32.mrb[0].mxu0
      %v756 = vadd.f32 %v656, %v755
      %v757 = vpop.f32.mrb[0].mxu0
      %v758 = vpop.f32.mrb[0].mxu0
      %v759 = vadd.f32 %v659, %v758
      %v760 = vpop.f32.mrb[0].mxu0
      %761 = vmatprep.mubr.bf16.mxu0 0
      %762 = vmatmul.mubr.bf16.gmra.mrb[0].mxu0 %v705
      %v763 = vpop.f32.mrb[0].mxu0
      %v764 = vadd.f32 %v664, %v763
      %v765 = vpop.f32.mrb[0].mxu0
      %v766 = vpop.f32.mrb[0].mxu0
      %v767 = vadd.f32 %v667, %v766
      %v768 = vpop.f32.mrb[0].mxu0
      %769 = vmatprep.mubr.bf16.mxu0 0
      %770 = vmatmul.mubr.bf16.gmra.mrb[0].mxu0 %v708
      %v771 = vpop.f32.mrb[0].mxu0
      %v772 = vadd.f32 %v672, %v771
      %v773 = vpop.f32.mrb[0].mxu0
      %v774 = vpop.f32.mrb[0].mxu0
      %v775 = vadd.f32 %v675, %v774
      %v776 = vpop.f32.mrb[0].mxu0
      %777 = vdwg.mxu0
      %v778 = vld [vmem:[#allocation2] sm:$0x1e]
      %v779 = vld [vmem:[#allocation2 + $0x8] sm:$0x1e]
      %v780 = vld [vmem:[#allocation2 + $0x10] sm:$0x1e]
      %v781 = vld [vmem:[#allocation2 + $0x18] sm:$0x1e]
      %v782 = vld [vmem:[#allocation2 + $0x20] sm:$0x1e]
      %v783 = vld [vmem:[#allocation2 + $0x28] sm:$0x1e]
      %v784 = vld [vmem:[#allocation2 + $0x30] sm:$0x1e]
      %v785 = vld [vmem:[#allocation2 + $0x38] sm:$0x1e]
      %v794 = vunpack.c.l.b16 %v778
      %v795 = vunpack.c.h.b16 %v778
      %v796 = vunpack.c.l.b16 %v779
      %v797 = vunpack.c.h.b16 %v779
      %v798 = vunpack.c.l.b16 %v780
      %v799 = vunpack.c.h.b16 %v780
      %v800 = vunpack.c.l.b16 %v781
      %v801 = vunpack.c.h.b16 %v781
      %v802 = vunpack.c.l.b16 %v782
      %v803 = vunpack.c.h.b16 %v782
      %v804 = vunpack.c.l.b16 %v783
      %v805 = vunpack.c.h.b16 %v783
      %v806 = vunpack.c.l.b16 %v784
      %v807 = vunpack.c.h.b16 %v784
      %v808 = vunpack.c.l.b16 %v785
      %v809 = vunpack.c.h.b16 %v785
      %v810 = vpack.c.b16 %v794, %v794
      %v811 = vpack.c.b16 %v795, %v795
      %v812 = vpack.c.b16 %v796, %v796
      %v813 = vpack.c.b16 %v797, %v797
      %v814 = vpack.c.b16 %v798, %v798
      %v815 = vpack.c.b16 %v799, %v799
      %v816 = vpack.c.b16 %v800, %v800
      %v817 = vpack.c.b16 %v801, %v801
      %v818 = vpack.c.b16 %v802, %v802
      %v819 = vpack.c.b16 %v803, %v803
      %v820 = vpack.c.b16 %v804, %v804
      %v821 = vpack.c.b16 %v805, %v805
      %v822 = vpack.c.b16 %v806, %v806
      %v823 = vpack.c.b16 %v807, %v807
      %v824 = vpack.c.b16 %v808, %v808
      %v825 = vpack.c.b16 %v809, %v809
      %vm826 = vcmask 1042432
      %vm827 = vcmask 1046532
      %vm828 = vmor %vm826, %vm827
      %v829 = vrot.slane %v810, 5
      %v830 = vrot.slane %v829, 4
      %v831 = vrot.slane %v811, 5
      %v832 = vsel %vm828, %v830, %v831
      %v833 = vrot.slane %v812, 5
      %v834 = vrot.slane %v833, 4
      %v835 = vrot.slane %v813, 5
      %v836 = vsel %vm828, %v834, %v835
      %v837 = vrot.slane %v814, 5
      %v838 = vrot.slane %v837, 4
      %v839 = vrot.slane %v815, 5
      %v840 = vsel %vm828, %v838, %v839
      %v841 = vrot.slane %v816, 5
      %v842 = vrot.slane %v841, 4
      %v843 = vrot.slane %v817, 5
      %v844 = vsel %vm828, %v842, %v843
      %v845 = vrot.slane %v818, 5
      %v846 = vrot.slane %v845, 4
      %v847 = vrot.slane %v819, 5
      %v848 = vsel %vm828, %v846, %v847
      %v849 = vrot.slane %v820, 5
      %v850 = vrot.slane %v849, 4
      %v851 = vrot.slane %v821, 5
      %v852 = vsel %vm828, %v850, %v851
      %v853 = vrot.slane %v822, 5
      %v854 = vrot.slane %v853, 4
      %v855 = vrot.slane %v823, 5
      %v856 = vsel %vm828, %v854, %v855
      %v857 = vrot.slane %v824, 5
      %v858 = vrot.slane %v857, 4
      %v859 = vrot.slane %v825, 5
      %v860 = vsel %vm828, %v858, %v859
      %s861 = scalar_lea.vmem %s3, 8
      %v862 = vld [vmem:[%s861] sm:$0xf]
      %v863 = vunpack.c.l.b16 %v832
      %v864 = vunpack.c.l.b16 %v836
      %v865 = vunpack.c.l.b16 %v840
      %v866 = vunpack.c.l.b16 %v844
      %v867 = vunpack.c.l.b16 %v848
      %v868 = vunpack.c.l.b16 %v852
      %v869 = vunpack.c.l.b16 %v856
      %v870 = vunpack.c.l.b16 %v860
      %v871 = vpack.c.b16 %v864, %v863
      %v872 = vpack.c.b16 %v866, %v865
      %v873 = vpack.c.b16 %v868, %v867
      %v874 = vpack.c.b16 %v870, %v869
      %v876 = vsel %vm308, %v871, 0
      %v879 = vsel %vm308, %v872, 0
      %v882 = vsel %vm308, %v873, 0
      %v885 = vsel %vm308, %v874, 0
      %v888 = vsel %vm609, %v862, 0
      %890 = vmatprep.subr.bf16.mxu0 0
      %891 = vmatpush1.bf16.msra.mxu0 %v888
      %892 = vmatprep.subr.bf16.mxu0 0
      %893 = vmatpush1.bf16.msra.mxu0 0
      %894 = vmatprep.subr.bf16.mxu0 0
      %895 = vmatpush1.bf16.msra.mxu0 0
      %896 = vmatprep.subr.bf16.mxu0 0
      %897 = vmatpush1.bf16.msra.mxu0 0
      %898 = vmatprep.subr.bf16.mxu0 0
      %899 = vmatpush1.bf16.msra.mxu0 0
      %900 = vmatprep.subr.bf16.mxu0 0
      %901 = vmatpush1.bf16.msra.mxu0 0
      %902 = vmatprep.subr.bf16.mxu0 0
      %903 = vmatpush1.bf16.msra.mxu0 0
      %904 = vmatprep.subr.bf16.mxu0 0
      %905 = vmatpush1.bf16.msra.mxu0 0
      %906 = vmatprep.subr.bf16.mxu0 0
      %907 = vmatpush1.bf16.msra.mxu0 0
      %908 = vmatprep.subr.bf16.mxu0 0
      %909 = vmatpush1.bf16.msra.mxu0 0
      %910 = vmatprep.subr.bf16.mxu0 0
      %911 = vmatpush1.bf16.msra.mxu0 0
      %912 = vmatprep.subr.bf16.mxu0 0
      %913 = vmatpush1.bf16.msra.mxu0 0
      %914 = vmatprep.subr.bf16.mxu0 0
      %915 = vmatpush1.bf16.msra.mxu0 0
      %916 = vmatprep.subr.bf16.mxu0 0
      %917 = vmatpush1.bf16.msra.mxu0 0
      %918 = vmatprep.subr.bf16.mxu0 0
      %919 = vmatpush1.bf16.msra.mxu0 0
      %920 = vmatprep.subr.bf16.mxu0 0
      %921 = vmatpush1.bf16.msra.mxu0 0
      %922 = vmatprep.mubr.bf16.mxu0 0
      %923 = vmatmul.mubr.bf16.gmra.mrb[0].mxu0 %v876
      %v924 = vpop.f32.mrb[0].mxu0
      %v925 = vadd.f32 0.0, %v924
      %v926 = vpop.f32.mrb[0].mxu0
      %v927 = vpop.f32.mrb[0].mxu0
      %v928 = vadd.f32 0.0, %v927
      %v929 = vpop.f32.mrb[0].mxu0
      %930 = vmatprep.mubr.bf16.mxu0 0
      %931 = vmatmul.mubr.bf16.gmra.mrb[0].mxu0 %v879
      %v932 = vpop.f32.mrb[0].mxu0
      %v933 = vadd.f32 0.0, %v932
      %v934 = vpop.f32.mrb[0].mxu0
      %v935 = vpop.f32.mrb[0].mxu0
      %v936 = vadd.f32 0.0, %v935
      %v937 = vpop.f32.mrb[0].mxu0
      %938 = vmatprep.mubr.bf16.mxu0 0
      %939 = vmatmul.mubr.bf16.gmra.mrb[0].mxu0 %v882
      %v940 = vpop.f32.mrb[0].mxu0
      %v941 = vadd.f32 0.0, %v940
      %v942 = vpop.f32.mrb[0].mxu0
      %v943 = vpop.f32.mrb[0].mxu0
      %v944 = vadd.f32 0.0, %v943
      %v945 = vpop.f32.mrb[0].mxu0
      %946 = vmatprep.mubr.bf16.mxu0 0
      %947 = vmatmul.mubr.bf16.gmra.mrb[0].mxu0 %v885
      %v948 = vpop.f32.mrb[0].mxu0
      %v949 = vadd.f32 0.0, %v948
      %v950 = vpop.f32.mrb[0].mxu0
      %v951 = vpop.f32.mrb[0].mxu0
      %v952 = vadd.f32 0.0, %v951
      %v953 = vpop.f32.mrb[0].mxu0
      %954 = vdwg.mxu0
      %v955 = vadd.f32 %v748, %v925
      %v956 = vadd.f32 %v751, %v928
      %v957 = vadd.f32 %v756, %v933
      %v958 = vadd.f32 %v759, %v936
      %v959 = vadd.f32 %v764, %v941
      %v960 = vadd.f32 %v767, %v944
      %v961 = vadd.f32 %v772, %v949
      %v962 = vadd.f32 %v775, %v952
      %v963 = vld [vmem:[%s383] sm:$0xf]
      %v964 = vld [vmem:[%s383 + $0x8] sm:$0xf]
      %v965 = vld [vmem:[%s383 + $0x10] sm:$0xf]
      %v966 = vld [vmem:[%s383 + $0x18] sm:$0xf]
      %v967 = vld [vmem:[%s383 + $0x20] sm:$0xf]
      %v968 = vld [vmem:[%s383 + $0x28] sm:$0xf]
      %v969 = vld [vmem:[%s383 + $0x30] sm:$0xf]
      %v970 = vld [vmem:[%s383 + $0x38] sm:$0xf]
      %s971 = scalar_lea.vmem %s3, 12
      %v972 = vld [vmem:[%s971] sm:$0xf]
      %v981 = vunpack.c.l.b16 %v963
      %v982 = vunpack.c.l.b16 %v964
      %v983 = vunpack.c.l.b16 %v965
      %v984 = vunpack.c.l.b16 %v966
      %v985 = vunpack.c.l.b16 %v967
      %v986 = vunpack.c.l.b16 %v968
      %v987 = vunpack.c.l.b16 %v969
      %v988 = vunpack.c.l.b16 %v970
      %v989 = vpack.c.b16 %v982, %v981
      %v990 = vpack.c.b16 %v984, %v983
      %v991 = vpack.c.b16 %v986, %v985
      %v992 = vpack.c.b16 %v988, %v987
      %v994 = vsel %vm308, %v989, 0
      %v997 = vsel %vm308, %v990, 0
      %v1000 = vsel %vm308, %v991, 0
      %v1003 = vsel %vm308, %v992, 0
      %v1006 = vsel %vm609, %v972, 0
      %1008 = vmatprep.subr.bf16.mxu0 0
      %1009 = vmatpush1.bf16.msra.mxu0 %v1006
      %1010 = vmatprep.subr.bf16.mxu0 0
      %1011 = vmatpush1.bf16.msra.mxu0 0
      %1012 = vmatprep.subr.bf16.mxu0 0
      %1013 = vmatpush1.bf16.msra.mxu0 0
      %1014 = vmatprep.subr.bf16.mxu0 0
      %1015 = vmatpush1.bf16.msra.mxu0 0
      %1016 = vmatprep.subr.bf16.mxu0 0
      %1017 = vmatpush1.bf16.msra.mxu0 0
      %1018 = vmatprep.subr.bf16.mxu0 0
      %1019 = vmatpush1.bf16.msra.mxu0 0
      %1020 = vmatprep.subr.bf16.mxu0 0
      %1021 = vmatpush1.bf16.msra.mxu0 0
      %1022 = vmatprep.subr.bf16.mxu0 0
      %1023 = vmatpush1.bf16.msra.mxu0 0
      %1024 = vmatprep.subr.bf16.mxu0 0
      %1025 = vmatpush1.bf16.msra.mxu0 0
      %1026 = vmatprep.subr.bf16.mxu0 0
      %1027 = vmatpush1.bf16.msra.mxu0 0
      %1028 = vmatprep.subr.bf16.mxu0 0
      %1029 = vmatpush1.bf16.msra.mxu0 0
      %1030 = vmatprep.subr.bf16.mxu0 0
      %1031 = vmatpush1.bf16.msra.mxu0 0
      %1032 = vmatprep.subr.bf16.mxu0 0
      %1033 = vmatpush1.bf16.msra.mxu0 0
      %1034 = vmatprep.subr.bf16.mxu0 0
      %1035 = vmatpush1.bf16.msra.mxu0 0
      %1036 = vmatprep.subr.bf16.mxu0 0
      %1037 = vmatpush1.bf16.msra.mxu0 0
      %1038 = vmatprep.subr.bf16.mxu0 0
      %1039 = vmatpush1.bf16.msra.mxu0 0
      %1040 = vmatprep.mubr.bf16.mxu0 0
      %1041 = vmatmul.mubr.bf16.gmra.mrb[0].mxu0 %v994
      %v1042 = vpop.f32.mrb[0].mxu0
      %v1043 = vadd.f32 0.0, %v1042
      %v1044 = vpop.f32.mrb[0].mxu0
      %v1045 = vpop.f32.mrb[0].mxu0
      %v1046 = vadd.f32 0.0, %v1045
      %v1047 = vpop.f32.mrb[0].mxu0
      %1048 = vmatprep.mubr.bf16.mxu0 0
      %1049 = vmatmul.mubr.bf16.gmra.mrb[0].mxu0 %v997
      %v1050 = vpop.f32.mrb[0].mxu0
      %v1051 = vadd.f32 0.0, %v1050
      %v1052 = vpop.f32.mrb[0].mxu0
      %v1053 = vpop.f32.mrb[0].mxu0
      %v1054 = vadd.f32 0.0, %v1053
      %v1055 = vpop.f32.mrb[0].mxu0
      %1056 = vmatprep.mubr.bf16.mxu0 0
      %1057 = vmatmul.mubr.bf16.gmra.mrb[0].mxu0 %v1000
      %v1058 = vpop.f32.mrb[0].mxu0
      %v1059 = vadd.f32 0.0, %v1058
      %v1060 = vpop.f32.mrb[0].mxu0
      %v1061 = vpop.f32.mrb[0].mxu0
      %v1062 = vadd.f32 0.0, %v1061
      %v1063 = vpop.f32.mrb[0].mxu0
      %1064 = vmatprep.mubr.bf16.mxu0 0
      %1065 = vmatmul.mubr.bf16.gmra.mrb[0].mxu0 %v1003
      %v1066 = vpop.f32.mrb[0].mxu0
      %v1067 = vadd.f32 0.0, %v1066
      %v1068 = vpop.f32.mrb[0].mxu0
      %v1069 = vpop.f32.mrb[0].mxu0
      %v1070 = vadd.f32 0.0, %v1069
      %v1071 = vpop.f32.mrb[0].mxu0
      %1072 = vdwg.mxu0
      %v1073 = vadd.f32 %v955, %v1043
      %v1074 = vadd.f32 %v956, %v1046
      %v1075 = vadd.f32 %v957, %v1051
      %v1076 = vadd.f32 %v958, %v1054
      %v1077 = vadd.f32 %v959, %v1059
      %v1078 = vadd.f32 %v960, %v1062
      %v1079 = vadd.f32 %v961, %v1067
      %v1080 = vadd.f32 %v962, %v1070
      %v1081 = vld [vmem:[%s383] sm:$0x1f]
      %v1082 = vld [vmem:[%s383 + $0x8] sm:$0x1f]
      %v1083 = vld [vmem:[%s383 + $0x10] sm:$0x1f]
      %v1084 = vld [vmem:[%s383 + $0x18] sm:$0x1f]
      %v1085 = vld [vmem:[%s383 + $0x20] sm:$0x1f]
      %v1086 = vld [vmem:[%s383 + $0x28] sm:$0x1f]
      %v1087 = vld [vmem:[%s383 + $0x30] sm:$0x1f]
      %v1088 = vld [vmem:[%s383 + $0x38] sm:$0x1f]
      %v1097 = vunpack.c.l.b16 %v1081
      %v1098 = vunpack.c.h.b16 %v1081
      %v1099 = vunpack.c.l.b16 %v1082
      %v1100 = vunpack.c.h.b16 %v1082
      %v1101 = vunpack.c.l.b16 %v1083
      %v1102 = vunpack.c.h.b16 %v1083
      %v1103 = vunpack.c.l.b16 %v1084
      %v1104 = vunpack.c.h.b16 %v1084
      %v1105 = vunpack.c.l.b16 %v1085
      %v1106 = vunpack.c.h.b16 %v1085
      %v1107 = vunpack.c.l.b16 %v1086
      %v1108 = vunpack.c.h.b16 %v1086
      %v1109 = vunpack.c.l.b16 %v1087
      %v1110 = vunpack.c.h.b16 %v1087
      %v1111 = vunpack.c.l.b16 %v1088
      %v1112 = vunpack.c.h.b16 %v1088
      %v1113 = vpack.c.b16 %v1097, %v1097
      %v1114 = vpack.c.b16 %v1098, %v1098
      %v1115 = vpack.c.b16 %v1099, %v1099
      %v1116 = vpack.c.b16 %v1100, %v1100
      %v1117 = vpack.c.b16 %v1101, %v1101
      %v1118 = vpack.c.b16 %v1102, %v1102
      %v1119 = vpack.c.b16 %v1103, %v1103
      %v1120 = vpack.c.b16 %v1104, %v1104
      %v1121 = vpack.c.b16 %v1105, %v1105
      %v1122 = vpack.c.b16 %v1106, %v1106
      %v1123 = vpack.c.b16 %v1107, %v1107
      %v1124 = vpack.c.b16 %v1108, %v1108
      %v1125 = vpack.c.b16 %v1109, %v1109
      %v1126 = vpack.c.b16 %v1110, %v1110
      %v1127 = vpack.c.b16 %v1111, %v1111
      %v1128 = vpack.c.b16 %v1112, %v1112
      %v1130 = vshrl.u32 %v1113, 16
      %v1132 = vrot.slane %v1130, 4
      %v1133 = vshll.u32 %v1113, 16
      %v1135 = vrot.slane %v1133, 5
      %v1136 = vor.u32 %v1132, %v1135
      %v1137 = vrot.slane %v1136, 4
      %v1139 = vshll.u32 %v1114, 16
      %v1141 = vrot.slane %v1139, 5
      %v1142 = vsel %vm470, %v1137, %v1141
      %v1144 = vshrl.u32 %v1115, 16
      %v1146 = vrot.slane %v1144, 4
      %v1147 = vshll.u32 %v1115, 16
      %v1149 = vrot.slane %v1147, 5
      %v1150 = vor.u32 %v1146, %v1149
      %v1151 = vrot.slane %v1150, 4
      %v1153 = vshll.u32 %v1116, 16
      %v1155 = vrot.slane %v1153, 5
      %v1156 = vsel %vm470, %v1151, %v1155
      %v1158 = vshrl.u32 %v1117, 16
      %v1160 = vrot.slane %v1158, 4
      %v1161 = vshll.u32 %v1117, 16
      %v1163 = vrot.slane %v1161, 5
      %v1164 = vor.u32 %v1160, %v1163
      %v1165 = vrot.slane %v1164, 4
      %v1167 = vshll.u32 %v1118, 16
      %v1169 = vrot.slane %v1167, 5
      %v1170 = vsel %vm470, %v1165, %v1169
      %v1172 = vshrl.u32 %v1119, 16
      %v1174 = vrot.slane %v1172, 4
      %v1175 = vshll.u32 %v1119, 16
      %v1177 = vrot.slane %v1175, 5
      %v1178 = vor.u32 %v1174, %v1177
      %v1179 = vrot.slane %v1178, 4
      %v1181 = vshll.u32 %v1120, 16
      %v1183 = vrot.slane %v1181, 5
      %v1184 = vsel %vm470, %v1179, %v1183
      %v1186 = vshrl.u32 %v1121, 16
      %v1188 = vrot.slane %v1186, 4
      %v1189 = vshll.u32 %v1121, 16
      %v1191 = vrot.slane %v1189, 5
      %v1192 = vor.u32 %v1188, %v1191
      %v1193 = vrot.slane %v1192, 4
      %v1195 = vshll.u32 %v1122, 16
      %v1197 = vrot.slane %v1195, 5
      %v1198 = vsel %vm470, %v1193, %v1197
      %v1200 = vshrl.u32 %v1123, 16
      %v1202 = vrot.slane %v1200, 4
      %v1203 = vshll.u32 %v1123, 16
      %v1205 = vrot.slane %v1203, 5
      %v1206 = vor.u32 %v1202, %v1205
      %v1207 = vrot.slane %v1206, 4
      %v1209 = vshll.u32 %v1124, 16
      %v1211 = vrot.slane %v1209, 5
      %v1212 = vsel %vm470, %v1207, %v1211
      %v1214 = vshrl.u32 %v1125, 16
      %v1216 = vrot.slane %v1214, 4
      %v1217 = vshll.u32 %v1125, 16
      %v1219 = vrot.slane %v1217, 5
      %v1220 = vor.u32 %v1216, %v1219
      %v1221 = vrot.slane %v1220, 4
      %v1223 = vshll.u32 %v1126, 16
      %v1225 = vrot.slane %v1223, 5
      %v1226 = vsel %vm470, %v1221, %v1225
      %v1228 = vshrl.u32 %v1127, 16
      %v1230 = vrot.slane %v1228, 4
      %v1231 = vshll.u32 %v1127, 16
      %v1233 = vrot.slane %v1231, 5
      %v1234 = vor.u32 %v1230, %v1233
      %v1235 = vrot.slane %v1234, 4
      %v1237 = vshll.u32 %v1128, 16
      %v1239 = vrot.slane %v1237, 5
      %v1240 = vsel %vm470, %v1235, %v1239
      %s1241 = scalar_lea.vmem %s3, 16
      %v1242 = vld [vmem:[%s1241] sm:$0xf]
      %v1243 = vunpack.c.l.b16 %v1142
      %v1244 = vunpack.c.l.b16 %v1156
      %v1245 = vunpack.c.l.b16 %v1170
      %v1246 = vunpack.c.l.b16 %v1184
      %v1247 = vunpack.c.l.b16 %v1198
      %v1248 = vunpack.c.l.b16 %v1212
      %v1249 = vunpack.c.l.b16 %v1226
      %v1250 = vunpack.c.l.b16 %v1240
      %v1251 = vpack.c.b16 %v1244, %v1243
      %v1252 = vpack.c.b16 %v1246, %v1245
      %v1253 = vpack.c.b16 %v1248, %v1247
      %v1254 = vpack.c.b16 %v1250, %v1249
      %v1256 = vsel %vm308, %v1251, 0
      %v1259 = vsel %vm308, %v1252, 0
      %v1262 = vsel %vm308, %v1253, 0
      %v1265 = vsel %vm308, %v1254, 0
      %v1268 = vsel %vm609, %v1242, 0
      %1270 = vmatprep.subr.bf16.mxu0 0
      %1271 = vmatpush1.bf16.msra.mxu0 %v1268
      %1272 = vmatprep.subr.bf16.mxu0 0
      %1273 = vmatpush1.bf16.msra.mxu0 0
      %1274 = vmatprep.subr.bf16.mxu0 0
      %1275 = vmatpush1.bf16.msra.mxu0 0
      %1276 = vmatprep.subr.bf16.mxu0 0
      %1277 = vmatpush1.bf16.msra.mxu0 0
      %1278 = vmatprep.subr.bf16.mxu0 0
      %1279 = vmatpush1.bf16.msra.mxu0 0
      %1280 = vmatprep.subr.bf16.mxu0 0
      %1281 = vmatpush1.bf16.msra.mxu0 0
      %1282 = vmatprep.subr.bf16.mxu0 0
      %1283 = vmatpush1.bf16.msra.mxu0 0
      %1284 = vmatprep.subr.bf16.mxu0 0
      %1285 = vmatpush1.bf16.msra.mxu0 0
      %1286 = vmatprep.subr.bf16.mxu0 0
      %1287 = vmatpush1.bf16.msra.mxu0 0
      %1288 = vmatprep.subr.bf16.mxu0 0
      %1289 = vmatpush1.bf16.msra.mxu0 0
      %1290 = vmatprep.subr.bf16.mxu0 0
      %1291 = vmatpush1.bf16.msra.mxu0 0
      %1292 = vmatprep.subr.bf16.mxu0 0
      %1293 = vmatpush1.bf16.msra.mxu0 0
      %1294 = vmatprep.subr.bf16.mxu0 0
      %1295 = vmatpush1.bf16.msra.mxu0 0
      %1296 = vmatprep.subr.bf16.mxu0 0
      %1297 = vmatpush1.bf16.msra.mxu0 0
      %1298 = vmatprep.subr.bf16.mxu0 0
      %1299 = vmatpush1.bf16.msra.mxu0 0
      %1300 = vmatprep.subr.bf16.mxu0 0
      %1301 = vmatpush1.bf16.msra.mxu0 0
      %1302 = vmatprep.mubr.bf16.mxu0 0
      %1303 = vmatmul.mubr.bf16.gmra.mrb[0].mxu0 %v1256
      %v1304 = vpop.f32.mrb[0].mxu0
      %v1305 = vadd.f32 0.0, %v1304
      %v1306 = vpop.f32.mrb[0].mxu0
      %v1307 = vpop.f32.mrb[0].mxu0
      %v1308 = vadd.f32 0.0, %v1307
      %v1309 = vpop.f32.mrb[0].mxu0
      %1310 = vmatprep.mubr.bf16.mxu0 0
      %1311 = vmatmul.mubr.bf16.gmra.mrb[0].mxu0 %v1259
      %v1312 = vpop.f32.mrb[0].mxu0
      %v1313 = vadd.f32 0.0, %v1312
      %v1314 = vpop.f32.mrb[0].mxu0
      %v1315 = vpop.f32.mrb[0].mxu0
      %v1316 = vadd.f32 0.0, %v1315
      %v1317 = vpop.f32.mrb[0].mxu0
      %1318 = vmatprep.mubr.bf16.mxu0 0
      %1319 = vmatmul.mubr.bf16.gmra.mrb[0].mxu0 %v1262
      %v1320 = vpop.f32.mrb[0].mxu0
      %v1321 = vadd.f32 0.0, %v1320
      %v1322 = vpop.f32.mrb[0].mxu0
      %v1323 = vpop.f32.mrb[0].mxu0
      %v1324 = vadd.f32 0.0, %v1323
      %v1325 = vpop.f32.mrb[0].mxu0
      %1326 = vmatprep.mubr.bf16.mxu0 0
      %1327 = vmatmul.mubr.bf16.gmra.mrb[0].mxu0 %v1265
      %v1328 = vpop.f32.mrb[0].mxu0
      %v1329 = vadd.f32 0.0, %v1328
      %v1330 = vpop.f32.mrb[0].mxu0
      %v1331 = vpop.f32.mrb[0].mxu0
      %v1332 = vadd.f32 0.0, %v1331
      %v1333 = vpop.f32.mrb[0].mxu0
      %1334 = vdwg.mxu0
      %v1335 = vadd.f32 %v1073, %v1305
      %v1336 = vadd.f32 %v1074, %v1308
      %v1337 = vadd.f32 %v1075, %v1313
      %v1338 = vadd.f32 %v1076, %v1316
      %v1339 = vadd.f32 %v1077, %v1321
      %v1340 = vadd.f32 %v1078, %v1324
      %v1341 = vadd.f32 %v1079, %v1329
      %v1342 = vadd.f32 %v1080, %v1332
      %v1343 = vld [vmem:[%s383] sm:$0x1e]
      %v1344 = vld [vmem:[%s383 + $0x8] sm:$0x1e]
      %v1345 = vld [vmem:[%s383 + $0x10] sm:$0x1e]
      %v1346 = vld [vmem:[%s383 + $0x18] sm:$0x1e]
      %v1347 = vld [vmem:[%s383 + $0x20] sm:$0x1e]
      %v1348 = vld [vmem:[%s383 + $0x28] sm:$0x1e]
      %v1349 = vld [vmem:[%s383 + $0x30] sm:$0x1e]
      %v1350 = vld [vmem:[%s383 + $0x38] sm:$0x1e]
      %v1359 = vunpack.c.l.b16 %v1343
      %v1360 = vunpack.c.h.b16 %v1343
      %v1361 = vunpack.c.l.b16 %v1344
      %v1362 = vunpack.c.h.b16 %v1344
      %v1363 = vunpack.c.l.b16 %v1345
      %v1364 = vunpack.c.h.b16 %v1345
      %v1365 = vunpack.c.l.b16 %v1346
      %v1366 = vunpack.c.h.b16 %v1346
      %v1367 = vunpack.c.l.b16 %v1347
      %v1368 = vunpack.c.h.b16 %v1347
      %v1369 = vunpack.c.l.b16 %v1348
      %v1370 = vunpack.c.h.b16 %v1348
      %v1371 = vunpack.c.l.b16 %v1349
      %v1372 = vunpack.c.h.b16 %v1349
      %v1373 = vunpack.c.l.b16 %v1350
      %v1374 = vunpack.c.h.b16 %v1350
      %v1375 = vpack.c.b16 %v1359, %v1359
      %v1376 = vpack.c.b16 %v1360, %v1360
      %v1377 = vpack.c.b16 %v1361, %v1361
      %v1378 = vpack.c.b16 %v1362, %v1362
      %v1379 = vpack.c.b16 %v1363, %v1363
      %v1380 = vpack.c.b16 %v1364, %v1364
      %v1381 = vpack.c.b16 %v1365, %v1365
      %v1382 = vpack.c.b16 %v1366, %v1366
      %v1383 = vpack.c.b16 %v1367, %v1367
      %v1384 = vpack.c.b16 %v1368, %v1368
      %v1385 = vpack.c.b16 %v1369, %v1369
      %v1386 = vpack.c.b16 %v1370, %v1370
      %v1387 = vpack.c.b16 %v1371, %v1371
      %v1388 = vpack.c.b16 %v1372, %v1372
      %v1389 = vpack.c.b16 %v1373, %v1373
      %v1390 = vpack.c.b16 %v1374, %v1374
      %v1391 = vrot.slane %v1375, 5
      %v1392 = vrot.slane %v1391, 4
      %v1393 = vrot.slane %v1376, 5
      %v1394 = vsel %vm828, %v1392, %v1393
      %v1395 = vrot.slane %v1377, 5
      %v1396 = vrot.slane %v1395, 4
      %v1397 = vrot.slane %v1378, 5
      %v1398 = vsel %vm828, %v1396, %v1397
      %v1399 = vrot.slane %v1379, 5
      %v1400 = vrot.slane %v1399, 4
      %v1401 = vrot.slane %v1380, 5
      %v1402 = vsel %vm828, %v1400, %v1401
      %v1403 = vrot.slane %v1381, 5
      %v1404 = vrot.slane %v1403, 4
      %v1405 = vrot.slane %v1382, 5
      %v1406 = vsel %vm828, %v1404, %v1405
      %v1407 = vrot.slane %v1383, 5
      %v1408 = vrot.slane %v1407, 4
      %v1409 = vrot.slane %v1384, 5
      %v1410 = vsel %vm828, %v1408, %v1409
      %v1411 = vrot.slane %v1385, 5
      %v1412 = vrot.slane %v1411, 4
      %v1413 = vrot.slane %v1386, 5
      %v1414 = vsel %vm828, %v1412, %v1413
      %v1415 = vrot.slane %v1387, 5
      %v1416 = vrot.slane %v1415, 4
      %v1417 = vrot.slane %v1388, 5
      %v1418 = vsel %vm828, %v1416, %v1417
      %v1419 = vrot.slane %v1389, 5
      %v1420 = vrot.slane %v1419, 4
      %v1421 = vrot.slane %v1390, 5
      %v1422 = vsel %vm828, %v1420, %v1421
      %s1423 = scalar_lea.vmem %s3, 20
      %v1424 = vld [vmem:[%s1423] sm:$0xf]
      %v1425 = vunpack.c.l.b16 %v1394
      %v1426 = vunpack.c.l.b16 %v1398
      %v1427 = vunpack.c.l.b16 %v1402
      %v1428 = vunpack.c.l.b16 %v1406
      %v1429 = vunpack.c.l.b16 %v1410
      %v1430 = vunpack.c.l.b16 %v1414
      %v1431 = vunpack.c.l.b16 %v1418
      %v1432 = vunpack.c.l.b16 %v1422
      %v1433 = vpack.c.b16 %v1426, %v1425
      %v1434 = vpack.c.b16 %v1428, %v1427
      %v1435 = vpack.c.b16 %v1430, %v1429
      %v1436 = vpack.c.b16 %v1432, %v1431
      %v1438 = vsel %vm308, %v1433, 0
      %v1441 = vsel %vm308, %v1434, 0
      %v1444 = vsel %vm308, %v1435, 0
      %v1447 = vsel %vm308, %v1436, 0
      %v1450 = vsel %vm609, %v1424, 0
      %1452 = vmatprep.subr.bf16.mxu0 0
      %1453 = vmatpush1.bf16.msra.mxu0 %v1450
      %1454 = vmatprep.subr.bf16.mxu0 0
      %1455 = vmatpush1.bf16.msra.mxu0 0
      %1456 = vmatprep.subr.bf16.mxu0 0
      %1457 = vmatpush1.bf16.msra.mxu0 0
      %1458 = vmatprep.subr.bf16.mxu0 0
      %1459 = vmatpush1.bf16.msra.mxu0 0
      %1460 = vmatprep.subr.bf16.mxu0 0
      %1461 = vmatpush1.bf16.msra.mxu0 0
      %1462 = vmatprep.subr.bf16.mxu0 0
      %1463 = vmatpush1.bf16.msra.mxu0 0
      %1464 = vmatprep.subr.bf16.mxu0 0
      %1465 = vmatpush1.bf16.msra.mxu0 0
      %1466 = vmatprep.subr.bf16.mxu0 0
      %1467 = vmatpush1.bf16.msra.mxu0 0
      %1468 = vmatprep.subr.bf16.mxu0 0
      %1469 = vmatpush1.bf16.msra.mxu0 0
      %1470 = vmatprep.subr.bf16.mxu0 0
      %1471 = vmatpush1.bf16.msra.mxu0 0
      %1472 = vmatprep.subr.bf16.mxu0 0
      %1473 = vmatpush1.bf16.msra.mxu0 0
      %1474 = vmatprep.subr.bf16.mxu0 0
      %1475 = vmatpush1.bf16.msra.mxu0 0
      %1476 = vmatprep.subr.bf16.mxu0 0
      %1477 = vmatpush1.bf16.msra.mxu0 0
      %1478 = vmatprep.subr.bf16.mxu0 0
      %1479 = vmatpush1.bf16.msra.mxu0 0
      %1480 = vmatprep.subr.bf16.mxu0 0
      %1481 = vmatpush1.bf16.msra.mxu0 0
      %1482 = vmatprep.subr.bf16.mxu0 0
      %1483 = vmatpush1.bf16.msra.mxu0 0
      %1484 = vmatprep.mubr.bf16.mxu0 0
      %1485 = vmatmul.mubr.bf16.gmra.mrb[0].mxu0 %v1438
      %v1486 = vpop.f32.mrb[0].mxu0
      %v1487 = vadd.f32 0.0, %v1486
      %v1488 = vpop.f32.mrb[0].mxu0
      %v1489 = vpop.f32.mrb[0].mxu0
      %v1490 = vadd.f32 0.0, %v1489
      %v1491 = vpop.f32.mrb[0].mxu0
      %1492 = vmatprep.mubr.bf16.mxu0 0
      %1493 = vmatmul.mubr.bf16.gmra.mrb[0].mxu0 %v1441
      %v1494 = vpop.f32.mrb[0].mxu0
      %v1495 = vadd.f32 0.0, %v1494
      %v1496 = vpop.f32.mrb[0].mxu0
      %v1497 = vpop.f32.mrb[0].mxu0
      %v1498 = vadd.f32 0.0, %v1497
      %v1499 = vpop.f32.mrb[0].mxu0
      %1500 = vmatprep.mubr.bf16.mxu0 0
      %1501 = vmatmul.mubr.bf16.gmra.mrb[0].mxu0 %v1444
      %v1502 = vpop.f32.mrb[0].mxu0
      %v1503 = vadd.f32 0.0, %v1502
      %v1504 = vpop.f32.mrb[0].mxu0
      %v1505 = vpop.f32.mrb[0].mxu0
      %v1506 = vadd.f32 0.0, %v1505
      %v1507 = vpop.f32.mrb[0].mxu0
      %1508 = vmatprep.mubr.bf16.mxu0 0
      %1509 = vmatmul.mubr.bf16.gmra.mrb[0].mxu0 %v1447
      %v1510 = vpop.f32.mrb[0].mxu0
      %v1511 = vadd.f32 0.0, %v1510
      %v1512 = vpop.f32.mrb[0].mxu0
      %v1513 = vpop.f32.mrb[0].mxu0
      %v1514 = vadd.f32 0.0, %v1513
      %v1515 = vpop.f32.mrb[0].mxu0
      %1516 = vdwg.mxu0
      %v1517 = vadd.f32 %v1335, %v1487
      %v1518 = vadd.f32 %v1336, %v1490
      %v1519 = vadd.f32 %v1337, %v1495
      %v1520 = vadd.f32 %v1338, %v1498
      %v1521 = vadd.f32 %v1339, %v1503
      %v1522 = vadd.f32 %v1340, %v1506
      %v1523 = vadd.f32 %v1341, %v1511
      %v1524 = vadd.f32 %v1342, %v1514
      %s1525 = scalar_lea.vmem [#allocation2], 16
      %v1526 = vld [vmem:[%s1525] sm:$0xf]
      %v1527 = vld [vmem:[%s1525 + $0x8] sm:$0xf]
      %v1528 = vld [vmem:[%s1525 + $0x10] sm:$0xf]
      %v1529 = vld [vmem:[%s1525 + $0x18] sm:$0xf]
      %v1530 = vld [vmem:[%s1525 + $0x20] sm:$0xf]
      %v1531 = vld [vmem:[%s1525 + $0x28] sm:$0xf]
      %v1532 = vld [vmem:[%s1525 + $0x30] sm:$0xf]
      %v1533 = vld [vmem:[%s1525 + $0x38] sm:$0xf]
      %s1534 = scalar_lea.vmem %s3, 24
      %v1535 = vld [vmem:[%s1534] sm:$0xf]
      %v1544 = vunpack.c.l.b16 %v1526
      %v1545 = vunpack.c.l.b16 %v1527
      %v1546 = vunpack.c.l.b16 %v1528
      %v1547 = vunpack.c.l.b16 %v1529
      %v1548 = vunpack.c.l.b16 %v1530
      %v1549 = vunpack.c.l.b16 %v1531
      %v1550 = vunpack.c.l.b16 %v1532
      %v1551 = vunpack.c.l.b16 %v1533
      %v1552 = vpack.c.b16 %v1545, %v1544
      %v1553 = vpack.c.b16 %v1547, %v1546
      %v1554 = vpack.c.b16 %v1549, %v1548
      %v1555 = vpack.c.b16 %v1551, %v1550
      %v1557 = vsel %vm308, %v1552, 0
      %v1560 = vsel %vm308, %v1553, 0
      %v1563 = vsel %vm308, %v1554, 0
      %v1566 = vsel %vm308, %v1555, 0
      %v1569 = vsel %vm609, %v1535, 0
      %1571 = vmatprep.subr.bf16.mxu0 0
      %1572 = vmatpush1.bf16.msra.mxu0 %v1569
      %1573 = vmatprep.subr.bf16.mxu0 0
      %1574 = vmatpush1.bf16.msra.mxu0 0
      %1575 = vmatprep.subr.bf16.mxu0 0
      %1576 = vmatpush1.bf16.msra.mxu0 0
      %1577 = vmatprep.subr.bf16.mxu0 0
      %1578 = vmatpush1.bf16.msra.mxu0 0
      %1579 = vmatprep.subr.bf16.mxu0 0
      %1580 = vmatpush1.bf16.msra.mxu0 0
      %1581 = vmatprep.subr.bf16.mxu0 0
      %1582 = vmatpush1.bf16.msra.mxu0 0
      %1583 = vmatprep.subr.bf16.mxu0 0
      %1584 = vmatpush1.bf16.msra.mxu0 0
      %1585 = vmatprep.subr.bf16.mxu0 0
      %1586 = vmatpush1.bf16.msra.mxu0 0
      %1587 = vmatprep.subr.bf16.mxu0 0
      %1588 = vmatpush1.bf16.msra.mxu0 0
      %1589 = vmatprep.subr.bf16.mxu0 0
      %1590 = vmatpush1.bf16.msra.mxu0 0
      %1591 = vmatprep.subr.bf16.mxu0 0
      %1592 = vmatpush1.bf16.msra.mxu0 0
      %1593 = vmatprep.subr.bf16.mxu0 0
      %1594 = vmatpush1.bf16.msra.mxu0 0
      %1595 = vmatprep.subr.bf16.mxu0 0
      %1596 = vmatpush1.bf16.msra.mxu0 0
      %1597 = vmatprep.subr.bf16.mxu0 0
      %1598 = vmatpush1.bf16.msra.mxu0 0
      %1599 = vmatprep.subr.bf16.mxu0 0
      %1600 = vmatpush1.bf16.msra.mxu0 0
      %1601 = vmatprep.subr.bf16.mxu0 0
      %1602 = vmatpush1.bf16.msra.mxu0 0
      %1603 = vmatprep.mubr.bf16.mxu0 0
      %1604 = vmatmul.mubr.bf16.gmra.mrb[0].mxu0 %v1557
      %v1605 = vpop.f32.mrb[0].mxu0
      %v1606 = vadd.f32 0.0, %v1605
      %v1607 = vpop.f32.mrb[0].mxu0
      %v1608 = vpop.f32.mrb[0].mxu0
      %v1609 = vadd.f32 0.0, %v1608
      %v1610 = vpop.f32.mrb[0].mxu0
      %1611 = vmatprep.mubr.bf16.mxu0 0
      %1612 = vmatmul.mubr.bf16.gmra.mrb[0].mxu0 %v1560
      %v1613 = vpop.f32.mrb[0].mxu0
      %v1614 = vadd.f32 0.0, %v1613
      %v1615 = vpop.f32.mrb[0].mxu0
      %v1616 = vpop.f32.mrb[0].mxu0
      %v1617 = vadd.f32 0.0, %v1616
      %v1618 = vpop.f32.mrb[0].mxu0
      %1619 = vmatprep.mubr.bf16.mxu0 0
      %1620 = vmatmul.mubr.bf16.gmra.mrb[0].mxu0 %v1563
      %v1621 = vpop.f32.mrb[0].mxu0
      %v1622 = vadd.f32 0.0, %v1621
      %v1623 = vpop.f32.mrb[0].mxu0
      %v1624 = vpop.f32.mrb[0].mxu0
      %v1625 = vadd.f32 0.0, %v1624
      %v1626 = vpop.f32.mrb[0].mxu0
      %1627 = vmatprep.mubr.bf16.mxu0 0
      %1628 = vmatmul.mubr.bf16.gmra.mrb[0].mxu0 %v1566
      %v1629 = vpop.f32.mrb[0].mxu0
      %v1630 = vadd.f32 0.0, %v1629
      %v1631 = vpop.f32.mrb[0].mxu0
      %v1632 = vpop.f32.mrb[0].mxu0
      %v1633 = vadd.f32 0.0, %v1632
      %v1634 = vpop.f32.mrb[0].mxu0
      %1635 = vdwg.mxu0
      %v1636 = vadd.f32 %v1517, %v1606
      %v1637 = vadd.f32 %v1518, %v1609
      %v1638 = vadd.f32 %v1519, %v1614
      %v1639 = vadd.f32 %v1520, %v1617
      %v1640 = vadd.f32 %v1521, %v1622
      %v1641 = vadd.f32 %v1522, %v1625
      %v1642 = vadd.f32 %v1523, %v1630
      %v1643 = vadd.f32 %v1524, %v1633
      %v1644 = vld [vmem:[%s1525] sm:$0x1f]
      %v1645 = vld [vmem:[%s1525 + $0x8] sm:$0x1f]
      %v1646 = vld [vmem:[%s1525 + $0x10] sm:$0x1f]
      %v1647 = vld [vmem:[%s1525 + $0x18] sm:$0x1f]
      %v1648 = vld [vmem:[%s1525 + $0x20] sm:$0x1f]
      %v1649 = vld [vmem:[%s1525 + $0x28] sm:$0x1f]
      %v1650 = vld [vmem:[%s1525 + $0x30] sm:$0x1f]
      %v1651 = vld [vmem:[%s1525 + $0x38] sm:$0x1f]
      %v1660 = vunpack.c.l.b16 %v1644
      %v1661 = vunpack.c.h.b16 %v1644
      %v1662 = vunpack.c.l.b16 %v1645
      %v1663 = vunpack.c.h.b16 %v1645
      %v1664 = vunpack.c.l.b16 %v1646
      %v1665 = vunpack.c.h.b16 %v1646
      %v1666 = vunpack.c.l.b16 %v1647
      %v1667 = vunpack.c.h.b16 %v1647
      %v1668 = vunpack.c.l.b16 %v1648
      %v1669 = vunpack.c.h.b16 %v1648
      %v1670 = vunpack.c.l.b16 %v1649
      %v1671 = vunpack.c.h.b16 %v1649
      %v1672 = vunpack.c.l.b16 %v1650
      %v1673 = vunpack.c.h.b16 %v1650
      %v1674 = vunpack.c.l.b16 %v1651
      %v1675 = vunpack.c.h.b16 %v1651
      %v1676 = vpack.c.b16 %v1660, %v1660
      %v1677 = vpack.c.b16 %v1661, %v1661
      %v1678 = vpack.c.b16 %v1662, %v1662
      %v1679 = vpack.c.b16 %v1663, %v1663
      %v1680 = vpack.c.b16 %v1664, %v1664
      %v1681 = vpack.c.b16 %v1665, %v1665
      %v1682 = vpack.c.b16 %v1666, %v1666
      %v1683 = vpack.c.b16 %v1667, %v1667
      %v1684 = vpack.c.b16 %v1668, %v1668
      %v1685 = vpack.c.b16 %v1669, %v1669
      %v1686 = vpack.c.b16 %v1670, %v1670
      %v1687 = vpack.c.b16 %v1671, %v1671
      %v1688 = vpack.c.b16 %v1672, %v1672
      %v1689 = vpack.c.b16 %v1673, %v1673
      %v1690 = vpack.c.b16 %v1674, %v1674
      %v1691 = vpack.c.b16 %v1675, %v1675
      %v1693 = vshrl.u32 %v1676, 16
      %v1695 = vrot.slane %v1693, 4
      %v1696 = vshll.u32 %v1676, 16
      %v1698 = vrot.slane %v1696, 5
      %v1699 = vor.u32 %v1695, %v1698
      %v1700 = vrot.slane %v1699, 4
      %v1702 = vshll.u32 %v1677, 16
      %v1704 = vrot.slane %v1702, 5
      %v1705 = vsel %vm470, %v1700, %v1704
      %v1707 = vshrl.u32 %v1678, 16
      %v1709 = vrot.slane %v1707, 4
      %v1710 = vshll.u32 %v1678, 16
      %v1712 = vrot.slane %v1710, 5
      %v1713 = vor.u32 %v1709, %v1712
      %v1714 = vrot.slane %v1713, 4
      %v1716 = vshll.u32 %v1679, 16
      %v1718 = vrot.slane %v1716, 5
      %v1719 = vsel %vm470, %v1714, %v1718
      %v1721 = vshrl.u32 %v1680, 16
      %v1723 = vrot.slane %v1721, 4
      %v1724 = vshll.u32 %v1680, 16
      %v1726 = vrot.slane %v1724, 5
      %v1727 = vor.u32 %v1723, %v1726
      %v1728 = vrot.slane %v1727, 4
      %v1730 = vshll.u32 %v1681, 16
      %v1732 = vrot.slane %v1730, 5
      %v1733 = vsel %vm470, %v1728, %v1732
      %v1735 = vshrl.u32 %v1682, 16
      %v1737 = vrot.slane %v1735, 4
      %v1738 = vshll.u32 %v1682, 16
      %v1740 = vrot.slane %v1738, 5
      %v1741 = vor.u32 %v1737, %v1740
      %v1742 = vrot.slane %v1741, 4
      %v1744 = vshll.u32 %v1683, 16
      %v1746 = vrot.slane %v1744, 5
      %v1747 = vsel %vm470, %v1742, %v1746
      %v1749 = vshrl.u32 %v1684, 16
      %v1751 = vrot.slane %v1749, 4
      %v1752 = vshll.u32 %v1684, 16
      %v1754 = vrot.slane %v1752, 5
      %v1755 = vor.u32 %v1751, %v1754
      %v1756 = vrot.slane %v1755, 4
      %v1758 = vshll.u32 %v1685, 16
      %v1760 = vrot.slane %v1758, 5
      %v1761 = vsel %vm470, %v1756, %v1760
      %v1763 = vshrl.u32 %v1686, 16
      %v1765 = vrot.slane %v1763, 4
      %v1766 = vshll.u32 %v1686, 16
      %v1768 = vrot.slane %v1766, 5
      %v1769 = vor.u32 %v1765, %v1768
      %v1770 = vrot.slane %v1769, 4
      %v1772 = vshll.u32 %v1687, 16
      %v1774 = vrot.slane %v1772, 5
      %v1775 = vsel %vm470, %v1770, %v1774
      %v1777 = vshrl.u32 %v1688, 16
      %v1779 = vrot.slane %v1777, 4
      %v1780 = vshll.u32 %v1688, 16
      %v1782 = vrot.slane %v1780, 5
      %v1783 = vor.u32 %v1779, %v1782
      %v1784 = vrot.slane %v1783, 4
      %v1786 = vshll.u32 %v1689, 16
      %v1788 = vrot.slane %v1786, 5
      %v1789 = vsel %vm470, %v1784, %v1788
      %v1791 = vshrl.u32 %v1690, 16
      %v1793 = vrot.slane %v1791, 4
      %v1794 = vshll.u32 %v1690, 16
      %v1796 = vrot.slane %v1794, 5
      %v1797 = vor.u32 %v1793, %v1796
      %v1798 = vrot.slane %v1797, 4
      %v1800 = vshll.u32 %v1691, 16
      %v1802 = vrot.slane %v1800, 5
      %v1803 = vsel %vm470, %v1798, %v1802
      %s1804 = scalar_lea.vmem %s3, 28
      %v1805 = vld [vmem:[%s1804] sm:$0xf]
      %v1806 = vunpack.c.l.b16 %v1705
      %v1807 = vunpack.c.l.b16 %v1719
      %v1808 = vunpack.c.l.b16 %v1733
      %v1809 = vunpack.c.l.b16 %v1747
      %v1810 = vunpack.c.l.b16 %v1761
      %v1811 = vunpack.c.l.b16 %v1775
      %v1812 = vunpack.c.l.b16 %v1789
      %v1813 = vunpack.c.l.b16 %v1803
      %v1814 = vpack.c.b16 %v1807, %v1806
      %v1815 = vpack.c.b16 %v1809, %v1808
      %v1816 = vpack.c.b16 %v1811, %v1810
      %v1817 = vpack.c.b16 %v1813, %v1812
      %v1819 = vsel %vm308, %v1814, 0
      %v1822 = vsel %vm308, %v1815, 0
      %v1825 = vsel %vm308, %v1816, 0
      %v1828 = vsel %vm308, %v1817, 0
      %v1831 = vsel %vm609, %v1805, 0
      %1833 = vmatprep.subr.bf16.mxu0 0
      %1834 = vmatpush1.bf16.msra.mxu0 %v1831
      %1835 = vmatprep.subr.bf16.mxu0 0
      %1836 = vmatpush1.bf16.msra.mxu0 0
      %1837 = vmatprep.subr.bf16.mxu0 0
      %1838 = vmatpush1.bf16.msra.mxu0 0
      %1839 = vmatprep.subr.bf16.mxu0 0
      %1840 = vmatpush1.bf16.msra.mxu0 0
      %1841 = vmatprep.subr.bf16.mxu0 0
      %1842 = vmatpush1.bf16.msra.mxu0 0
      %1843 = vmatprep.subr.bf16.mxu0 0
      %1844 = vmatpush1.bf16.msra.mxu0 0
      %1845 = vmatprep.subr.bf16.mxu0 0
      %1846 = vmatpush1.bf16.msra.mxu0 0
      %1847 = vmatprep.subr.bf16.mxu0 0
      %1848 = vmatpush1.bf16.msra.mxu0 0
      %1849 = vmatprep.subr.bf16.mxu0 0
      %1850 = vmatpush1.bf16.msra.mxu0 0
      %1851 = vmatprep.subr.bf16.mxu0 0
      %1852 = vmatpush1.bf16.msra.mxu0 0
      %1853 = vmatprep.subr.bf16.mxu0 0
      %1854 = vmatpush1.bf16.msra.mxu0 0
      %1855 = vmatprep.subr.bf16.mxu0 0
      %1856 = vmatpush1.bf16.msra.mxu0 0
      %1857 = vmatprep.subr.bf16.mxu0 0
      %1858 = vmatpush1.bf16.msra.mxu0 0
      %1859 = vmatprep.subr.bf16.mxu0 0
      %1860 = vmatpush1.bf16.msra.mxu0 0
      %1861 = vmatprep.subr.bf16.mxu0 0
      %1862 = vmatpush1.bf16.msra.mxu0 0
      %1863 = vmatprep.subr.bf16.mxu0 0
      %1864 = vmatpush1.bf16.msra.mxu0 0
      %1865 = vmatprep.mubr.bf16.mxu0 0
      %1866 = vmatmul.mubr.bf16.gmra.mrb[0].mxu0 %v1819
      %v1867 = vpop.f32.mrb[0].mxu0
      %v1868 = vadd.f32 0.0, %v1867
      %v1869 = vpop.f32.mrb[0].mxu0
      %v1870 = vpop.f32.mrb[0].mxu0
      %v1871 = vadd.f32 0.0, %v1870
      %v1872 = vpop.f32.mrb[0].mxu0
      %1873 = vmatprep.mubr.bf16.mxu0 0
      %1874 = vmatmul.mubr.bf16.gmra.mrb[0].mxu0 %v1822
      %v1875 = vpop.f32.mrb[0].mxu0
      %v1876 = vadd.f32 0.0, %v1875
      %v1877 = vpop.f32.mrb[0].mxu0
      %v1878 = vpop.f32.mrb[0].mxu0
      %v1879 = vadd.f32 0.0, %v1878
      %v1880 = vpop.f32.mrb[0].mxu0
      %1881 = vmatprep.mubr.bf16.mxu0 0
      %1882 = vmatmul.mubr.bf16.gmra.mrb[0].mxu0 %v1825
      %v1883 = vpop.f32.mrb[0].mxu0
      %v1884 = vadd.f32 0.0, %v1883
      %v1885 = vpop.f32.mrb[0].mxu0
      %v1886 = vpop.f32.mrb[0].mxu0
      %v1887 = vadd.f32 0.0, %v1886
      %v1888 = vpop.f32.mrb[0].mxu0
      %1889 = vmatprep.mubr.bf16.mxu0 0
      %1890 = vmatmul.mubr.bf16.gmra.mrb[0].mxu0 %v1828
      %v1891 = vpop.f32.mrb[0].mxu0
      %v1892 = vadd.f32 0.0, %v1891
      %v1893 = vpop.f32.mrb[0].mxu0
      %v1894 = vpop.f32.mrb[0].mxu0
      %v1895 = vadd.f32 0.0, %v1894
      %v1896 = vpop.f32.mrb[0].mxu0
      %1897 = vdwg.mxu0
      %v1898 = vadd.f32 %v1636, %v1868
      %v1899 = vadd.f32 %v1637, %v1871
      %v1900 = vadd.f32 %v1638, %v1876
      %v1901 = vadd.f32 %v1639, %v1879
      %v1902 = vadd.f32 %v1640, %v1884
      %v1903 = vadd.f32 %v1641, %v1887
      %v1904 = vadd.f32 %v1642, %v1892
      %v1905 = vadd.f32 %v1643, %v1895
      %v1906 = vld [vmem:[%s1525] sm:$0x1e]
      %v1907 = vld [vmem:[%s1525 + $0x8] sm:$0x1e]
      %v1908 = vld [vmem:[%s1525 + $0x10] sm:$0x1e]
      %v1909 = vld [vmem:[%s1525 + $0x18] sm:$0x1e]
      %v1910 = vld [vmem:[%s1525 + $0x20] sm:$0x1e]
      %v1911 = vld [vmem:[%s1525 + $0x28] sm:$0x1e]
      %v1912 = vld [vmem:[%s1525 + $0x30] sm:$0x1e]
      %v1913 = vld [vmem:[%s1525 + $0x38] sm:$0x1e]
      %v1922 = vunpack.c.l.b16 %v1906
      %v1923 = vunpack.c.h.b16 %v1906
      %v1924 = vunpack.c.l.b16 %v1907
      %v1925 = vunpack.c.h.b16 %v1907
      %v1926 = vunpack.c.l.b16 %v1908
      %v1927 = vunpack.c.h.b16 %v1908
      %v1928 = vunpack.c.l.b16 %v1909
      %v1929 = vunpack.c.h.b16 %v1909
      %v1930 = vunpack.c.l.b16 %v1910
      %v1931 = vunpack.c.h.b16 %v1910
      %v1932 = vunpack.c.l.b16 %v1911
      %v1933 = vunpack.c.h.b16 %v1911
      %v1934 = vunpack.c.l.b16 %v1912
      %v1935 = vunpack.c.h.b16 %v1912
      %v1936 = vunpack.c.l.b16 %v1913
      %v1937 = vunpack.c.h.b16 %v1913
      %v1938 = vpack.c.b16 %v1922, %v1922
      %v1939 = vpack.c.b16 %v1923, %v1923
      %v1940 = vpack.c.b16 %v1924, %v1924
      %v1941 = vpack.c.b16 %v1925, %v1925
      %v1942 = vpack.c.b16 %v1926, %v1926
      %v1943 = vpack.c.b16 %v1927, %v1927
      %v1944 = vpack.c.b16 %v1928, %v1928
      %v1945 = vpack.c.b16 %v1929, %v1929
      %v1946 = vpack.c.b16 %v1930, %v1930
      %v1947 = vpack.c.b16 %v1931, %v1931
      %v1948 = vpack.c.b16 %v1932, %v1932
      %v1949 = vpack.c.b16 %v1933, %v1933
      %v1950 = vpack.c.b16 %v1934, %v1934
      %v1951 = vpack.c.b16 %v1935, %v1935
      %v1952 = vpack.c.b16 %v1936, %v1936
      %v1953 = vpack.c.b16 %v1937, %v1937
      %v1954 = vrot.slane %v1938, 5
      %v1955 = vrot.slane %v1954, 4
      %v1956 = vrot.slane %v1939, 5
      %v1957 = vsel %vm828, %v1955, %v1956
      %v1958 = vrot.slane %v1940, 5
      %v1959 = vrot.slane %v1958, 4
      %v1960 = vrot.slane %v1941, 5
      %v1961 = vsel %vm828, %v1959, %v1960
      %v1962 = vrot.slane %v1942, 5
      %v1963 = vrot.slane %v1962, 4
      %v1964 = vrot.slane %v1943, 5
      %v1965 = vsel %vm828, %v1963, %v1964
      %v1966 = vrot.slane %v1944, 5
      %v1967 = vrot.slane %v1966, 4
      %v1968 = vrot.slane %v1945, 5
      %v1969 = vsel %vm828, %v1967, %v1968
      %v1970 = vrot.slane %v1946, 5
      %v1971 = vrot.slane %v1970, 4
      %v1972 = vrot.slane %v1947, 5
      %v1973 = vsel %vm828, %v1971, %v1972
      %v1974 = vrot.slane %v1948, 5
      %v1975 = vrot.slane %v1974, 4
      %v1976 = vrot.slane %v1949, 5
      %v1977 = vsel %vm828, %v1975, %v1976
      %v1978 = vrot.slane %v1950, 5
      %v1979 = vrot.slane %v1978, 4
      %v1980 = vrot.slane %v1951, 5
      %v1981 = vsel %vm828, %v1979, %v1980
      %v1982 = vrot.slane %v1952, 5
      %v1983 = vrot.slane %v1982, 4
      %v1984 = vrot.slane %v1953, 5
      %v1985 = vsel %vm828, %v1983, %v1984
      %s1986 = scalar_lea.vmem %s3, 32
      %v1987 = vld [vmem:[%s1986] sm:$0xf]
      %v1988 = vunpack.c.l.b16 %v1957
      %v1989 = vunpack.c.l.b16 %v1961
      %v1990 = vunpack.c.l.b16 %v1965
      %v1991 = vunpack.c.l.b16 %v1969
      %v1992 = vunpack.c.l.b16 %v1973
      %v1993 = vunpack.c.l.b16 %v1977
      %v1994 = vunpack.c.l.b16 %v1981
      %v1995 = vunpack.c.l.b16 %v1985
      %v1996 = vpack.c.b16 %v1989, %v1988
      %v1997 = vpack.c.b16 %v1991, %v1990
      %v1998 = vpack.c.b16 %v1993, %v1992
      %v1999 = vpack.c.b16 %v1995, %v1994
      %v2001 = vsel %vm308, %v1996, 0
      %v2004 = vsel %vm308, %v1997, 0
      %v2007 = vsel %vm308, %v1998, 0
      %v2010 = vsel %vm308, %v1999, 0
      %v2013 = vsel %vm609, %v1987, 0
      %2015 = vmatprep.subr.bf16.mxu0 0
      %2016 = vmatpush1.bf16.msra.mxu0 %v2013
      %2017 = vmatprep.subr.bf16.mxu0 0
      %2018 = vmatpush1.bf16.msra.mxu0 0
      %2019 = vmatprep.subr.bf16.mxu0 0
      %2020 = vmatpush1.bf16.msra.mxu0 0
      %2021 = vmatprep.subr.bf16.mxu0 0
      %2022 = vmatpush1.bf16.msra.mxu0 0
      %2023 = vmatprep.subr.bf16.mxu0 0
      %2024 = vmatpush1.bf16.msra.mxu0 0
      %2025 = vmatprep.subr.bf16.mxu0 0
      %2026 = vmatpush1.bf16.msra.mxu0 0
      %2027 = vmatprep.subr.bf16.mxu0 0
      %2028 = vmatpush1.bf16.msra.mxu0 0
      %2029 = vmatprep.subr.bf16.mxu0 0
      %2030 = vmatpush1.bf16.msra.mxu0 0
      %2031 = vmatprep.subr.bf16.mxu0 0
      %2032 = vmatpush1.bf16.msra.mxu0 0
      %2033 = vmatprep.subr.bf16.mxu0 0
      %2034 = vmatpush1.bf16.msra.mxu0 0
      %2035 = vmatprep.subr.bf16.mxu0 0
      %2036 = vmatpush1.bf16.msra.mxu0 0
      %2037 = vmatprep.subr.bf16.mxu0 0
      %2038 = vmatpush1.bf16.msra.mxu0 0
      %2039 = vmatprep.subr.bf16.mxu0 0
      %2040 = vmatpush1.bf16.msra.mxu0 0
      %2041 = vmatprep.subr.bf16.mxu0 0
      %2042 = vmatpush1.bf16.msra.mxu0 0
      %2043 = vmatprep.subr.bf16.mxu0 0
      %2044 = vmatpush1.bf16.msra.mxu0 0
      %2045 = vmatprep.subr.bf16.mxu0 0
      %2046 = vmatpush1.bf16.msra.mxu0 0
      %2047 = vmatprep.mubr.bf16.mxu0 0
      %2048 = vmatmul.mubr.bf16.gmra.mrb[0].mxu0 %v2001
      %v2049 = vpop.f32.mrb[0].mxu0
      %v2050 = vadd.f32 0.0, %v2049
      %v2051 = vpop.f32.mrb[0].mxu0
      %v2052 = vpop.f32.mrb[0].mxu0
      %v2053 = vadd.f32 0.0, %v2052
      %v2054 = vpop.f32.mrb[0].mxu0
      %2055 = vmatprep.mubr.bf16.mxu0 0
      %2056 = vmatmul.mubr.bf16.gmra.mrb[0].mxu0 %v2004
      %v2057 = vpop.f32.mrb[0].mxu0
      %v2058 = vadd.f32 0.0, %v2057
      %v2059 = vpop.f32.mrb[0].mxu0
      %v2060 = vpop.f32.mrb[0].mxu0
      %v2061 = vadd.f32 0.0, %v2060
      %v2062 = vpop.f32.mrb[0].mxu0
      %2063 = vmatprep.mubr.bf16.mxu0 0
      %2064 = vmatmul.mubr.bf16.gmra.mrb[0].mxu0 %v2007
      %v2065 = vpop.f32.mrb[0].mxu0
      %v2066 = vadd.f32 0.0, %v2065
      %v2067 = vpop.f32.mrb[0].mxu0
      %v2068 = vpop.f32.mrb[0].mxu0
      %v2069 = vadd.f32 0.0, %v2068
      %v2070 = vpop.f32.mrb[0].mxu0
      %2071 = vmatprep.mubr.bf16.mxu0 0
      %2072 = vmatmul.mubr.bf16.gmra.mrb[0].mxu0 %v2010
      %v2073 = vpop.f32.mrb[0].mxu0
      %v2074 = vadd.f32 0.0, %v2073
      %v2075 = vpop.f32.mrb[0].mxu0
      %v2076 = vpop.f32.mrb[0].mxu0
      %v2077 = vadd.f32 0.0, %v2076
      %v2078 = vpop.f32.mrb[0].mxu0
      %2079 = vdwg.mxu0
      %v2080 = vadd.f32 %v1898, %v2050
      %v2081 = vadd.f32 %v1899, %v2053
      %v2082 = vadd.f32 %v1900, %v2058
      %v2083 = vadd.f32 %v1901, %v2061
      %v2084 = vadd.f32 %v1902, %v2066
      %v2085 = vadd.f32 %v1903, %v2069
      %v2086 = vadd.f32 %v1904, %v2074
      %v2087 = vadd.f32 %v1905, %v2077
      %v2088 = vld [vmem:[%s239] sm:$0xf]
      %v2089 = vld [vmem:[%s239 + $0x4] sm:$0xf]
      %v2090 = vld [vmem:[%s239 + $0x8] sm:$0xf]
      %v2091 = vld [vmem:[%s239 + $0xc] sm:$0xf]
      %v2092 = vld [vmem:[%s239 + $0x10] sm:$0xf]
      %v2093 = vld [vmem:[%s239 + $0x14] sm:$0xf]
      %v2094 = vld [vmem:[%s239 + $0x18] sm:$0xf]
      %v2095 = vld [vmem:[%s239 + $0x1c] sm:$0xf]
      %v2096 = vunpack.c.l.bf16 %v2088
      %v2097 = vunpack.c.l.bf16 %v2089
      %v2098 = vunpack.c.l.bf16 %v2090
      %v2099 = vunpack.c.l.bf16 %v2091
      %v2100 = vunpack.c.l.bf16 %v2092
      %v2101 = vunpack.c.l.bf16 %v2093
      %v2102 = vunpack.c.l.bf16 %v2094
      %v2103 = vunpack.c.l.bf16 %v2095
      %v2104 = vadd.f32 %v2080, %v2096
      %v2105 = vadd.f32 %v2081, %v2097
      %v2106 = vadd.f32 %v2082, %v2098
      %v2107 = vadd.f32 %v2083, %v2099
      %v2108 = vadd.f32 %v2084, %v2100
      %v2109 = vadd.f32 %v2085, %v2101
      %v2110 = vadd.f32 %v2086, %v2102
      %v2111 = vadd.f32 %v2087, %v2103
      %2112 = vst.msk [vmem:[%s244] sm:$0xff] %vm308, %v2104
      %2113 = vst.msk [vmem:[%s244 + $0x8] sm:$0xff] %vm308, %v2105
      %2114 = vst.msk [vmem:[%s244 + $0x10] sm:$0xff] %vm308, %v2106
      %2115 = vst.msk [vmem:[%s244 + $0x18] sm:$0xff] %vm308, %v2107
      %2116 = vst.msk [vmem:[%s244 + $0x20] sm:$0xff] %vm308, %v2108
      %2117 = vst.msk [vmem:[%s244 + $0x28] sm:$0xff] %vm308, %v2109
      %2118 = vst.msk [vmem:[%s244 + $0x30] sm:$0xff] %vm308, %v2110
      %2119 = vst.msk [vmem:[%s244 + $0x38] sm:$0xff] %vm308, %v2111
      %p2120 = scmp.lt.s32.totalorder %s16, 1
      %s2121 = scalar_select %p2120, %s16, 1
      %s2122 = smul.addr %s2121, 8
      %s2123 = smul.addr %s2122, 8
      %s2124 = scalar_lea.vmem %s5, %s2123
      // Predicated region
      $region41: #{preact_block_forward.7} parent=39 // pred_check
        %p2125 = pneg %p149
      $region42: #{preact_block_forward.7} parent=39 // pred_check_branch
        %2127 = sbr.rel (%p2125) target = $region44
      $region43: #{preact_block_forward.7} parent=39 // pred_region
        _
      $region44: #{preact_block_forward.7} parent=39 // pred_fallthru
        _
    $region40: #{preact_block_forward.7} parent=5 // pred_fallthru
      _
    %p2128 = scmp.le.s32.totalorder 2, %s11
    // Predicated region
    $region45: #{preact_block_forward.7} parent=5 // pred_check
      %p2129 = pneg %p2128
    $region46: #{preact_block_forward.7} parent=5 // pred_check_branch
      %2131 = sbr.rel (%p2129) target = $region48
    $region47: #{preact_block_forward.7} parent=5 // pred_region
      %s2132 = ssub.s32 %s11, 2
      // Predicated region
      $region49: #{preact_block_forward.7} parent=47 // pred_check
        %p2133 = pneg %p155
      $region50: #{preact_block_forward.7} parent=47 // pred_check_branch
        %2135 = sbr.rel (%p2133) target = $region52
      $region51: #{preact_block_forward.7} parent=47 // pred_region
        %p2136 = scmp.lt.s32.totalorder %s17, 1
        %s2137 = scalar_select %p2136, %s17, 1
        %s2138 = smul.addr %s2137, 8
        %s2139 = smul.addr %s2138, 8
        %s2140 = scalar_lea.vmem %s5, %s2139
      $region52: #{preact_block_forward.7} parent=47 // pred_fallthru
        _
    $region48: #{preact_block_forward.7} parent=5 // pred_fallthru
      _
  $region6: #{preact_block_forward.7} parent=0 // loop_footer
    %s15 = sadd.s32 1, %s11
  $region7: #{preact_block_forward.7} parent=0 // loop_footer_branch
    %10 = sbr.rel target = $region3
  $region8: #{preact_block_forward.7} parent=0 // loop_exit
    _

</llo_original>
